<compile_context>
chip_gen: v6e
topology: v6e:2x2x1
jax: 0.10.0
libtpu: 0.0.40
codegen_flags: <defaults>
</compile_context>

<pallas_src>
import functools

import jax
import jax.numpy as jnp
from jax.experimental import pallas as pl
from jax.experimental.pallas import tpu as pltpu


# ----------------------------------------------------------------------------
# Fused kernel: one grid step = (B_TILE batch elements, ITER_CHUNK iterations)
# ----------------------------------------------------------------------------
def _make_fused_kernel(L, W, M, n_blocks, recall, iter_chunk):
    def mm(a_bf16, w_bf16):
        # Tap-packed conv as ONE MXU matmul: bf16 in, f32 accumulate.
        return jax.lax.dot_general(
            a_bf16, w_bf16, (((1,), (0,)), ((), ())),
            preferred_element_type=jnp.float32)

    def kernel(*refs):
        if recall:
            (xt_ref, wproj_ref, wrec_ref, wb1_ref, wb2_ref,
             wh1_ref, wh2_ref, wh3_ref, out_ref, interim_ref) = refs
        else:
            (xt_ref, wproj_ref, wb1_ref, wb2_ref,
             wh1_ref, wh2_ref, wh3_ref, out_ref, interim_ref) = refs

        ic = pl.program_id(1)            # iteration-chunk index (sequential)
        xt = xt_ref[...]                 # (M, 3) f32 : x[l-1], x[l], x[l+1]

        # Per-batch-element halo masks (row m belongs to element m//L, pos m%L).
        # Computed once per grid step and reused by every slab build below.
        rows = jax.lax.broadcasted_iota(jnp.int32, (M, 1), 0)
        is_first = (rows % L) == 0
        is_last = (rows % L) == (L - 1)

        def slab(v_f32, extra_bf16=None):
            # (M, C) f32 -> (M, 3C[+3]) bf16 tap slab; cast ONCE, then shift.
            vb = v_f32.astype(jnp.bfloat16)
            C = vb.shape[-1]
            z = jnp.zeros((1, C), jnp.bfloat16)
            vm1 = jnp.where(is_first, 0.0,
                            jnp.concatenate([z, vb[:M - 1, :]], axis=0))   # v[l-1]
            vp1 = jnp.where(is_last, 0.0,
                            jnp.concatenate([vb[1:, :], z], axis=0))       # v[l+1]
            parts = [vm1, vb, vp1]
            if extra_bf16 is not None:       # recall: append the 3 x-tap channels
                parts.append(extra_bf16)
            return jnp.concatenate(parts, axis=1)

        # First chunk for this batch tile: projection conv (Cin=1, f32) + ReLU.
        @pl.when(ic == 0)
        def _():
            interim_ref[...] = jnp.maximum(
                jax.lax.dot_general(xt, wproj_ref[...], (((1,), (0,)), ((), ())),
                                    preferred_element_type=jnp.float32), 0.0)

        interim = interim_ref[...]            # (M, W) f32, carried across chunks
        xt_b = xt.astype(jnp.bfloat16)        # cast once; reused every iteration

        for it in range(iter_chunk):
            if recall:
                # conv(cat([interim, x], channel)) folded into ONE matmul, K=3W+3.
                interim = jnp.maximum(mm(slab(interim, xt_b), wrec_ref[...]), 0.0)
            # BasicBlock1D stack (identity shortcut, no norm), f32 residual math.
            for blk in range(n_blocks):
                h = jnp.maximum(mm(slab(interim), wb1_ref[blk]), 0.0)
                interim = jnp.maximum(mm(slab(h), wb2_ref[blk]) + interim, 0.0)
            # Head: conv+relu, conv+relu, conv.
            h = jnp.maximum(mm(slab(interim), wh1_ref[...]), 0.0)
            h = jnp.maximum(mm(slab(h), wh2_ref[...]), 0.0)
            out_ref[it] = mm(slab(h), wh3_ref[...])          # (M, 2) f32

        interim_ref[...] = interim            # write carry once per chunk

    return kernel


def _pack_w(w):
    # (3, Cin, Cout) f32 -> (3*Cin, Cout) bf16; row order = tap*Cin + cin,
    # matching slab()'s [tap0 | tap1 | tap2] channel packing.
    k, cin, cout = w.shape
    return w.reshape(k * cin, cout).astype(jnp.bfloat16)


# ----------------------------------------------------------------------------
# Forward pass (eval mode): mirrors DTNet1D.forward.
# ----------------------------------------------------------------------------
@functools.partial(jax.jit, static_argnames=("iters_to_do", "recall"))
def dtnet1d_forward(x_ncl, params, iters_to_do, recall=True):
    """x_ncl: (B, 1, L) f32 (PyTorch NCL) -> all_outputs (B, iters, 2, L) f32."""
    B, cin, L = x_ncl.shape
    assert cin == 1
    W = params["proj"].shape[-1]
    n_blocks = len(params["blocks"])
    assert n_blocks >= 1 and W % 2 == 0

    # ---- tiling decisions (static under jit) --------------------------------
    B_TILE = max(1, min(B, -(-256 // L)))         # target matmul M ~ 256 rows
    n_bt = -(-B // B_TILE)
    B_pad = n_bt * B_TILE
    M = B_TILE * L

    ITER_CHUNK = min(iters_to_do, 4)              # iterations per grid step
    n_ic = -(-iters_to_do // ITER_CHUNK)
    iters_pad = n_ic * ITER_CHUNK                 # extra iters computed & sliced off

    # ---- inputs --------------------------------------------------------------
    x = x_ncl[:, 0, :].astype(jnp.float32)        # (B, L)
    if B_pad != B:
        x = jnp.pad(x, ((0, B_pad - B), (0, 0)))  # zero-pad fake batch elements
    xm1 = jnp.pad(x, ((0, 0), (1, 0)))[:, :L]     # x[l-1]
    xp1 = jnp.pad(x, ((0, 0), (0, 1)))[:, 1:]     # x[l+1]
    xtaps = jnp.stack([xm1, x, xp1], axis=-1)     # (B_pad, L, 3) f32
    xtaps = xtaps.reshape(n_bt, M, 3)             # flattened per batch tile

    wproj = params["proj"][:, 0, :].astype(jnp.float32)               # (3, W)
    wb1 = jnp.stack([_pack_w(b["conv1"]) for b in params["blocks"]])  # (nb,3W,W)
    wb2 = jnp.stack([_pack_w(b["conv2"]) for b in params["blocks"]])
    wh1 = _pack_w(params["head1"])                                    # (3W, W)
    wh2 = _pack_w(params["head2"])                                    # (3W, W//2)
    wh3 = _pack_w(params["head3"])                                    # (3*(W//2), 2)

    inputs = [xtaps, wproj]
    in_specs = [
        pl.BlockSpec((None, M, 3), lambda b, i: (b, 0, 0)),
        pl.BlockSpec((3, W), lambda b, i: (0, 0)),
    ]
    if recall:
        wrec = params["recall"]                                       # (3, W+1, W)
        # rows = [tap-major interim channels (3W)] + [tap-major x channel (3)]
        wrec_packed = jnp.concatenate(
            [wrec[:, :W, :].reshape(3 * W, W), wrec[:, W, :]], axis=0
        ).astype(jnp.bfloat16)                                        # (3W+3, W)
        inputs.append(wrec_packed)
        in_specs.append(pl.BlockSpec((3 * W + 3, W), lambda b, i: (0, 0)))
    inputs += [wb1, wb2, wh1, wh2, wh3]
    in_specs += [
        pl.BlockSpec((n_blocks, 3 * W, W), lambda b, i: (0, 0, 0)),
        pl.BlockSpec((n_blocks, 3 * W, W), lambda b, i: (0, 0, 0)),
        pl.BlockSpec((3 * W, W), lambda b, i: (0, 0)),
        pl.BlockSpec((3 * W, W // 2), lambda b, i: (0, 0)),
        pl.BlockSpec((3 * (W // 2), 2), lambda b, i: (0, 0)),
    ]

    kernel = _make_fused_kernel(L, W, M, n_blocks, recall, ITER_CHUNK)

    # VMEM budget: double-buffered inputs + out block + interim scratch + slabs.
    w_bytes = (3 * W * 4
               + (3 * W + 3) * W * 2 * (1 if recall else 0)
               + 2 * n_blocks * 3 * W * W * 2
               + 3 * W * W * 2 + 3 * W * (W // 2) * 2 + 3 * (W // 2) * 2 * 2)
    act_bytes = (M * 3 * 4 + ITER_CHUNK * M * 2 * 4 + M * W * 4
                 + 6 * M * 3 * W * 2)
    vmem_limit = int(min(96 * 2**20,              # v6e headroom; v7x needs <64MiB
                         max(32 * 2**20,          # > v5e's 16MiB scoped default
                             2 * (2 * w_bytes + 2 * act_bytes))))

    out = pl.pallas_call(
        kernel,
        out_shape=jax.ShapeDtypeStruct((iters_pad, n_bt, M, 2), jnp.float32),
        grid_spec=pltpu.PrefetchScalarGridSpec(
            num_scalar_prefetch=0,
            grid=(n_bt, n_ic),
            in_specs=in_specs,
            out_specs=pl.BlockSpec((ITER_CHUNK, None, M, 2),
                                   lambda b, i: (i, b, 0, 0)),
            scratch_shapes=[pltpu.VMEM((M, W), jnp.float32)],
        ),
        compiler_params=pltpu.CompilerParams(
            dimension_semantics=("parallel", "arbitrary"),
            vmem_limit_bytes=vmem_limit,
        ),
    )(*inputs)                                    # (iters_pad, n_bt, M, 2)

    out = out.reshape(iters_pad, B_pad, L, 2)[:iters_to_do, :B]
    return jnp.transpose(out, (1, 0, 3, 2))       # (B, iters, 2, L)


# ----------------------------------------------------------------------------
# Plain-JAX reference (same bf16 MXU quantization as the kernel) for checking.
# ----------------------------------------------------------------------------
def _conv3_ref(v, w, mxu_bf16):
    # v: (B, L, Cin) f32, w: (3, Cin, Cout) f32; conv1d(k=3, pad=1, no bias).
    B, L, _ = v.shape
    vp = jnp.pad(v, ((0, 0), (1, 1), (0, 0)))
    acc = jnp.zeros((B, L, w.shape[-1]), jnp.float32)
    for k in range(3):
        a, wk = vp[:, k:k + L, :], w[k]
        if mxu_bf16:
            a, wk = a.astype(jnp.bfloat16), wk.astype(jnp.bfloat16)
        acc = acc + jax.lax.dot_general(
            a, wk, dimension_numbers=(((2,), (0,)), ((), ())),
            preferred_element_type=jnp.float32)
    return acc


def dtnet1d_reference(x_ncl, params, iters_to_do, recall=True):
    x = jnp.transpose(x_ncl, (0, 2, 1)).astype(jnp.float32)     # (B, L, 1)
    interim = jax.nn.relu(_conv3_ref(x, params["proj"], False))
    outs = []
    for _ in range(iters_to_do):
        if recall:
            cat = jnp.concatenate([interim, x], axis=-1)        # (B, L, W+1)
            interim = jax.nn.relu(_conv3_ref(cat, params["recall"], True))
        for blk in params["blocks"]:
            h = jax.nn.relu(_conv3_ref(interim, blk["conv1"], True))
            interim = jax.nn.relu(_conv3_ref(h, blk["conv2"], True) + interim)
        o = jax.nn.relu(_conv3_ref(interim, params["head1"], True))
        o = jax.nn.relu(_conv3_ref(o, params["head2"], True))
        o = _conv3_ref(o, params["head3"], True)                # (B, L, 2)
        outs.append(jnp.transpose(o, (0, 2, 1)))                # (B, 2, L)
    return jnp.stack(outs, axis=1)                              # (B, iters, 2, L)


# ----------------------------------------------------------------------------
# Parameter init (deterministic, synthetic); weights stored as (3, Cin, Cout).
# (A real PyTorch Conv1d checkpoint is (Cout, Cin, K) -> transpose(2, 1, 0).)
# ----------------------------------------------------------------------------
def _conv_w(key, cin, cout):
    scale = (2.0 / (cin * 3)) ** 0.5   # kaiming-like fan_in scaling
    return scale * jax.random.normal(key, (3, cin, cout), jnp.float32)


def init_params(key, width, num_blocks, recall):
    keys = list(jax.random.split(key, 8 + 2 * sum(num_blocks)))
    kit = iter(keys)
    params = {
        "proj": _conv_w(next(kit), 1, width),
        "head1": _conv_w(next(kit), width, width),
        "head2": _conv_w(next(kit), width, width // 2),
        "head3": _conv_w(next(kit), width // 2, 2),
        "blocks": [],
    }
    if recall:
        params["recall"] = _conv_w(next(kit), width + 1, width)
    for nb in num_blocks:
        for _ in range(nb):
            params["blocks"].append({
                "conv1": _conv_w(next(kit), width, width),
                "conv2": _conv_w(next(kit), width, width),
            })
    return params


if __name__ == "__main__":
    key = jax.random.PRNGKey(0)
    k_x, k_p = jax.random.split(key)

    B, L = 2, 16
    width = 32
    num_blocks = [2]          # one recur group with 2 BasicBlock1D blocks
    recall = True
    iters_to_do = 3

    x = jax.random.normal(k_x, (B, 1, L), jnp.float32)    # PyTorch NCL layout
    params = init_params(k_p, width, num_blocks, recall)

    all_outputs = dtnet1d_forward(x, params, iters_to_do, recall=recall)
    all_outputs = jax.block_until_ready(all_outputs)

    assert all_outputs.shape == (B, iters_to_do, 2, L), all_outputs.shape
    assert all_outputs.dtype == jnp.float32
    assert bool(jnp.all(jnp.isfinite(all_outputs)))

    ref = dtnet1d_reference(x, params, iters_to_do, recall=recall)
    max_err = float(jnp.max(jnp.abs(all_outputs - ref)))
    assert max_err < 2e-2, f"kernel vs reference max abs err = {max_err}"

    print("KERNEL_OK")
</pallas_src>

<mosaic_0001>
module attributes {stable_mosaic.version = 11 : i64} {
  func.func @kernel(%arg0: i32, %arg1: i32, %arg2: memref<1x32x3xf32, #tpu.memory_space<vmem>>, %arg3: memref<3x32xf32, #tpu.memory_space<vmem>>, %arg4: memref<99x32xbf16, #tpu.memory_space<vmem>>, %arg5: memref<2x96x32xbf16, #tpu.memory_space<vmem>>, %arg6: memref<2x96x32xbf16, #tpu.memory_space<vmem>>, %arg7: memref<96x32xbf16, #tpu.memory_space<vmem>>, %arg8: memref<96x16xbf16, #tpu.memory_space<vmem>>, %arg9: memref<48x2xbf16, #tpu.memory_space<vmem>>, %arg10: memref<3x1x32x2xf32, #tpu.memory_space<vmem>>, %arg11: memref<32x32xf32, #tpu.memory_space<vmem>>) attributes {dimension_semantics = [#tpu.dimension_semantics<parallel>, #tpu.dimension_semantics<arbitrary>], iteration_bounds = array<i64: 1, 1>, scalar_prefetch = 0 : i64, scratch_operands = 1 : i64, tpu.core_type = #tpu.core_type<tc>, window_params = [{transform_indices = @transform_0, window_bounds = array<i64: 1, 32, 3>}, {pipeline_mode = #tpu.pipeline_mode<synchronous>, transform_indices = @transform_1, window_bounds = array<i64: 3, 32>}, {pipeline_mode = #tpu.pipeline_mode<synchronous>, transform_indices = @transform_2, window_bounds = array<i64: 99, 32>}, {pipeline_mode = #tpu.pipeline_mode<synchronous>, transform_indices = @transform_3, window_bounds = array<i64: 2, 96, 32>}, {pipeline_mode = #tpu.pipeline_mode<synchronous>, transform_indices = @transform_4, window_bounds = array<i64: 2, 96, 32>}, {pipeline_mode = #tpu.pipeline_mode<synchronous>, transform_indices = @transform_5, window_bounds = array<i64: 96, 32>}, {pipeline_mode = #tpu.pipeline_mode<synchronous>, transform_indices = @transform_6, window_bounds = array<i64: 96, 16>}, {pipeline_mode = #tpu.pipeline_mode<synchronous>, transform_indices = @transform_7, window_bounds = array<i64: 48, 2>}, {transform_indices = @transform_8, window_bounds = array<i64: 3, 1, 32, 2>}]} {
    %c0 = arith.constant 0 : index
    %c0_0 = arith.constant 0 : index
    %c0_1 = arith.constant 0 : index
    %0 = vector.load %arg2[%c0, %c0_0, %c0_1] : memref<1x32x3xf32, #tpu.memory_space<vmem>>, vector<1x32x3xf32>
    %1 = vector.shape_cast %0 : vector<1x32x3xf32> to vector<32x3xf32>
    %2 = tpu.iota {dimensions = array<i32: 0>} : vector<32x1xi32>
    %c16_i32 = arith.constant 16 : i32
    %c0_i32 = arith.constant 0 : i32
    %3 = arith.cmpi eq, %c16_i32, %c0_i32 : i32
    %c1_i32 = arith.constant 1 : i32
    %4 = arith.select %3, %c1_i32, %c16_i32 : i32
    %5 = vector.broadcast %4 : i32 to vector<32x1xi32>
    %6 = arith.remsi %2, %5 : vector<32x1xi32>
    %c0_i32_2 = arith.constant 0 : i32
    %7 = vector.broadcast %c0_i32_2 : i32 to vector<32x1xi32>
    %8 = arith.cmpi ne, %6, %7 : vector<32x1xi32>
    %c0_i32_3 = arith.constant 0 : i32
    %9 = vector.broadcast %c0_i32_3 : i32 to vector<32x1xi32>
    %10 = arith.cmpi slt, %6, %9 : vector<32x1xi32>
    %c0_i32_4 = arith.constant 0 : i32
    %11 = arith.cmpi slt, %4, %c0_i32_4 : i32
    %12 = vector.broadcast %11 : i1 to vector<32x1xi1>
    %13 = vector.broadcast %12 : vector<32x1xi1> to vector<32x1xi1>
    %14 = arith.xori %10, %13 : vector<32x1xi1>
    %15 = arith.andi %14, %8 : vector<32x1xi1>
    %16 = vector.broadcast %4 : i32 to vector<32x1xi32>
    %17 = arith.addi %6, %16 : vector<32x1xi32>
    %18 = arith.select %15, %17, %6 : vector<32x1xi1>, vector<32x1xi32>
    %c0_i32_5 = arith.constant 0 : i32
    %19 = vector.broadcast %c0_i32_5 : i32 to vector<32x1xi32>
    %20 = arith.cmpi eq, %18, %19 : vector<32x1xi32>
    %c16_i32_6 = arith.constant 16 : i32
    %c0_i32_7 = arith.constant 0 : i32
    %21 = arith.cmpi eq, %c16_i32_6, %c0_i32_7 : i32
    %c1_i32_8 = arith.constant 1 : i32
    %22 = arith.select %21, %c1_i32_8, %c16_i32_6 : i32
    %23 = vector.broadcast %22 : i32 to vector<32x1xi32>
    %24 = arith.remsi %2, %23 : vector<32x1xi32>
    %c0_i32_9 = arith.constant 0 : i32
    %25 = vector.broadcast %c0_i32_9 : i32 to vector<32x1xi32>
    %26 = arith.cmpi ne, %24, %25 : vector<32x1xi32>
    %c0_i32_10 = arith.constant 0 : i32
    %27 = vector.broadcast %c0_i32_10 : i32 to vector<32x1xi32>
    %28 = arith.cmpi slt, %24, %27 : vector<32x1xi32>
    %c0_i32_11 = arith.constant 0 : i32
    %29 = arith.cmpi slt, %22, %c0_i32_11 : i32
    %30 = vector.broadcast %29 : i1 to vector<32x1xi1>
    %31 = vector.broadcast %30 : vector<32x1xi1> to vector<32x1xi1>
    %32 = arith.xori %28, %31 : vector<32x1xi1>
    %33 = arith.andi %32, %26 : vector<32x1xi1>
    %34 = vector.broadcast %22 : i32 to vector<32x1xi32>
    %35 = arith.addi %24, %34 : vector<32x1xi32>
    %36 = arith.select %33, %35, %24 : vector<32x1xi1>, vector<32x1xi32>
    %c15_i32 = arith.constant 15 : i32
    %37 = vector.broadcast %c15_i32 : i32 to vector<32x1xi32>
    %38 = arith.cmpi eq, %36, %37 : vector<32x1xi32>
    %c0_i32_12 = arith.constant 0 : i32
    %39 = arith.cmpi eq, %arg1, %c0_i32_12 : i32
    %40 = arith.extui %39 : i1 to i32
    %c0_i32_13 = arith.constant 0 : i32
    %41 = arith.cmpi ne, %40, %c0_i32_13 : i32
    scf.if %41 {
      %c0_204 = arith.constant 0 : index
      %c0_205 = arith.constant 0 : index
      %570 = vector.load %arg3[%c0_204, %c0_205] : memref<3x32xf32, #tpu.memory_space<vmem>>, vector<3x32xf32>
      %cst_206 = arith.constant dense<0.000000e+00> : vector<32x32xf32>
      %571 = tpu.matmul %1, %570, %cst_206 {dimension_numbers = #tpu.dot_dimension_numbers<[1], [0], [0], [1], [0, 0, 1, 1], [], []>} : vector<32x3xf32>, vector<3x32xf32>, vector<32x32xf32> -> vector<32x32xf32>
      %cst_207 = arith.constant 0.000000e+00 : f32
      %572 = vector.broadcast %cst_207 : f32 to vector<32x32xf32>
      %573 = arith.maximumf %571, %572 : vector<32x32xf32>
      %c0_208 = arith.constant 0 : index
      %c0_209 = arith.constant 0 : index
      %574 = vector.load %arg11[%c0_208, %c0_209] : memref<32x32xf32, #tpu.memory_space<vmem>>, vector<32x32xf32>
      tpu.vector_store %arg11[%c0_208, %c0_209], %573 {strides = array<i32>} : memref<32x32xf32, #tpu.memory_space<vmem>>, vector<32x32xf32>,
    } else {
    }
    %c0_14 = arith.constant 0 : index
    %c0_15 = arith.constant 0 : index
    %42 = vector.load %arg11[%c0_14, %c0_15] : memref<32x32xf32, #tpu.memory_space<vmem>>, vector<32x32xf32>
    %43 = arith.truncf %1 : vector<32x3xf32> to vector<32x3xbf16>
    %44 = arith.truncf %42 : vector<32x32xf32> to vector<32x32xbf16>
    %cst = arith.constant 0.000000e+00 : bf16
    %45 = vector.broadcast %cst : bf16 to vector<1x32xbf16>
    %46 = vector.extract_strided_slice %44 {offsets = [0, 0], sizes = [31, 32], strides = [1, 1]} : vector<32x32xbf16> to vector<31x32xbf16>
    %47 = tpu.concatenate %45, %46 in 0 : vector<1x32xbf16>, vector<31x32xbf16> -> vector<32x32xbf16>
    %cst_16 = arith.constant 0.000000e+00 : f32
    %48 = arith.truncf %cst_16 : f32 to bf16
    %49 = vector.shape_cast %20 : vector<32x1xi1> to vector<32x1xi1>
    %50 = vector.broadcast %49 : vector<32x1xi1> to vector<32x32xi1>
    %51 = vector.broadcast %48 : bf16 to vector<32x32xbf16>
    %52 = arith.select %50, %51, %47 : vector<32x32xi1>, vector<32x32xbf16>
    %53 = vector.extract_strided_slice %44 {offsets = [1, 0], sizes = [31, 32], strides = [1, 1]} : vector<32x32xbf16> to vector<31x32xbf16>
    %54 = tpu.concatenate %53, %45 in 0 : vector<31x32xbf16>, vector<1x32xbf16> -> vector<32x32xbf16>
    %cst_17 = arith.constant 0.000000e+00 : f32
    %55 = arith.truncf %cst_17 : f32 to bf16
    %56 = vector.shape_cast %38 : vector<32x1xi1> to vector<32x1xi1>
    %57 = vector.broadcast %56 : vector<32x1xi1> to vector<32x32xi1>
    %58 = vector.broadcast %55 : bf16 to vector<32x32xbf16>
    %59 = arith.select %57, %58, %54 : vector<32x32xi1>, vector<32x32xbf16>
    %60 = tpu.concatenate %52, %44, %59, %43 in 1 : vector<32x32xbf16>, vector<32x32xbf16>, vector<32x32xbf16>, vector<32x3xbf16> -> vector<32x99xbf16>
    %c0_18 = arith.constant 0 : index
    %c0_19 = arith.constant 0 : index
    %61 = vector.load %arg4[%c0_18, %c0_19] : memref<99x32xbf16, #tpu.memory_space<vmem>>, vector<99x32xbf16>
    %cst_20 = arith.constant dense<0.000000e+00> : vector<32x32xf32>
    %62 = tpu.matmul %60, %61, %cst_20 {dimension_numbers = #tpu.dot_dimension_numbers<[1], [0], [0], [1], [0, 0, 1, 1], [], []>} : vector<32x99xbf16>, vector<99x32xbf16>, vector<32x32xf32> -> vector<32x32xf32>
    %cst_21 = arith.constant 0.000000e+00 : f32
    %63 = vector.broadcast %cst_21 : f32 to vector<32x32xf32>
    %64 = arith.maximumf %62, %63 : vector<32x32xf32>
    %65 = arith.truncf %64 : vector<32x32xf32> to vector<32x32xbf16>
    %cst_22 = arith.constant 0.000000e+00 : bf16
    %66 = vector.broadcast %cst_22 : bf16 to vector<1x32xbf16>
    %67 = vector.extract_strided_slice %65 {offsets = [0, 0], sizes = [31, 32], strides = [1, 1]} : vector<32x32xbf16> to vector<31x32xbf16>
    %68 = tpu.concatenate %66, %67 in 0 : vector<1x32xbf16>, vector<31x32xbf16> -> vector<32x32xbf16>
    %cst_23 = arith.constant 0.000000e+00 : f32
    %69 = arith.truncf %cst_23 : f32 to bf16
    %70 = vector.shape_cast %20 : vector<32x1xi1> to vector<32x1xi1>
    %71 = vector.broadcast %70 : vector<32x1xi1> to vector<32x32xi1>
    %72 = vector.broadcast %69 : bf16 to vector<32x32xbf16>
    %73 = arith.select %71, %72, %68 : vector<32x32xi1>, vector<32x32xbf16>
    %74 = vector.extract_strided_slice %65 {offsets = [1, 0], sizes = [31, 32], strides = [1, 1]} : vector<32x32xbf16> to vector<31x32xbf16>
    %75 = tpu.concatenate %74, %66 in 0 : vector<31x32xbf16>, vector<1x32xbf16> -> vector<32x32xbf16>
    %cst_24 = arith.constant 0.000000e+00 : f32
    %76 = arith.truncf %cst_24 : f32 to bf16
    %77 = vector.shape_cast %38 : vector<32x1xi1> to vector<32x1xi1>
    %78 = vector.broadcast %77 : vector<32x1xi1> to vector<32x32xi1>
    %79 = vector.broadcast %76 : bf16 to vector<32x32xbf16>
    %80 = arith.select %78, %79, %75 : vector<32x32xi1>, vector<32x32xbf16>
    %81 = tpu.concatenate %73, %65, %80 in 1 : vector<32x32xbf16>, vector<32x32xbf16>, vector<32x32xbf16> -> vector<32x96xbf16>
    %c0_25 = arith.constant 0 : index
    %c0_26 = arith.constant 0 : index
    %c0_27 = arith.constant 0 : index
    %82 = vector.load %arg5[%c0_25, %c0_26, %c0_27] : memref<2x96x32xbf16, #tpu.memory_space<vmem>>, vector<1x96x32xbf16>
    %83 = vector.shape_cast %82 : vector<1x96x32xbf16> to vector<96x32xbf16>
    %cst_28 = arith.constant dense<0.000000e+00> : vector<32x32xf32>
    %84 = tpu.matmul %81, %83, %cst_28 {dimension_numbers = #tpu.dot_dimension_numbers<[1], [0], [0], [1], [0, 0, 1, 1], [], []>} : vector<32x96xbf16>, vector<96x32xbf16>, vector<32x32xf32> -> vector<32x32xf32>
    %cst_29 = arith.constant 0.000000e+00 : f32
    %85 = vector.broadcast %cst_29 : f32 to vector<32x32xf32>
    %86 = arith.maximumf %84, %85 : vector<32x32xf32>
    %87 = arith.truncf %86 : vector<32x32xf32> to vector<32x32xbf16>
    %cst_30 = arith.constant 0.000000e+00 : bf16
    %88 = vector.broadcast %cst_30 : bf16 to vector<1x32xbf16>
    %89 = vector.extract_strided_slice %87 {offsets = [0, 0], sizes = [31, 32], strides = [1, 1]} : vector<32x32xbf16> to vector<31x32xbf16>
    %90 = tpu.concatenate %88, %89 in 0 : vector<1x32xbf16>, vector<31x32xbf16> -> vector<32x32xbf16>
    %cst_31 = arith.constant 0.000000e+00 : f32
    %91 = arith.truncf %cst_31 : f32 to bf16
    %92 = vector.shape_cast %20 : vector<32x1xi1> to vector<32x1xi1>
    %93 = vector.broadcast %92 : vector<32x1xi1> to vector<32x32xi1>
    %94 = vector.broadcast %91 : bf16 to vector<32x32xbf16>
    %95 = arith.select %93, %94, %90 : vector<32x32xi1>, vector<32x32xbf16>
    %96 = vector.extract_strided_slice %87 {offsets = [1, 0], sizes = [31, 32], strides = [1, 1]} : vector<32x32xbf16> to vector<31x32xbf16>
    %97 = tpu.concatenate %96, %88 in 0 : vector<31x32xbf16>, vector<1x32xbf16> -> vector<32x32xbf16>
    %cst_32 = arith.constant 0.000000e+00 : f32
    %98 = arith.truncf %cst_32 : f32 to bf16
    %99 = vector.shape_cast %38 : vector<32x1xi1> to vector<32x1xi1>
    %100 = vector.broadcast %99 : vector<32x1xi1> to vector<32x32xi1>
    %101 = vector.broadcast %98 : bf16 to vector<32x32xbf16>
    %102 = arith.select %100, %101, %97 : vector<32x32xi1>, vector<32x32xbf16>
    %103 = tpu.concatenate %95, %87, %102 in 1 : vector<32x32xbf16>, vector<32x32xbf16>, vector<32x32xbf16> -> vector<32x96xbf16>
    %c0_33 = arith.constant 0 : index
    %c0_34 = arith.constant 0 : index
    %c0_35 = arith.constant 0 : index
    %104 = vector.load %arg6[%c0_33, %c0_34, %c0_35] : memref<2x96x32xbf16, #tpu.memory_space<vmem>>, vector<1x96x32xbf16>
    %105 = vector.shape_cast %104 : vector<1x96x32xbf16> to vector<96x32xbf16>
    %cst_36 = arith.constant dense<0.000000e+00> : vector<32x32xf32>
    %106 = tpu.matmul %103, %105, %cst_36 {dimension_numbers = #tpu.dot_dimension_numbers<[1], [0], [0], [1], [0, 0, 1, 1], [], []>} : vector<32x96xbf16>, vector<96x32xbf16>, vector<32x32xf32> -> vector<32x32xf32>
    %107 = arith.addf %106, %64 : vector<32x32xf32>
    %cst_37 = arith.constant 0.000000e+00 : f32
    %108 = vector.broadcast %cst_37 : f32 to vector<32x32xf32>
    %109 = arith.maximumf %107, %108 : vector<32x32xf32>
    %110 = arith.truncf %109 : vector<32x32xf32> to vector<32x32xbf16>
    %cst_38 = arith.constant 0.000000e+00 : bf16
    %111 = vector.broadcast %cst_38 : bf16 to vector<1x32xbf16>
    %112 = vector.extract_strided_slice %110 {offsets = [0, 0], sizes = [31, 32], strides = [1, 1]} : vector<32x32xbf16> to vector<31x32xbf16>
    %113 = tpu.concatenate %111, %112 in 0 : vector<1x32xbf16>, vector<31x32xbf16> -> vector<32x32xbf16>
    %cst_39 = arith.constant 0.000000e+00 : f32
    %114 = arith.truncf %cst_39 : f32 to bf16
    %115 = vector.shape_cast %20 : vector<32x1xi1> to vector<32x1xi1>
    %116 = vector.broadcast %115 : vector<32x1xi1> to vector<32x32xi1>
    %117 = vector.broadcast %114 : bf16 to vector<32x32xbf16>
    %118 = arith.select %116, %117, %113 : vector<32x32xi1>, vector<32x32xbf16>
    %119 = vector.extract_strided_slice %110 {offsets = [1, 0], sizes = [31, 32], strides = [1, 1]} : vector<32x32xbf16> to vector<31x32xbf16>
    %120 = tpu.concatenate %119, %111 in 0 : vector<31x32xbf16>, vector<1x32xbf16> -> vector<32x32xbf16>
    %cst_40 = arith.constant 0.000000e+00 : f32
    %121 = arith.truncf %cst_40 : f32 to bf16
    %122 = vector.shape_cast %38 : vector<32x1xi1> to vector<32x1xi1>
    %123 = vector.broadcast %122 : vector<32x1xi1> to vector<32x32xi1>
    %124 = vector.broadcast %121 : bf16 to vector<32x32xbf16>
    %125 = arith.select %123, %124, %120 : vector<32x32xi1>, vector<32x32xbf16>
    %126 = tpu.concatenate %118, %110, %125 in 1 : vector<32x32xbf16>, vector<32x32xbf16>, vector<32x32xbf16> -> vector<32x96xbf16>
    %c1 = arith.constant 1 : index
    %c0_41 = arith.constant 0 : index
    %c0_42 = arith.constant 0 : index
    %127 = vector.load %arg5[%c1, %c0_41, %c0_42] : memref<2x96x32xbf16, #tpu.memory_space<vmem>>, vector<1x96x32xbf16>
    %128 = vector.shape_cast %127 : vector<1x96x32xbf16> to vector<96x32xbf16>
    %cst_43 = arith.constant dense<0.000000e+00> : vector<32x32xf32>
    %129 = tpu.matmul %126, %128, %cst_43 {dimension_numbers = #tpu.dot_dimension_numbers<[1], [0], [0], [1], [0, 0, 1, 1], [], []>} : vector<32x96xbf16>, vector<96x32xbf16>, vector<32x32xf32> -> vector<32x32xf32>
    %cst_44 = arith.constant 0.000000e+00 : f32
    %130 = vector.broadcast %cst_44 : f32 to vector<32x32xf32>
    %131 = arith.maximumf %129, %130 : vector<32x32xf32>
    %132 = arith.truncf %131 : vector<32x32xf32> to vector<32x32xbf16>
    %cst_45 = arith.constant 0.000000e+00 : bf16
    %133 = vector.broadcast %cst_45 : bf16 to vector<1x32xbf16>
    %134 = vector.extract_strided_slice %132 {offsets = [0, 0], sizes = [31, 32], strides = [1, 1]} : vector<32x32xbf16> to vector<31x32xbf16>
    %135 = tpu.concatenate %133, %134 in 0 : vector<1x32xbf16>, vector<31x32xbf16> -> vector<32x32xbf16>
    %cst_46 = arith.constant 0.000000e+00 : f32
    %136 = arith.truncf %cst_46 : f32 to bf16
    %137 = vector.shape_cast %20 : vector<32x1xi1> to vector<32x1xi1>
    %138 = vector.broadcast %137 : vector<32x1xi1> to vector<32x32xi1>
    %139 = vector.broadcast %136 : bf16 to vector<32x32xbf16>
    %140 = arith.select %138, %139, %135 : vector<32x32xi1>, vector<32x32xbf16>
    %141 = vector.extract_strided_slice %132 {offsets = [1, 0], sizes = [31, 32], strides = [1, 1]} : vector<32x32xbf16> to vector<31x32xbf16>
    %142 = tpu.concatenate %141, %133 in 0 : vector<31x32xbf16>, vector<1x32xbf16> -> vector<32x32xbf16>
    %cst_47 = arith.constant 0.000000e+00 : f32
    %143 = arith.truncf %cst_47 : f32 to bf16
    %144 = vector.shape_cast %38 : vector<32x1xi1> to vector<32x1xi1>
    %145 = vector.broadcast %144 : vector<32x1xi1> to vector<32x32xi1>
    %146 = vector.broadcast %143 : bf16 to vector<32x32xbf16>
    %147 = arith.select %145, %146, %142 : vector<32x32xi1>, vector<32x32xbf16>
    %148 = tpu.concatenate %140, %132, %147 in 1 : vector<32x32xbf16>, vector<32x32xbf16>, vector<32x32xbf16> -> vector<32x96xbf16>
    %c1_48 = arith.constant 1 : index
    %c0_49 = arith.constant 0 : index
    %c0_50 = arith.constant 0 : index
    %149 = vector.load %arg6[%c1_48, %c0_49, %c0_50] : memref<2x96x32xbf16, #tpu.memory_space<vmem>>, vector<1x96x32xbf16>
    %150 = vector.shape_cast %149 : vector<1x96x32xbf16> to vector<96x32xbf16>
    %cst_51 = arith.constant dense<0.000000e+00> : vector<32x32xf32>
    %151 = tpu.matmul %148, %150, %cst_51 {dimension_numbers = #tpu.dot_dimension_numbers<[1], [0], [0], [1], [0, 0, 1, 1], [], []>} : vector<32x96xbf16>, vector<96x32xbf16>, vector<32x32xf32> -> vector<32x32xf32>
    %152 = arith.addf %151, %109 : vector<32x32xf32>
    %cst_52 = arith.constant 0.000000e+00 : f32
    %153 = vector.broadcast %cst_52 : f32 to vector<32x32xf32>
    %154 = arith.maximumf %152, %153 : vector<32x32xf32>
    %155 = arith.truncf %154 : vector<32x32xf32> to vector<32x32xbf16>
    %cst_53 = arith.constant 0.000000e+00 : bf16
    %156 = vector.broadcast %cst_53 : bf16 to vector<1x32xbf16>
    %157 = vector.extract_strided_slice %155 {offsets = [0, 0], sizes = [31, 32], strides = [1, 1]} : vector<32x32xbf16> to vector<31x32xbf16>
    %158 = tpu.concatenate %156, %157 in 0 : vector<1x32xbf16>, vector<31x32xbf16> -> vector<32x32xbf16>
    %cst_54 = arith.constant 0.000000e+00 : f32
    %159 = arith.truncf %cst_54 : f32 to bf16
    %160 = vector.shape_cast %20 : vector<32x1xi1> to vector<32x1xi1>
    %161 = vector.broadcast %160 : vector<32x1xi1> to vector<32x32xi1>
    %162 = vector.broadcast %159 : bf16 to vector<32x32xbf16>
    %163 = arith.select %161, %162, %158 : vector<32x32xi1>, vector<32x32xbf16>
    %164 = vector.extract_strided_slice %155 {offsets = [1, 0], sizes = [31, 32], strides = [1, 1]} : vector<32x32xbf16> to vector<31x32xbf16>
    %165 = tpu.concatenate %164, %156 in 0 : vector<31x32xbf16>, vector<1x32xbf16> -> vector<32x32xbf16>
    %cst_55 = arith.constant 0.000000e+00 : f32
    %166 = arith.truncf %cst_55 : f32 to bf16
    %167 = vector.shape_cast %38 : vector<32x1xi1> to vector<32x1xi1>
    %168 = vector.broadcast %167 : vector<32x1xi1> to vector<32x32xi1>
    %169 = vector.broadcast %166 : bf16 to vector<32x32xbf16>
    %170 = arith.select %168, %169, %165 : vector<32x32xi1>, vector<32x32xbf16>
    %171 = tpu.concatenate %163, %155, %170 in 1 : vector<32x32xbf16>, vector<32x32xbf16>, vector<32x32xbf16> -> vector<32x96xbf16>
    %c0_56 = arith.constant 0 : index
    %c0_57 = arith.constant 0 : index
    %172 = vector.load %arg7[%c0_56, %c0_57] : memref<96x32xbf16, #tpu.memory_space<vmem>>, vector<96x32xbf16>
    %cst_58 = arith.constant dense<0.000000e+00> : vector<32x32xf32>
    %173 = tpu.matmul %171, %172, %cst_58 {dimension_numbers = #tpu.dot_dimension_numbers<[1], [0], [0], [1], [0, 0, 1, 1], [], []>} : vector<32x96xbf16>, vector<96x32xbf16>, vector<32x32xf32> -> vector<32x32xf32>
    %cst_59 = arith.constant 0.000000e+00 : f32
    %174 = vector.broadcast %cst_59 : f32 to vector<32x32xf32>
    %175 = arith.maximumf %173, %174 : vector<32x32xf32>
    %176 = arith.truncf %175 : vector<32x32xf32> to vector<32x32xbf16>
    %cst_60 = arith.constant 0.000000e+00 : bf16
    %177 = vector.broadcast %cst_60 : bf16 to vector<1x32xbf16>
    %178 = vector.extract_strided_slice %176 {offsets = [0, 0], sizes = [31, 32], strides = [1, 1]} : vector<32x32xbf16> to vector<31x32xbf16>
    %179 = tpu.concatenate %177, %178 in 0 : vector<1x32xbf16>, vector<31x32xbf16> -> vector<32x32xbf16>
    %cst_61 = arith.constant 0.000000e+00 : f32
    %180 = arith.truncf %cst_61 : f32 to bf16
    %181 = vector.shape_cast %20 : vector<32x1xi1> to vector<32x1xi1>
    %182 = vector.broadcast %181 : vector<32x1xi1> to vector<32x32xi1>
    %183 = vector.broadcast %180 : bf16 to vector<32x32xbf16>
    %184 = arith.select %182, %183, %179 : vector<32x32xi1>, vector<32x32xbf16>
    %185 = vector.extract_strided_slice %176 {offsets = [1, 0], sizes = [31, 32], strides = [1, 1]} : vector<32x32xbf16> to vector<31x32xbf16>
    %186 = tpu.concatenate %185, %177 in 0 : vector<31x32xbf16>, vector<1x32xbf16> -> vector<32x32xbf16>
    %cst_62 = arith.constant 0.000000e+00 : f32
    %187 = arith.truncf %cst_62 : f32 to bf16
    %188 = vector.shape_cast %38 : vector<32x1xi1> to vector<32x1xi1>
    %189 = vector.broadcast %188 : vector<32x1xi1> to vector<32x32xi1>
    %190 = vector.broadcast %187 : bf16 to vector<32x32xbf16>
    %191 = arith.select %189, %190, %186 : vector<32x32xi1>, vector<32x32xbf16>
    %192 = tpu.concatenate %184, %176, %191 in 1 : vector<32x32xbf16>, vector<32x32xbf16>, vector<32x32xbf16> -> vector<32x96xbf16>
    %c0_63 = arith.constant 0 : index
    %c0_64 = arith.constant 0 : index
    %193 = vector.load %arg8[%c0_63, %c0_64] : memref<96x16xbf16, #tpu.memory_space<vmem>>, vector<96x16xbf16>
    %cst_65 = arith.constant dense<0.000000e+00> : vector<32x16xf32>
    %194 = tpu.matmul %192, %193, %cst_65 {dimension_numbers = #tpu.dot_dimension_numbers<[1], [0], [0], [1], [0, 0, 1, 1], [], []>} : vector<32x96xbf16>, vector<96x16xbf16>, vector<32x16xf32> -> vector<32x16xf32>
    %cst_66 = arith.constant 0.000000e+00 : f32
    %195 = vector.broadcast %cst_66 : f32 to vector<32x16xf32>
    %196 = arith.maximumf %194, %195 : vector<32x16xf32>
    %197 = arith.truncf %196 : vector<32x16xf32> to vector<32x16xbf16>
    %cst_67 = arith.constant 0.000000e+00 : bf16
    %198 = vector.broadcast %cst_67 : bf16 to vector<1x16xbf16>
    %199 = vector.extract_strided_slice %197 {offsets = [0, 0], sizes = [31, 16], strides = [1, 1]} : vector<32x16xbf16> to vector<31x16xbf16>
    %200 = tpu.concatenate %198, %199 in 0 : vector<1x16xbf16>, vector<31x16xbf16> -> vector<32x16xbf16>
    %cst_68 = arith.constant 0.000000e+00 : f32
    %201 = arith.truncf %cst_68 : f32 to bf16
    %202 = vector.shape_cast %20 : vector<32x1xi1> to vector<32x1xi1>
    %203 = vector.broadcast %202 : vector<32x1xi1> to vector<32x16xi1>
    %204 = vector.broadcast %201 : bf16 to vector<32x16xbf16>
    %205 = arith.select %203, %204, %200 : vector<32x16xi1>, vector<32x16xbf16>
    %206 = vector.extract_strided_slice %197 {offsets = [1, 0], sizes = [31, 16], strides = [1, 1]} : vector<32x16xbf16> to vector<31x16xbf16>
    %207 = tpu.concatenate %206, %198 in 0 : vector<31x16xbf16>, vector<1x16xbf16> -> vector<32x16xbf16>
    %cst_69 = arith.constant 0.000000e+00 : f32
    %208 = arith.truncf %cst_69 : f32 to bf16
    %209 = vector.shape_cast %38 : vector<32x1xi1> to vector<32x1xi1>
    %210 = vector.broadcast %209 : vector<32x1xi1> to vector<32x16xi1>
    %211 = vector.broadcast %208 : bf16 to vector<32x16xbf16>
    %212 = arith.select %210, %211, %207 : vector<32x16xi1>, vector<32x16xbf16>
    %213 = tpu.concatenate %205, %197, %212 in 1 : vector<32x16xbf16>, vector<32x16xbf16>, vector<32x16xbf16> -> vector<32x48xbf16>
    %c0_70 = arith.constant 0 : index
    %c0_71 = arith.constant 0 : index
    %214 = vector.load %arg9[%c0_70, %c0_71] : memref<48x2xbf16, #tpu.memory_space<vmem>>, vector<48x2xbf16>
    %cst_72 = arith.constant dense<0.000000e+00> : vector<32x2xf32>
    %215 = tpu.matmul %213, %214, %cst_72 {dimension_numbers = #tpu.dot_dimension_numbers<[1], [0], [0], [1], [0, 0, 1, 1], [], []>} : vector<32x48xbf16>, vector<48x2xbf16>, vector<32x2xf32> -> vector<32x2xf32>
    %c0_73 = arith.constant 0 : index
    %c0_74 = arith.constant 0 : index
    %c0_75 = arith.constant 0 : index
    %c0_76 = arith.constant 0 : index
    %216 = vector.load %arg10[%c0_73, %c0_74, %c0_75, %c0_76] : memref<3x1x32x2xf32, #tpu.memory_space<vmem>>, vector<1x1x32x2xf32>
    %217 = vector.shape_cast %216 : vector<1x1x32x2xf32> to vector<32x2xf32>
    %218 = vector.shape_cast %215 : vector<32x2xf32> to vector<1x1x32x2xf32>
    tpu.vector_store %arg10[%c0_73, %c0_74, %c0_75, %c0_76], %218 {strides = array<i32>} : memref<3x1x32x2xf32, #tpu.memory_space<vmem>>, vector<1x1x32x2xf32>,
    %219 = arith.truncf %154 : vector<32x32xf32> to vector<32x32xbf16>
    %cst_77 = arith.constant 0.000000e+00 : bf16
    %220 = vector.broadcast %cst_77 : bf16 to vector<1x32xbf16>
    %221 = vector.extract_strided_slice %219 {offsets = [0, 0], sizes = [31, 32], strides = [1, 1]} : vector<32x32xbf16> to vector<31x32xbf16>
    %222 = tpu.concatenate %220, %221 in 0 : vector<1x32xbf16>, vector<31x32xbf16> -> vector<32x32xbf16>
    %cst_78 = arith.constant 0.000000e+00 : f32
    %223 = arith.truncf %cst_78 : f32 to bf16
    %224 = vector.shape_cast %20 : vector<32x1xi1> to vector<32x1xi1>
    %225 = vector.broadcast %224 : vector<32x1xi1> to vector<32x32xi1>
    %226 = vector.broadcast %223 : bf16 to vector<32x32xbf16>
    %227 = arith.select %225, %226, %222 : vector<32x32xi1>, vector<32x32xbf16>
    %228 = vector.extract_strided_slice %219 {offsets = [1, 0], sizes = [31, 32], strides = [1, 1]} : vector<32x32xbf16> to vector<31x32xbf16>
    %229 = tpu.concatenate %228, %220 in 0 : vector<31x32xbf16>, vector<1x32xbf16> -> vector<32x32xbf16>
    %cst_79 = arith.constant 0.000000e+00 : f32
    %230 = arith.truncf %cst_79 : f32 to bf16
    %231 = vector.shape_cast %38 : vector<32x1xi1> to vector<32x1xi1>
    %232 = vector.broadcast %231 : vector<32x1xi1> to vector<32x32xi1>
    %233 = vector.broadcast %230 : bf16 to vector<32x32xbf16>
    %234 = arith.select %232, %233, %229 : vector<32x32xi1>, vector<32x32xbf16>
    %235 = tpu.concatenate %227, %219, %234, %43 in 1 : vector<32x32xbf16>, vector<32x32xbf16>, vector<32x32xbf16>, vector<32x3xbf16> -> vector<32x99xbf16>
    %c0_80 = arith.constant 0 : index
    %c0_81 = arith.constant 0 : index
    %236 = vector.load %arg4[%c0_80, %c0_81] : memref<99x32xbf16, #tpu.memory_space<vmem>>, vector<99x32xbf16>
    %cst_82 = arith.constant dense<0.000000e+00> : vector<32x32xf32>
    %237 = tpu.matmul %235, %236, %cst_82 {dimension_numbers = #tpu.dot_dimension_numbers<[1], [0], [0], [1], [0, 0, 1, 1], [], []>} : vector<32x99xbf16>, vector<99x32xbf16>, vector<32x32xf32> -> vector<32x32xf32>
    %cst_83 = arith.constant 0.000000e+00 : f32
    %238 = vector.broadcast %cst_83 : f32 to vector<32x32xf32>
    %239 = arith.maximumf %237, %238 : vector<32x32xf32>
    %240 = arith.truncf %239 : vector<32x32xf32> to vector<32x32xbf16>
    %cst_84 = arith.constant 0.000000e+00 : bf16
    %241 = vector.broadcast %cst_84 : bf16 to vector<1x32xbf16>
    %242 = vector.extract_strided_slice %240 {offsets = [0, 0], sizes = [31, 32], strides = [1, 1]} : vector<32x32xbf16> to vector<31x32xbf16>
    %243 = tpu.concatenate %241, %242 in 0 : vector<1x32xbf16>, vector<31x32xbf16> -> vector<32x32xbf16>
    %cst_85 = arith.constant 0.000000e+00 : f32
    %244 = arith.truncf %cst_85 : f32 to bf16
    %245 = vector.shape_cast %20 : vector<32x1xi1> to vector<32x1xi1>
    %246 = vector.broadcast %245 : vector<32x1xi1> to vector<32x32xi1>
    %247 = vector.broadcast %244 : bf16 to vector<32x32xbf16>
    %248 = arith.select %246, %247, %243 : vector<32x32xi1>, vector<32x32xbf16>
    %249 = vector.extract_strided_slice %240 {offsets = [1, 0], sizes = [31, 32], strides = [1, 1]} : vector<32x32xbf16> to vector<31x32xbf16>
    %250 = tpu.concatenate %249, %241 in 0 : vector<31x32xbf16>, vector<1x32xbf16> -> vector<32x32xbf16>
    %cst_86 = arith.constant 0.000000e+00 : f32
    %251 = arith.truncf %cst_86 : f32 to bf16
    %252 = vector.shape_cast %38 : vector<32x1xi1> to vector<32x1xi1>
    %253 = vector.broadcast %252 : vector<32x1xi1> to vector<32x32xi1>
    %254 = vector.broadcast %251 : bf16 to vector<32x32xbf16>
    %255 = arith.select %253, %254, %250 : vector<32x32xi1>, vector<32x32xbf16>
    %256 = tpu.concatenate %248, %240, %255 in 1 : vector<32x32xbf16>, vector<32x32xbf16>, vector<32x32xbf16> -> vector<32x96xbf16>
    %c0_87 = arith.constant 0 : index
    %c0_88 = arith.constant 0 : index
    %c0_89 = arith.constant 0 : index
    %257 = vector.load %arg5[%c0_87, %c0_88, %c0_89] : memref<2x96x32xbf16, #tpu.memory_space<vmem>>, vector<1x96x32xbf16>
    %258 = vector.shape_cast %257 : vector<1x96x32xbf16> to vector<96x32xbf16>
    %cst_90 = arith.constant dense<0.000000e+00> : vector<32x32xf32>
    %259 = tpu.matmul %256, %258, %cst_90 {dimension_numbers = #tpu.dot_dimension_numbers<[1], [0], [0], [1], [0, 0, 1, 1], [], []>} : vector<32x96xbf16>, vector<96x32xbf16>, vector<32x32xf32> -> vector<32x32xf32>
    %cst_91 = arith.constant 0.000000e+00 : f32
    %260 = vector.broadcast %cst_91 : f32 to vector<32x32xf32>
    %261 = arith.maximumf %259, %260 : vector<32x32xf32>
    %262 = arith.truncf %261 : vector<32x32xf32> to vector<32x32xbf16>
    %cst_92 = arith.constant 0.000000e+00 : bf16
    %263 = vector.broadcast %cst_92 : bf16 to vector<1x32xbf16>
    %264 = vector.extract_strided_slice %262 {offsets = [0, 0], sizes = [31, 32], strides = [1, 1]} : vector<32x32xbf16> to vector<31x32xbf16>
    %265 = tpu.concatenate %263, %264 in 0 : vector<1x32xbf16>, vector<31x32xbf16> -> vector<32x32xbf16>
    %cst_93 = arith.constant 0.000000e+00 : f32
    %266 = arith.truncf %cst_93 : f32 to bf16
    %267 = vector.shape_cast %20 : vector<32x1xi1> to vector<32x1xi1>
    %268 = vector.broadcast %267 : vector<32x1xi1> to vector<32x32xi1>
    %269 = vector.broadcast %266 : bf16 to vector<32x32xbf16>
    %270 = arith.select %268, %269, %265 : vector<32x32xi1>, vector<32x32xbf16>
    %271 = vector.extract_strided_slice %262 {offsets = [1, 0], sizes = [31, 32], strides = [1, 1]} : vector<32x32xbf16> to vector<31x32xbf16>
    %272 = tpu.concatenate %271, %263 in 0 : vector<31x32xbf16>, vector<1x32xbf16> -> vector<32x32xbf16>
    %cst_94 = arith.constant 0.000000e+00 : f32
    %273 = arith.truncf %cst_94 : f32 to bf16
    %274 = vector.shape_cast %38 : vector<32x1xi1> to vector<32x1xi1>
    %275 = vector.broadcast %274 : vector<32x1xi1> to vector<32x32xi1>
    %276 = vector.broadcast %273 : bf16 to vector<32x32xbf16>
    %277 = arith.select %275, %276, %272 : vector<32x32xi1>, vector<32x32xbf16>
    %278 = tpu.concatenate %270, %262, %277 in 1 : vector<32x32xbf16>, vector<32x32xbf16>, vector<32x32xbf16> -> vector<32x96xbf16>
    %c0_95 = arith.constant 0 : index
    %c0_96 = arith.constant 0 : index
    %c0_97 = arith.constant 0 : index
    %279 = vector.load %arg6[%c0_95, %c0_96, %c0_97] : memref<2x96x32xbf16, #tpu.memory_space<vmem>>, vector<1x96x32xbf16>
    %280 = vector.shape_cast %279 : vector<1x96x32xbf16> to vector<96x32xbf16>
    %cst_98 = arith.constant dense<0.000000e+00> : vector<32x32xf32>
    %281 = tpu.matmul %278, %280, %cst_98 {dimension_numbers = #tpu.dot_dimension_numbers<[1], [0], [0], [1], [0, 0, 1, 1], [], []>} : vector<32x96xbf16>, vector<96x32xbf16>, vector<32x32xf32> -> vector<32x32xf32>
    %282 = arith.addf %281, %239 : vector<32x32xf32>
    %cst_99 = arith.constant 0.000000e+00 : f32
    %283 = vector.broadcast %cst_99 : f32 to vector<32x32xf32>
    %284 = arith.maximumf %282, %283 : vector<32x32xf32>
    %285 = arith.truncf %284 : vector<32x32xf32> to vector<32x32xbf16>
    %cst_100 = arith.constant 0.000000e+00 : bf16
    %286 = vector.broadcast %cst_100 : bf16 to vector<1x32xbf16>
    %287 = vector.extract_strided_slice %285 {offsets = [0, 0], sizes = [31, 32], strides = [1, 1]} : vector<32x32xbf16> to vector<31x32xbf16>
    %288 = tpu.concatenate %286, %287 in 0 : vector<1x32xbf16>, vector<31x32xbf16> -> vector<32x32xbf16>
    %cst_101 = arith.constant 0.000000e+00 : f32
    %289 = arith.truncf %cst_101 : f32 to bf16
    %290 = vector.shape_cast %20 : vector<32x1xi1> to vector<32x1xi1>
    %291 = vector.broadcast %290 : vector<32x1xi1> to vector<32x32xi1>
    %292 = vector.broadcast %289 : bf16 to vector<32x32xbf16>
    %293 = arith.select %291, %292, %288 : vector<32x32xi1>, vector<32x32xbf16>
    %294 = vector.extract_strided_slice %285 {offsets = [1, 0], sizes = [31, 32], strides = [1, 1]} : vector<32x32xbf16> to vector<31x32xbf16>
    %295 = tpu.concatenate %294, %286 in 0 : vector<31x32xbf16>, vector<1x32xbf16> -> vector<32x32xbf16>
    %cst_102 = arith.constant 0.000000e+00 : f32
    %296 = arith.truncf %cst_102 : f32 to bf16
    %297 = vector.shape_cast %38 : vector<32x1xi1> to vector<32x1xi1>
    %298 = vector.broadcast %297 : vector<32x1xi1> to vector<32x32xi1>
    %299 = vector.broadcast %296 : bf16 to vector<32x32xbf16>
    %300 = arith.select %298, %299, %295 : vector<32x32xi1>, vector<32x32xbf16>
    %301 = tpu.concatenate %293, %285, %300 in 1 : vector<32x32xbf16>, vector<32x32xbf16>, vector<32x32xbf16> -> vector<32x96xbf16>
    %c1_103 = arith.constant 1 : index
    %c0_104 = arith.constant 0 : index
    %c0_105 = arith.constant 0 : index
    %302 = vector.load %arg5[%c1_103, %c0_104, %c0_105] : memref<2x96x32xbf16, #tpu.memory_space<vmem>>, vector<1x96x32xbf16>
    %303 = vector.shape_cast %302 : vector<1x96x32xbf16> to vector<96x32xbf16>
    %cst_106 = arith.constant dense<0.000000e+00> : vector<32x32xf32>
    %304 = tpu.matmul %301, %303, %cst_106 {dimension_numbers = #tpu.dot_dimension_numbers<[1], [0], [0], [1], [0, 0, 1, 1], [], []>} : vector<32x96xbf16>, vector<96x32xbf16>, vector<32x32xf32> -> vector<32x32xf32>
    %cst_107 = arith.constant 0.000000e+00 : f32
    %305 = vector.broadcast %cst_107 : f32 to vector<32x32xf32>
    %306 = arith.maximumf %304, %305 : vector<32x32xf32>
    %307 = arith.truncf %306 : vector<32x32xf32> to vector<32x32xbf16>
    %cst_108 = arith.constant 0.000000e+00 : bf16
    %308 = vector.broadcast %cst_108 : bf16 to vector<1x32xbf16>
    %309 = vector.extract_strided_slice %307 {offsets = [0, 0], sizes = [31, 32], strides = [1, 1]} : vector<32x32xbf16> to vector<31x32xbf16>
    %310 = tpu.concatenate %308, %309 in 0 : vector<1x32xbf16>, vector<31x32xbf16> -> vector<32x32xbf16>
    %cst_109 = arith.constant 0.000000e+00 : f32
    %311 = arith.truncf %cst_109 : f32 to bf16
    %312 = vector.shape_cast %20 : vector<32x1xi1> to vector<32x1xi1>
    %313 = vector.broadcast %312 : vector<32x1xi1> to vector<32x32xi1>
    %314 = vector.broadcast %311 : bf16 to vector<32x32xbf16>
    %315 = arith.select %313, %314, %310 : vector<32x32xi1>, vector<32x32xbf16>
    %316 = vector.extract_strided_slice %307 {offsets = [1, 0], sizes = [31, 32], strides = [1, 1]} : vector<32x32xbf16> to vector<31x32xbf16>
    %317 = tpu.concatenate %316, %308 in 0 : vector<31x32xbf16>, vector<1x32xbf16> -> vector<32x32xbf16>
    %cst_110 = arith.constant 0.000000e+00 : f32
    %318 = arith.truncf %cst_110 : f32 to bf16
    %319 = vector.shape_cast %38 : vector<32x1xi1> to vector<32x1xi1>
    %320 = vector.broadcast %319 : vector<32x1xi1> to vector<32x32xi1>
    %321 = vector.broadcast %318 : bf16 to vector<32x32xbf16>
    %322 = arith.select %320, %321, %317 : vector<32x32xi1>, vector<32x32xbf16>
    %323 = tpu.concatenate %315, %307, %322 in 1 : vector<32x32xbf16>, vector<32x32xbf16>, vector<32x32xbf16> -> vector<32x96xbf16>
    %c1_111 = arith.constant 1 : index
    %c0_112 = arith.constant 0 : index
    %c0_113 = arith.constant 0 : index
    %324 = vector.load %arg6[%c1_111, %c0_112, %c0_113] : memref<2x96x32xbf16, #tpu.memory_space<vmem>>, vector<1x96x32xbf16>
    %325 = vector.shape_cast %324 : vector<1x96x32xbf16> to vector<96x32xbf16>
    %cst_114 = arith.constant dense<0.000000e+00> : vector<32x32xf32>
    %326 = tpu.matmul %323, %325, %cst_114 {dimension_numbers = #tpu.dot_dimension_numbers<[1], [0], [0], [1], [0, 0, 1, 1], [], []>} : vector<32x96xbf16>, vector<96x32xbf16>, vector<32x32xf32> -> vector<32x32xf32>
    %327 = arith.addf %326, %284 : vector<32x32xf32>
    %cst_115 = arith.constant 0.000000e+00 : f32
    %328 = vector.broadcast %cst_115 : f32 to vector<32x32xf32>
    %329 = arith.maximumf %327, %328 : vector<32x32xf32>
    %330 = arith.truncf %329 : vector<32x32xf32> to vector<32x32xbf16>
    %cst_116 = arith.constant 0.000000e+00 : bf16
    %331 = vector.broadcast %cst_116 : bf16 to vector<1x32xbf16>
    %332 = vector.extract_strided_slice %330 {offsets = [0, 0], sizes = [31, 32], strides = [1, 1]} : vector<32x32xbf16> to vector<31x32xbf16>
    %333 = tpu.concatenate %331, %332 in 0 : vector<1x32xbf16>, vector<31x32xbf16> -> vector<32x32xbf16>
    %cst_117 = arith.constant 0.000000e+00 : f32
    %334 = arith.truncf %cst_117 : f32 to bf16
    %335 = vector.shape_cast %20 : vector<32x1xi1> to vector<32x1xi1>
    %336 = vector.broadcast %335 : vector<32x1xi1> to vector<32x32xi1>
    %337 = vector.broadcast %334 : bf16 to vector<32x32xbf16>
    %338 = arith.select %336, %337, %333 : vector<32x32xi1>, vector<32x32xbf16>
    %339 = vector.extract_strided_slice %330 {offsets = [1, 0], sizes = [31, 32], strides = [1, 1]} : vector<32x32xbf16> to vector<31x32xbf16>
    %340 = tpu.concatenate %339, %331 in 0 : vector<31x32xbf16>, vector<1x32xbf16> -> vector<32x32xbf16>
    %cst_118 = arith.constant 0.000000e+00 : f32
    %341 = arith.truncf %cst_118 : f32 to bf16
    %342 = vector.shape_cast %38 : vector<32x1xi1> to vector<32x1xi1>
    %343 = vector.broadcast %342 : vector<32x1xi1> to vector<32x32xi1>
    %344 = vector.broadcast %341 : bf16 to vector<32x32xbf16>
    %345 = arith.select %343, %344, %340 : vector<32x32xi1>, vector<32x32xbf16>
    %346 = tpu.concatenate %338, %330, %345 in 1 : vector<32x32xbf16>, vector<32x32xbf16>, vector<32x32xbf16> -> vector<32x96xbf16>
    %c0_119 = arith.constant 0 : index
    %c0_120 = arith.constant 0 : index
    %347 = vector.load %arg7[%c0_119, %c0_120] : memref<96x32xbf16, #tpu.memory_space<vmem>>, vector<96x32xbf16>
    %cst_121 = arith.constant dense<0.000000e+00> : vector<32x32xf32>
    %348 = tpu.matmul %346, %347, %cst_121 {dimension_numbers = #tpu.dot_dimension_numbers<[1], [0], [0], [1], [0, 0, 1, 1], [], []>} : vector<32x96xbf16>, vector<96x32xbf16>, vector<32x32xf32> -> vector<32x32xf32>
    %cst_122 = arith.constant 0.000000e+00 : f32
    %349 = vector.broadcast %cst_122 : f32 to vector<32x32xf32>
    %350 = arith.maximumf %348, %349 : vector<32x32xf32>
    %351 = arith.truncf %350 : vector<32x32xf32> to vector<32x32xbf16>
    %cst_123 = arith.constant 0.000000e+00 : bf16
    %352 = vector.broadcast %cst_123 : bf16 to vector<1x32xbf16>
    %353 = vector.extract_strided_slice %351 {offsets = [0, 0], sizes = [31, 32], strides = [1, 1]} : vector<32x32xbf16> to vector<31x32xbf16>
    %354 = tpu.concatenate %352, %353 in 0 : vector<1x32xbf16>, vector<31x32xbf16> -> vector<32x32xbf16>
    %cst_124 = arith.constant 0.000000e+00 : f32
    %355 = arith.truncf %cst_124 : f32 to bf16
    %356 = vector.shape_cast %20 : vector<32x1xi1> to vector<32x1xi1>
    %357 = vector.broadcast %356 : vector<32x1xi1> to vector<32x32xi1>
    %358 = vector.broadcast %355 : bf16 to vector<32x32xbf16>
    %359 = arith.select %357, %358, %354 : vector<32x32xi1>, vector<32x32xbf16>
    %360 = vector.extract_strided_slice %351 {offsets = [1, 0], sizes = [31, 32], strides = [1, 1]} : vector<32x32xbf16> to vector<31x32xbf16>
    %361 = tpu.concatenate %360, %352 in 0 : vector<31x32xbf16>, vector<1x32xbf16> -> vector<32x32xbf16>
    %cst_125 = arith.constant 0.000000e+00 : f32
    %362 = arith.truncf %cst_125 : f32 to bf16
    %363 = vector.shape_cast %38 : vector<32x1xi1> to vector<32x1xi1>
    %364 = vector.broadcast %363 : vector<32x1xi1> to vector<32x32xi1>
    %365 = vector.broadcast %362 : bf16 to vector<32x32xbf16>
    %366 = arith.select %364, %365, %361 : vector<32x32xi1>, vector<32x32xbf16>
    %367 = tpu.concatenate %359, %351, %366 in 1 : vector<32x32xbf16>, vector<32x32xbf16>, vector<32x32xbf16> -> vector<32x96xbf16>
    %c0_126 = arith.constant 0 : index
    %c0_127 = arith.constant 0 : index
    %368 = vector.load %arg8[%c0_126, %c0_127] : memref<96x16xbf16, #tpu.memory_space<vmem>>, vector<96x16xbf16>
    %cst_128 = arith.constant dense<0.000000e+00> : vector<32x16xf32>
    %369 = tpu.matmul %367, %368, %cst_128 {dimension_numbers = #tpu.dot_dimension_numbers<[1], [0], [0], [1], [0, 0, 1, 1], [], []>} : vector<32x96xbf16>, vector<96x16xbf16>, vector<32x16xf32> -> vector<32x16xf32>
    %cst_129 = arith.constant 0.000000e+00 : f32
    %370 = vector.broadcast %cst_129 : f32 to vector<32x16xf32>
    %371 = arith.maximumf %369, %370 : vector<32x16xf32>
    %372 = arith.truncf %371 : vector<32x16xf32> to vector<32x16xbf16>
    %cst_130 = arith.constant 0.000000e+00 : bf16
    %373 = vector.broadcast %cst_130 : bf16 to vector<1x16xbf16>
    %374 = vector.extract_strided_slice %372 {offsets = [0, 0], sizes = [31, 16], strides = [1, 1]} : vector<32x16xbf16> to vector<31x16xbf16>
    %375 = tpu.concatenate %373, %374 in 0 : vector<1x16xbf16>, vector<31x16xbf16> -> vector<32x16xbf16>
    %cst_131 = arith.constant 0.000000e+00 : f32
    %376 = arith.truncf %cst_131 : f32 to bf16
    %377 = vector.shape_cast %20 : vector<32x1xi1> to vector<32x1xi1>
    %378 = vector.broadcast %377 : vector<32x1xi1> to vector<32x16xi1>
    %379 = vector.broadcast %376 : bf16 to vector<32x16xbf16>
    %380 = arith.select %378, %379, %375 : vector<32x16xi1>, vector<32x16xbf16>
    %381 = vector.extract_strided_slice %372 {offsets = [1, 0], sizes = [31, 16], strides = [1, 1]} : vector<32x16xbf16> to vector<31x16xbf16>
    %382 = tpu.concatenate %381, %373 in 0 : vector<31x16xbf16>, vector<1x16xbf16> -> vector<32x16xbf16>
    %cst_132 = arith.constant 0.000000e+00 : f32
    %383 = arith.truncf %cst_132 : f32 to bf16
    %384 = vector.shape_cast %38 : vector<32x1xi1> to vector<32x1xi1>
    %385 = vector.broadcast %384 : vector<32x1xi1> to vector<32x16xi1>
    %386 = vector.broadcast %383 : bf16 to vector<32x16xbf16>
    %387 = arith.select %385, %386, %382 : vector<32x16xi1>, vector<32x16xbf16>
    %388 = tpu.concatenate %380, %372, %387 in 1 : vector<32x16xbf16>, vector<32x16xbf16>, vector<32x16xbf16> -> vector<32x48xbf16>
    %c0_133 = arith.constant 0 : index
    %c0_134 = arith.constant 0 : index
    %389 = vector.load %arg9[%c0_133, %c0_134] : memref<48x2xbf16, #tpu.memory_space<vmem>>, vector<48x2xbf16>
    %cst_135 = arith.constant dense<0.000000e+00> : vector<32x2xf32>
    %390 = tpu.matmul %388, %389, %cst_135 {dimension_numbers = #tpu.dot_dimension_numbers<[1], [0], [0], [1], [0, 0, 1, 1], [], []>} : vector<32x48xbf16>, vector<48x2xbf16>, vector<32x2xf32> -> vector<32x2xf32>
    %c1_136 = arith.constant 1 : index
    %c0_137 = arith.constant 0 : index
    %c0_138 = arith.constant 0 : index
    %c0_139 = arith.constant 0 : index
    %391 = vector.load %arg10[%c1_136, %c0_137, %c0_138, %c0_139] : memref<3x1x32x2xf32, #tpu.memory_space<vmem>>, vector<1x1x32x2xf32>
    %392 = vector.shape_cast %391 : vector<1x1x32x2xf32> to vector<32x2xf32>
    %393 = vector.shape_cast %390 : vector<32x2xf32> to vector<1x1x32x2xf32>
    tpu.vector_store %arg10[%c1_136, %c0_137, %c0_138, %c0_139], %393 {strides = array<i32>} : memref<3x1x32x2xf32, #tpu.memory_space<vmem>>, vector<1x1x32x2xf32>,
    %394 = arith.truncf %329 : vector<32x32xf32> to vector<32x32xbf16>
    %cst_140 = arith.constant 0.000000e+00 : bf16
    %395 = vector.broadcast %cst_140 : bf16 to vector<1x32xbf16>
    %396 = vector.extract_strided_slice %394 {offsets = [0, 0], sizes = [31, 32], strides = [1, 1]} : vector<32x32xbf16> to vector<31x32xbf16>
    %397 = tpu.concatenate %395, %396 in 0 : vector<1x32xbf16>, vector<31x32xbf16> -> vector<32x32xbf16>
    %cst_141 = arith.constant 0.000000e+00 : f32
    %398 = arith.truncf %cst_141 : f32 to bf16
    %399 = vector.shape_cast %20 : vector<32x1xi1> to vector<32x1xi1>
    %400 = vector.broadcast %399 : vector<32x1xi1> to vector<32x32xi1>
    %401 = vector.broadcast %398 : bf16 to vector<32x32xbf16>
    %402 = arith.select %400, %401, %397 : vector<32x32xi1>, vector<32x32xbf16>
    %403 = vector.extract_strided_slice %394 {offsets = [1, 0], sizes = [31, 32], strides = [1, 1]} : vector<32x32xbf16> to vector<31x32xbf16>
    %404 = tpu.concatenate %403, %395 in 0 : vector<31x32xbf16>, vector<1x32xbf16> -> vector<32x32xbf16>
    %cst_142 = arith.constant 0.000000e+00 : f32
    %405 = arith.truncf %cst_142 : f32 to bf16
    %406 = vector.shape_cast %38 : vector<32x1xi1> to vector<32x1xi1>
    %407 = vector.broadcast %406 : vector<32x1xi1> to vector<32x32xi1>
    %408 = vector.broadcast %405 : bf16 to vector<32x32xbf16>
    %409 = arith.select %407, %408, %404 : vector<32x32xi1>, vector<32x32xbf16>
    %410 = tpu.concatenate %402, %394, %409, %43 in 1 : vector<32x32xbf16>, vector<32x32xbf16>, vector<32x32xbf16>, vector<32x3xbf16> -> vector<32x99xbf16>
    %c0_143 = arith.constant 0 : index
    %c0_144 = arith.constant 0 : index
    %411 = vector.load %arg4[%c0_143, %c0_144] : memref<99x32xbf16, #tpu.memory_space<vmem>>, vector<99x32xbf16>
    %cst_145 = arith.constant dense<0.000000e+00> : vector<32x32xf32>
    %412 = tpu.matmul %410, %411, %cst_145 {dimension_numbers = #tpu.dot_dimension_numbers<[1], [0], [0], [1], [0, 0, 1, 1], [], []>} : vector<32x99xbf16>, vector<99x32xbf16>, vector<32x32xf32> -> vector<32x32xf32>
    %cst_146 = arith.constant 0.000000e+00 : f32
    %413 = vector.broadcast %cst_146 : f32 to vector<32x32xf32>
    %414 = arith.maximumf %412, %413 : vector<32x32xf32>
    %415 = arith.truncf %414 : vector<32x32xf32> to vector<32x32xbf16>
    %cst_147 = arith.constant 0.000000e+00 : bf16
    %416 = vector.broadcast %cst_147 : bf16 to vector<1x32xbf16>
    %417 = vector.extract_strided_slice %415 {offsets = [0, 0], sizes = [31, 32], strides = [1, 1]} : vector<32x32xbf16> to vector<31x32xbf16>
    %418 = tpu.concatenate %416, %417 in 0 : vector<1x32xbf16>, vector<31x32xbf16> -> vector<32x32xbf16>
    %cst_148 = arith.constant 0.000000e+00 : f32
    %419 = arith.truncf %cst_148 : f32 to bf16
    %420 = vector.shape_cast %20 : vector<32x1xi1> to vector<32x1xi1>
    %421 = vector.broadcast %420 : vector<32x1xi1> to vector<32x32xi1>
    %422 = vector.broadcast %419 : bf16 to vector<32x32xbf16>
    %423 = arith.select %421, %422, %418 : vector<32x32xi1>, vector<32x32xbf16>
    %424 = vector.extract_strided_slice %415 {offsets = [1, 0], sizes = [31, 32], strides = [1, 1]} : vector<32x32xbf16> to vector<31x32xbf16>
    %425 = tpu.concatenate %424, %416 in 0 : vector<31x32xbf16>, vector<1x32xbf16> -> vector<32x32xbf16>
    %cst_149 = arith.constant 0.000000e+00 : f32
    %426 = arith.truncf %cst_149 : f32 to bf16
    %427 = vector.shape_cast %38 : vector<32x1xi1> to vector<32x1xi1>
    %428 = vector.broadcast %427 : vector<32x1xi1> to vector<32x32xi1>
    %429 = vector.broadcast %426 : bf16 to vector<32x32xbf16>
    %430 = arith.select %428, %429, %425 : vector<32x32xi1>, vector<32x32xbf16>
    %431 = tpu.concatenate %423, %415, %430 in 1 : vector<32x32xbf16>, vector<32x32xbf16>, vector<32x32xbf16> -> vector<32x96xbf16>
    %c0_150 = arith.constant 0 : index
    %c0_151 = arith.constant 0 : index
    %c0_152 = arith.constant 0 : index
    %432 = vector.load %arg5[%c0_150, %c0_151, %c0_152] : memref<2x96x32xbf16, #tpu.memory_space<vmem>>, vector<1x96x32xbf16>
    %433 = vector.shape_cast %432 : vector<1x96x32xbf16> to vector<96x32xbf16>
    %cst_153 = arith.constant dense<0.000000e+00> : vector<32x32xf32>
    %434 = tpu.matmul %431, %433, %cst_153 {dimension_numbers = #tpu.dot_dimension_numbers<[1], [0], [0], [1], [0, 0, 1, 1], [], []>} : vector<32x96xbf16>, vector<96x32xbf16>, vector<32x32xf32> -> vector<32x32xf32>
    %cst_154 = arith.constant 0.000000e+00 : f32
    %435 = vector.broadcast %cst_154 : f32 to vector<32x32xf32>
    %436 = arith.maximumf %434, %435 : vector<32x32xf32>
    %437 = arith.truncf %436 : vector<32x32xf32> to vector<32x32xbf16>
    %cst_155 = arith.constant 0.000000e+00 : bf16
    %438 = vector.broadcast %cst_155 : bf16 to vector<1x32xbf16>
    %439 = vector.extract_strided_slice %437 {offsets = [0, 0], sizes = [31, 32], strides = [1, 1]} : vector<32x32xbf16> to vector<31x32xbf16>
    %440 = tpu.concatenate %438, %439 in 0 : vector<1x32xbf16>, vector<31x32xbf16> -> vector<32x32xbf16>
    %cst_156 = arith.constant 0.000000e+00 : f32
    %441 = arith.truncf %cst_156 : f32 to bf16
    %442 = vector.shape_cast %20 : vector<32x1xi1> to vector<32x1xi1>
    %443 = vector.broadcast %442 : vector<32x1xi1> to vector<32x32xi1>
    %444 = vector.broadcast %441 : bf16 to vector<32x32xbf16>
    %445 = arith.select %443, %444, %440 : vector<32x32xi1>, vector<32x32xbf16>
    %446 = vector.extract_strided_slice %437 {offsets = [1, 0], sizes = [31, 32], strides = [1, 1]} : vector<32x32xbf16> to vector<31x32xbf16>
    %447 = tpu.concatenate %446, %438 in 0 : vector<31x32xbf16>, vector<1x32xbf16> -> vector<32x32xbf16>
    %cst_157 = arith.constant 0.000000e+00 : f32
    %448 = arith.truncf %cst_157 : f32 to bf16
    %449 = vector.shape_cast %38 : vector<32x1xi1> to vector<32x1xi1>
    %450 = vector.broadcast %449 : vector<32x1xi1> to vector<32x32xi1>
    %451 = vector.broadcast %448 : bf16 to vector<32x32xbf16>
    %452 = arith.select %450, %451, %447 : vector<32x32xi1>, vector<32x32xbf16>
    %453 = tpu.concatenate %445, %437, %452 in 1 : vector<32x32xbf16>, vector<32x32xbf16>, vector<32x32xbf16> -> vector<32x96xbf16>
    %c0_158 = arith.constant 0 : index
    %c0_159 = arith.constant 0 : index
    %c0_160 = arith.constant 0 : index
    %454 = vector.load %arg6[%c0_158, %c0_159, %c0_160] : memref<2x96x32xbf16, #tpu.memory_space<vmem>>, vector<1x96x32xbf16>
    %455 = vector.shape_cast %454 : vector<1x96x32xbf16> to vector<96x32xbf16>
    %cst_161 = arith.constant dense<0.000000e+00> : vector<32x32xf32>
    %456 = tpu.matmul %453, %455, %cst_161 {dimension_numbers = #tpu.dot_dimension_numbers<[1], [0], [0], [1], [0, 0, 1, 1], [], []>} : vector<32x96xbf16>, vector<96x32xbf16>, vector<32x32xf32> -> vector<32x32xf32>
    %457 = arith.addf %456, %414 : vector<32x32xf32>
    %cst_162 = arith.constant 0.000000e+00 : f32
    %458 = vector.broadcast %cst_162 : f32 to vector<32x32xf32>
    %459 = arith.maximumf %457, %458 : vector<32x32xf32>
    %460 = arith.truncf %459 : vector<32x32xf32> to vector<32x32xbf16>
    %cst_163 = arith.constant 0.000000e+00 : bf16
    %461 = vector.broadcast %cst_163 : bf16 to vector<1x32xbf16>
    %462 = vector.extract_strided_slice %460 {offsets = [0, 0], sizes = [31, 32], strides = [1, 1]} : vector<32x32xbf16> to vector<31x32xbf16>
    %463 = tpu.concatenate %461, %462 in 0 : vector<1x32xbf16>, vector<31x32xbf16> -> vector<32x32xbf16>
    %cst_164 = arith.constant 0.000000e+00 : f32
    %464 = arith.truncf %cst_164 : f32 to bf16
    %465 = vector.shape_cast %20 : vector<32x1xi1> to vector<32x1xi1>
    %466 = vector.broadcast %465 : vector<32x1xi1> to vector<32x32xi1>
    %467 = vector.broadcast %464 : bf16 to vector<32x32xbf16>
    %468 = arith.select %466, %467, %463 : vector<32x32xi1>, vector<32x32xbf16>
    %469 = vector.extract_strided_slice %460 {offsets = [1, 0], sizes = [31, 32], strides = [1, 1]} : vector<32x32xbf16> to vector<31x32xbf16>
    %470 = tpu.concatenate %469, %461 in 0 : vector<31x32xbf16>, vector<1x32xbf16> -> vector<32x32xbf16>
    %cst_165 = arith.constant 0.000000e+00 : f32
    %471 = arith.truncf %cst_165 : f32 to bf16
    %472 = vector.shape_cast %38 : vector<32x1xi1> to vector<32x1xi1>
    %473 = vector.broadcast %472 : vector<32x1xi1> to vector<32x32xi1>
    %474 = vector.broadcast %471 : bf16 to vector<32x32xbf16>
    %475 = arith.select %473, %474, %470 : vector<32x32xi1>, vector<32x32xbf16>
    %476 = tpu.concatenate %468, %460, %475 in 1 : vector<32x32xbf16>, vector<32x32xbf16>, vector<32x32xbf16> -> vector<32x96xbf16>
    %c1_166 = arith.constant 1 : index
    %c0_167 = arith.constant 0 : index
    %c0_168 = arith.constant 0 : index
    %477 = vector.load %arg5[%c1_166, %c0_167, %c0_168] : memref<2x96x32xbf16, #tpu.memory_space<vmem>>, vector<1x96x32xbf16>
    %478 = vector.shape_cast %477 : vector<1x96x32xbf16> to vector<96x32xbf16>
    %cst_169 = arith.constant dense<0.000000e+00> : vector<32x32xf32>
    %479 = tpu.matmul %476, %478, %cst_169 {dimension_numbers = #tpu.dot_dimension_numbers<[1], [0], [0], [1], [0, 0, 1, 1], [], []>} : vector<32x96xbf16>, vector<96x32xbf16>, vector<32x32xf32> -> vector<32x32xf32>
    %cst_170 = arith.constant 0.000000e+00 : f32
    %480 = vector.broadcast %cst_170 : f32 to vector<32x32xf32>
    %481 = arith.maximumf %479, %480 : vector<32x32xf32>
    %482 = arith.truncf %481 : vector<32x32xf32> to vector<32x32xbf16>
    %cst_171 = arith.constant 0.000000e+00 : bf16
    %483 = vector.broadcast %cst_171 : bf16 to vector<1x32xbf16>
    %484 = vector.extract_strided_slice %482 {offsets = [0, 0], sizes = [31, 32], strides = [1, 1]} : vector<32x32xbf16> to vector<31x32xbf16>
    %485 = tpu.concatenate %483, %484 in 0 : vector<1x32xbf16>, vector<31x32xbf16> -> vector<32x32xbf16>
    %cst_172 = arith.constant 0.000000e+00 : f32
    %486 = arith.truncf %cst_172 : f32 to bf16
    %487 = vector.shape_cast %20 : vector<32x1xi1> to vector<32x1xi1>
    %488 = vector.broadcast %487 : vector<32x1xi1> to vector<32x32xi1>
    %489 = vector.broadcast %486 : bf16 to vector<32x32xbf16>
    %490 = arith.select %488, %489, %485 : vector<32x32xi1>, vector<32x32xbf16>
    %491 = vector.extract_strided_slice %482 {offsets = [1, 0], sizes = [31, 32], strides = [1, 1]} : vector<32x32xbf16> to vector<31x32xbf16>
    %492 = tpu.concatenate %491, %483 in 0 : vector<31x32xbf16>, vector<1x32xbf16> -> vector<32x32xbf16>
    %cst_173 = arith.constant 0.000000e+00 : f32
    %493 = arith.truncf %cst_173 : f32 to bf16
    %494 = vector.shape_cast %38 : vector<32x1xi1> to vector<32x1xi1>
    %495 = vector.broadcast %494 : vector<32x1xi1> to vector<32x32xi1>
    %496 = vector.broadcast %493 : bf16 to vector<32x32xbf16>
    %497 = arith.select %495, %496, %492 : vector<32x32xi1>, vector<32x32xbf16>
    %498 = tpu.concatenate %490, %482, %497 in 1 : vector<32x32xbf16>, vector<32x32xbf16>, vector<32x32xbf16> -> vector<32x96xbf16>
    %c1_174 = arith.constant 1 : index
    %c0_175 = arith.constant 0 : index
    %c0_176 = arith.constant 0 : index
    %499 = vector.load %arg6[%c1_174, %c0_175, %c0_176] : memref<2x96x32xbf16, #tpu.memory_space<vmem>>, vector<1x96x32xbf16>
    %500 = vector.shape_cast %499 : vector<1x96x32xbf16> to vector<96x32xbf16>
    %cst_177 = arith.constant dense<0.000000e+00> : vector<32x32xf32>
    %501 = tpu.matmul %498, %500, %cst_177 {dimension_numbers = #tpu.dot_dimension_numbers<[1], [0], [0], [1], [0, 0, 1, 1], [], []>} : vector<32x96xbf16>, vector<96x32xbf16>, vector<32x32xf32> -> vector<32x32xf32>
    %502 = arith.addf %501, %459 : vector<32x32xf32>
    %cst_178 = arith.constant 0.000000e+00 : f32
    %503 = vector.broadcast %cst_178 : f32 to vector<32x32xf32>
    %504 = arith.maximumf %502, %503 : vector<32x32xf32>
    %505 = arith.truncf %504 : vector<32x32xf32> to vector<32x32xbf16>
    %cst_179 = arith.constant 0.000000e+00 : bf16
    %506 = vector.broadcast %cst_179 : bf16 to vector<1x32xbf16>
    %507 = vector.extract_strided_slice %505 {offsets = [0, 0], sizes = [31, 32], strides = [1, 1]} : vector<32x32xbf16> to vector<31x32xbf16>
    %508 = tpu.concatenate %506, %507 in 0 : vector<1x32xbf16>, vector<31x32xbf16> -> vector<32x32xbf16>
    %cst_180 = arith.constant 0.000000e+00 : f32
    %509 = arith.truncf %cst_180 : f32 to bf16
    %510 = vector.shape_cast %20 : vector<32x1xi1> to vector<32x1xi1>
    %511 = vector.broadcast %510 : vector<32x1xi1> to vector<32x32xi1>
    %512 = vector.broadcast %509 : bf16 to vector<32x32xbf16>
    %513 = arith.select %511, %512, %508 : vector<32x32xi1>, vector<32x32xbf16>
    %514 = vector.extract_strided_slice %505 {offsets = [1, 0], sizes = [31, 32], strides = [1, 1]} : vector<32x32xbf16> to vector<31x32xbf16>
    %515 = tpu.concatenate %514, %506 in 0 : vector<31x32xbf16>, vector<1x32xbf16> -> vector<32x32xbf16>
    %cst_181 = arith.constant 0.000000e+00 : f32
    %516 = arith.truncf %cst_181 : f32 to bf16
    %517 = vector.shape_cast %38 : vector<32x1xi1> to vector<32x1xi1>
    %518 = vector.broadcast %517 : vector<32x1xi1> to vector<32x32xi1>
    %519 = vector.broadcast %516 : bf16 to vector<32x32xbf16>
    %520 = arith.select %518, %519, %515 : vector<32x32xi1>, vector<32x32xbf16>
    %521 = tpu.concatenate %513, %505, %520 in 1 : vector<32x32xbf16>, vector<32x32xbf16>, vector<32x32xbf16> -> vector<32x96xbf16>
    %c0_182 = arith.constant 0 : index
    %c0_183 = arith.constant 0 : index
    %522 = vector.load %arg7[%c0_182, %c0_183] : memref<96x32xbf16, #tpu.memory_space<vmem>>, vector<96x32xbf16>
    %cst_184 = arith.constant dense<0.000000e+00> : vector<32x32xf32>
    %523 = tpu.matmul %521, %522, %cst_184 {dimension_numbers = #tpu.dot_dimension_numbers<[1], [0], [0], [1], [0, 0, 1, 1], [], []>} : vector<32x96xbf16>, vector<96x32xbf16>, vector<32x32xf32> -> vector<32x32xf32>
    %cst_185 = arith.constant 0.000000e+00 : f32
    %524 = vector.broadcast %cst_185 : f32 to vector<32x32xf32>
    %525 = arith.maximumf %523, %524 : vector<32x32xf32>
    %526 = arith.truncf %525 : vector<32x32xf32> to vector<32x32xbf16>
    %cst_186 = arith.constant 0.000000e+00 : bf16
    %527 = vector.broadcast %cst_186 : bf16 to vector<1x32xbf16>
    %528 = vector.extract_strided_slice %526 {offsets = [0, 0], sizes = [31, 32], strides = [1, 1]} : vector<32x32xbf16> to vector<31x32xbf16>
    %529 = tpu.concatenate %527, %528 in 0 : vector<1x32xbf16>, vector<31x32xbf16> -> vector<32x32xbf16>
    %cst_187 = arith.constant 0.000000e+00 : f32
    %530 = arith.truncf %cst_187 : f32 to bf16
    %531 = vector.shape_cast %20 : vector<32x1xi1> to vector<32x1xi1>
    %532 = vector.broadcast %531 : vector<32x1xi1> to vector<32x32xi1>
    %533 = vector.broadcast %530 : bf16 to vector<32x32xbf16>
    %534 = arith.select %532, %533, %529 : vector<32x32xi1>, vector<32x32xbf16>
    %535 = vector.extract_strided_slice %526 {offsets = [1, 0], sizes = [31, 32], strides = [1, 1]} : vector<32x32xbf16> to vector<31x32xbf16>
    %536 = tpu.concatenate %535, %527 in 0 : vector<31x32xbf16>, vector<1x32xbf16> -> vector<32x32xbf16>
    %cst_188 = arith.constant 0.000000e+00 : f32
    %537 = arith.truncf %cst_188 : f32 to bf16
    %538 = vector.shape_cast %38 : vector<32x1xi1> to vector<32x1xi1>
    %539 = vector.broadcast %538 : vector<32x1xi1> to vector<32x32xi1>
    %540 = vector.broadcast %537 : bf16 to vector<32x32xbf16>
    %541 = arith.select %539, %540, %536 : vector<32x32xi1>, vector<32x32xbf16>
    %542 = tpu.concatenate %534, %526, %541 in 1 : vector<32x32xbf16>, vector<32x32xbf16>, vector<32x32xbf16> -> vector<32x96xbf16>
    %c0_189 = arith.constant 0 : index
    %c0_190 = arith.constant 0 : index
    %543 = vector.load %arg8[%c0_189, %c0_190] : memref<96x16xbf16, #tpu.memory_space<vmem>>, vector<96x16xbf16>
    %cst_191 = arith.constant dense<0.000000e+00> : vector<32x16xf32>
    %544 = tpu.matmul %542, %543, %cst_191 {dimension_numbers = #tpu.dot_dimension_numbers<[1], [0], [0], [1], [0, 0, 1, 1], [], []>} : vector<32x96xbf16>, vector<96x16xbf16>, vector<32x16xf32> -> vector<32x16xf32>
    %cst_192 = arith.constant 0.000000e+00 : f32
    %545 = vector.broadcast %cst_192 : f32 to vector<32x16xf32>
    %546 = arith.maximumf %544, %545 : vector<32x16xf32>
    %547 = arith.truncf %546 : vector<32x16xf32> to vector<32x16xbf16>
    %cst_193 = arith.constant 0.000000e+00 : bf16
    %548 = vector.broadcast %cst_193 : bf16 to vector<1x16xbf16>
    %549 = vector.extract_strided_slice %547 {offsets = [0, 0], sizes = [31, 16], strides = [1, 1]} : vector<32x16xbf16> to vector<31x16xbf16>
    %550 = tpu.concatenate %548, %549 in 0 : vector<1x16xbf16>, vector<31x16xbf16> -> vector<32x16xbf16>
    %cst_194 = arith.constant 0.000000e+00 : f32
    %551 = arith.truncf %cst_194 : f32 to bf16
    %552 = vector.shape_cast %20 : vector<32x1xi1> to vector<32x1xi1>
    %553 = vector.broadcast %552 : vector<32x1xi1> to vector<32x16xi1>
    %554 = vector.broadcast %551 : bf16 to vector<32x16xbf16>
    %555 = arith.select %553, %554, %550 : vector<32x16xi1>, vector<32x16xbf16>
    %556 = vector.extract_strided_slice %547 {offsets = [1, 0], sizes = [31, 16], strides = [1, 1]} : vector<32x16xbf16> to vector<31x16xbf16>
    %557 = tpu.concatenate %556, %548 in 0 : vector<31x16xbf16>, vector<1x16xbf16> -> vector<32x16xbf16>
    %cst_195 = arith.constant 0.000000e+00 : f32
    %558 = arith.truncf %cst_195 : f32 to bf16
    %559 = vector.shape_cast %38 : vector<32x1xi1> to vector<32x1xi1>
    %560 = vector.broadcast %559 : vector<32x1xi1> to vector<32x16xi1>
    %561 = vector.broadcast %558 : bf16 to vector<32x16xbf16>
    %562 = arith.select %560, %561, %557 : vector<32x16xi1>, vector<32x16xbf16>
    %563 = tpu.concatenate %555, %547, %562 in 1 : vector<32x16xbf16>, vector<32x16xbf16>, vector<32x16xbf16> -> vector<32x48xbf16>
    %c0_196 = arith.constant 0 : index
    %c0_197 = arith.constant 0 : index
    %564 = vector.load %arg9[%c0_196, %c0_197] : memref<48x2xbf16, #tpu.memory_space<vmem>>, vector<48x2xbf16>
    %cst_198 = arith.constant dense<0.000000e+00> : vector<32x2xf32>
    %565 = tpu.matmul %563, %564, %cst_198 {dimension_numbers = #tpu.dot_dimension_numbers<[1], [0], [0], [1], [0, 0, 1, 1], [], []>} : vector<32x48xbf16>, vector<48x2xbf16>, vector<32x2xf32> -> vector<32x2xf32>
    %c2 = arith.constant 2 : index
    %c0_199 = arith.constant 0 : index
    %c0_200 = arith.constant 0 : index
    %c0_201 = arith.constant 0 : index
    %566 = vector.load %arg10[%c2, %c0_199, %c0_200, %c0_201] : memref<3x1x32x2xf32, #tpu.memory_space<vmem>>, vector<1x1x32x2xf32>
    %567 = vector.shape_cast %566 : vector<1x1x32x2xf32> to vector<32x2xf32>
    %568 = vector.shape_cast %565 : vector<32x2xf32> to vector<1x1x32x2xf32>
    tpu.vector_store %arg10[%c2, %c0_199, %c0_200, %c0_201], %568 {strides = array<i32>} : memref<3x1x32x2xf32, #tpu.memory_space<vmem>>, vector<1x1x32x2xf32>,
    %c0_202 = arith.constant 0 : index
    %c0_203 = arith.constant 0 : index
    %569 = vector.load %arg11[%c0_202, %c0_203] : memref<32x32xf32, #tpu.memory_space<vmem>>, vector<32x32xf32>
    tpu.vector_store %arg11[%c0_202, %c0_203], %504 {strides = array<i32>} : memref<32x32xf32, #tpu.memory_space<vmem>>, vector<32x32xf32>,
    return
  }
  func.func @transform_0(%arg0: i32, %arg1: i32) -> (i32, i32, i32) {
    %c0_i32 = arith.constant 0 : i32
    %c0_i32_0 = arith.constant 0 : i32
    %c0_i32_1 = arith.constant 0 : i32
    return %arg0, %c0_i32, %c0_i32_0 : i32, i32, i32
  }
  func.func @transform_1(%arg0: i32, %arg1: i32) -> (i32, i32) {
    %c0_i32 = arith.constant 0 : i32
    %c0_i32_0 = arith.constant 0 : i32
    %c0_i32_1 = arith.constant 0 : i32
    return %c0_i32, %c0_i32_0 : i32, i32
  }
  func.func @transform_2(%arg0: i32, %arg1: i32) -> (i32, i32) {
    %c0_i32 = arith.constant 0 : i32
    %c0_i32_0 = arith.constant 0 : i32
    %c0_i32_1 = arith.constant 0 : i32
    return %c0_i32, %c0_i32_0 : i32, i32
  }
  func.func @transform_3(%arg0: i32, %arg1: i32) -> (i32, i32, i32) {
    %c0_i32 = arith.constant 0 : i32
    %c0_i32_0 = arith.constant 0 : i32
    %c0_i32_1 = arith.constant 0 : i32
    %c0_i32_2 = arith.constant 0 : i32
    return %c0_i32, %c0_i32_0, %c0_i32_1 : i32, i32, i32
  }
  func.func @transform_4(%arg0: i32, %arg1: i32) -> (i32, i32, i32) {
    %c0_i32 = arith.constant 0 : i32
    %c0_i32_0 = arith.constant 0 : i32
    %c0_i32_1 = arith.constant 0 : i32
    %c0_i32_2 = arith.constant 0 : i32
    return %c0_i32, %c0_i32_0, %c0_i32_1 : i32, i32, i32
  }
  func.func @transform_5(%arg0: i32, %arg1: i32) -> (i32, i32) {
    %c0_i32 = arith.constant 0 : i32
    %c0_i32_0 = arith.constant 0 : i32
    %c0_i32_1 = arith.constant 0 : i32
    return %c0_i32, %c0_i32_0 : i32, i32
  }
  func.func @transform_6(%arg0: i32, %arg1: i32) -> (i32, i32) {
    %c0_i32 = arith.constant 0 : i32
    %c0_i32_0 = arith.constant 0 : i32
    %c0_i32_1 = arith.constant 0 : i32
    return %c0_i32, %c0_i32_0 : i32, i32
  }
  func.func @transform_7(%arg0: i32, %arg1: i32) -> (i32, i32) {
    %c0_i32 = arith.constant 0 : i32
    %c0_i32_0 = arith.constant 0 : i32
    %c0_i32_1 = arith.constant 0 : i32
    return %c0_i32, %c0_i32_0 : i32, i32
  }
  func.func @transform_8(%arg0: i32, %arg1: i32) -> (i32, i32, i32, i32) {
    %c0_i32 = arith.constant 0 : i32
    %c0_i32_0 = arith.constant 0 : i32
    %c0_i32_1 = arith.constant 0 : i32
    return %arg1, %arg0, %c0_i32, %c0_i32_0 : i32, i32, i32, i32
  }
}

</mosaic_0001>

<llo_original>
// kernel: dtnet1d_forward.1
$region0: #{dtnet1d_forward.1}
  #allocation0 [shape = 'u32[]', space=smem, size = 0x4, offset = 0x4, fixed_abs, tag = 'smem constant byte address 0x4 - core index']
  #allocation1 [shape = 'u32[144,128]{1,0:T(1,128)}', space=vmem, size = 0x12000, scoped, tag = 'internal scratch']
  #allocation2 [shape = 'f32[32,32]{1,0:T(8,128)}', space=vmem, size = 0x4000, scoped, tag = 'scratch operand']
  %s0 = inlined_call_operand.vmem [shape: f32[1,32,3], index: 0, kind: input, shape index: {}]
  %s1 = inlined_call_operand.vmem [shape: f32[3,32], index: 1, kind: input, shape index: {}]
  %s2 = inlined_call_operand.vmem [shape: bf16[99,32], index: 2, kind: input, shape index: {}]
  %s3 = inlined_call_operand.vmem [shape: bf16[2,96,32], index: 3, kind: input, shape index: {}]
  %s4 = inlined_call_operand.vmem [shape: bf16[2,96,32], index: 4, kind: input, shape index: {}]
  %s5 = inlined_call_operand.vmem [shape: bf16[96,32], index: 5, kind: input, shape index: {}]
  %s6 = inlined_call_operand.vmem [shape: bf16[96,16], index: 6, kind: input, shape index: {}]
  %s7 = inlined_call_operand.vmem [shape: bf16[48,2], index: 7, kind: input, shape index: {}]
  %s8 = inlined_call_operand.vmem [shape: f32[3,1,32,2], index: 8, kind: output, shape index: {}]
  %s9 = sld [smem:[#allocation0]]
  $region46: #{dtnet1d_forward.1} parent=0
    _
  %s11 = ssub.s32 1, %s9
  %s12 = scalar_select 0, %s11, %s9
  // Predicated region
  $region2: #{dtnet1d_forward.1} parent=0 // pred_check
    _
  $region3: #{dtnet1d_forward.1} parent=0 // pred_check_branch
    %14 = sbr.rel (0) target = $region5
  $region4: #{dtnet1d_forward.1} parent=0 // pred_region
    _
  $region5: #{dtnet1d_forward.1} parent=0 // pred_fallthru
    _
  // Predicated region
  $region6: #{dtnet1d_forward.1} parent=0 // pred_check
    _
  $region7: #{dtnet1d_forward.1} parent=0 // pred_check_branch
    %16 = sbr.rel (0) target = $region9
  $region8: #{dtnet1d_forward.1} parent=0 // pred_region
    _
  $region9: #{dtnet1d_forward.1} parent=0 // pred_fallthru
    _
  // Predicated region
  $region10: #{dtnet1d_forward.1} parent=0 // pred_check
    _
  $region11: #{dtnet1d_forward.1} parent=0 // pred_check_branch
    %18 = sbr.rel (0) target = $region13
  $region12: #{dtnet1d_forward.1} parent=0 // pred_region
    _
  $region13: #{dtnet1d_forward.1} parent=0 // pred_fallthru
    _
  // Predicated region
  $region14: #{dtnet1d_forward.1} parent=0 // pred_check
    _
  $region15: #{dtnet1d_forward.1} parent=0 // pred_check_branch
    %20 = sbr.rel (0) target = $region17
  $region16: #{dtnet1d_forward.1} parent=0 // pred_region
    _
  $region17: #{dtnet1d_forward.1} parent=0 // pred_fallthru
    _
  // Predicated region
  $region18: #{dtnet1d_forward.1} parent=0 // pred_check
    _
  $region19: #{dtnet1d_forward.1} parent=0 // pred_check_branch
    %22 = sbr.rel (0) target = $region21
  $region20: #{dtnet1d_forward.1} parent=0 // pred_region
    _
  $region21: #{dtnet1d_forward.1} parent=0 // pred_fallthru
    _
  // Predicated region
  $region22: #{dtnet1d_forward.1} parent=0 // pred_check
    _
  $region23: #{dtnet1d_forward.1} parent=0 // pred_check_branch
    %24 = sbr.rel (0) target = $region25
  $region24: #{dtnet1d_forward.1} parent=0 // pred_region
    _
  $region25: #{dtnet1d_forward.1} parent=0 // pred_fallthru
    _
  // Predicated region
  $region26: #{dtnet1d_forward.1} parent=0 // pred_check
    _
  $region27: #{dtnet1d_forward.1} parent=0 // pred_check_branch
    %26 = sbr.rel (0) target = $region29
  $region28: #{dtnet1d_forward.1} parent=0 // pred_region
    _
  $region29: #{dtnet1d_forward.1} parent=0 // pred_fallthru
    _
  // Predicated region
  $region30: #{dtnet1d_forward.1} parent=0 // pred_check
    _
  $region31: #{dtnet1d_forward.1} parent=0 // pred_check_branch
    %28 = sbr.rel (0) target = $region33
  $region32: #{dtnet1d_forward.1} parent=0 // pred_region
    _
  $region33: #{dtnet1d_forward.1} parent=0 // pred_fallthru
    _
  %v32 = vld [vmem:[%s0] sm:$0xff]
  %v33 = vld [vmem:[%s0 + $0x8] sm:$0xff]
  %v34 = vld [vmem:[%s0 + $0x10] sm:$0xff]
  %v35 = vld [vmem:[%s0 + $0x18] sm:$0xff]
  %v36 = vlaneseq
  %v37 = vshrl.u32 %v36, 7
  %v38 = vadd.s32 %v37, 8
  %v39 = vadd.s32 %v37, 16
  %v40 = vadd.s32 %v37, 24
  %vm41 = vcmp.lt.s32.totalorder %v37, 0
  %v42 = vsub.s32 0, %v37
  %v43 = vsel %vm41, %v42, %v37
  %v44 = vshrl.u32 %v43, 4
  %v45 = vand.u32 %v43, 15
  %v46 = vsub.s32 0, %v45
  %v47 = vsel %vm41, %v46, %v45
  %vm48 = vcmp.lt.s32.totalorder %v38, 0
  %v49 = vsub.s32 0, %v38
  %v50 = vsel %vm48, %v49, %v38
  %v51 = vshrl.u32 %v50, 4
  %v52 = vand.u32 %v50, 15
  %v53 = vsub.s32 0, %v52
  %v54 = vsel %vm48, %v53, %v52
  %vm55 = vcmp.lt.s32.totalorder %v39, 0
  %v56 = vsub.s32 0, %v39
  %v57 = vsel %vm55, %v56, %v39
  %v58 = vshrl.u32 %v57, 4
  %v59 = vand.u32 %v57, 15
  %v60 = vsub.s32 0, %v59
  %v61 = vsel %vm55, %v60, %v59
  %vm62 = vcmp.lt.s32.totalorder %v40, 0
  %v63 = vsub.s32 0, %v40
  %v64 = vsel %vm62, %v63, %v40
  %v65 = vshrl.u32 %v64, 4
  %v66 = vand.u32 %v64, 15
  %v67 = vsub.s32 0, %v66
  %v68 = vsel %vm62, %v67, %v66
  %vm69 = vcmp.ne.s32.totalorder %v47, 0
  %vm70 = vcmp.ne.s32.totalorder %v54, 0
  %vm71 = vcmp.ne.s32.totalorder %v61, 0
  %vm72 = vcmp.ne.s32.totalorder %v68, 0
  %vm73 = vcmp.lt.s32.totalorder %v47, 0
  %vm74 = vcmp.lt.s32.totalorder %v54, 0
  %vm75 = vcmp.lt.s32.totalorder %v61, 0
  %vm76 = vcmp.lt.s32.totalorder %v68, 0
  %vm77 = vmand %vm73, %vm69
  %vm78 = vmand %vm74, %vm70
  %vm79 = vmand %vm75, %vm71
  %vm80 = vmand %vm76, %vm72
  %v81 = vadd.s32 %v47, 16
  %v82 = vadd.s32 %v54, 16
  %v83 = vadd.s32 %v61, 16
  %v84 = vadd.s32 %v68, 16
  %v85 = vsel %vm77, %v81, %v47
  %v86 = vsel %vm78, %v82, %v54
  %v87 = vsel %vm79, %v83, %v61
  %v88 = vsel %vm80, %v84, %v68
  %vm89 = vcmp.eq.s32.totalorder %v85, 0
  %vm90 = vcmp.eq.s32.totalorder %v86, 0
  %vm91 = vcmp.eq.s32.totalorder %v87, 0
  %vm92 = vcmp.eq.s32.totalorder %v88, 0
  %vm93 = vcmp.eq.s32.totalorder %v85, 15
  %vm94 = vcmp.eq.s32.totalorder %v86, 15
  %vm95 = vcmp.eq.s32.totalorder %v87, 15
  %vm96 = vcmp.eq.s32.totalorder %v88, 15
  %p97 = scmp.eq.s32.totalorder 0, 0
  // Predicated region
  $region34: #{dtnet1d_forward.1} parent=0 // pred_check
    %p98 = pneg %p97
  $region35: #{dtnet1d_forward.1} parent=0 // pred_check_branch
    %100 = sbr.rel (%p98) target = $region37
  $region36: #{dtnet1d_forward.1} parent=0 // pred_region
    %v101 = vld [vmem:[%s1] sm:$0x7]
    %vm102 = vcmask 23552
    %v104 = vsel %vm102, %v32, 0
    %v107 = vsel %vm102, %v33, 0
    %v110 = vsel %vm102, %v34, 0
    %v113 = vsel %vm102, %v35, 0
    %vm115 = vcmask 1042432
    %v117 = vsel %vm115, %v101, 0
    %119 = vmatprep.subr.mxu0 0.0
    %120 = vmatpush1.msra.mxu0 0.0
    %121 = vmatprep.subr.mxu0 0.0
    %122 = vmatpush1.msra.mxu0 0.0
    %123 = vmatprep.subr.mxu0 0.0
    %124 = vmatpush1.msra.mxu0 0.0
    %125 = vmatprep.subr.mxu0 0.0
    %126 = vmatpush1.msra.mxu0 0.0
    %127 = vmatprep.subr.mxu0 0.0
    %128 = vmatpush1.msra.mxu0 0.0
    %129 = vmatprep.subr.mxu0 0.0
    %130 = vmatpush1.msra.mxu0 0.0
    %131 = vmatprep.subr.mxu0 0.0
    %132 = vmatpush1.msra.mxu0 0.0
    %133 = vmatprep.subr.mxu0 0.0
    %134 = vmatpush1.msra.mxu0 0.0
    %135 = vmatprep.subr.mxu0 0.0
    %136 = vmatpush1.msra.mxu0 0.0
    %137 = vmatprep.subr.mxu0 0.0
    %138 = vmatpush1.msra.mxu0 0.0
    %139 = vmatprep.subr.mxu0 0.0
    %140 = vmatpush1.msra.mxu0 0.0
    %141 = vmatprep.subr.mxu0 0.0
    %142 = vmatpush1.msra.mxu0 0.0
    %143 = vmatprep.subr.mxu0 0.0
    %144 = vmatpush1.msra.mxu0 0.0
    %145 = vmatprep.subr.mxu0 0.0
    %146 = vmatpush1.msra.mxu0 0.0
    %147 = vmatprep.subr.mxu0 0.0
    %148 = vmatpush1.msra.mxu0 0.0
    %149 = vmatprep.subr.mxu0 0.0
    %150 = vmatpush1.msra.mxu0 %v117
    %151 = vmatprep.subr.mxu0 0.0
    %152 = vmatpush2.msra.mxu0 0.0
    %153 = vmatprep.subr.mxu0 0.0
    %154 = vmatpush2.msra.mxu0 0.0
    %155 = vmatprep.subr.mxu0 0.0
    %156 = vmatpush2.msra.mxu0 0.0
    %157 = vmatprep.subr.mxu0 0.0
    %158 = vmatpush2.msra.mxu0 0.0
    %159 = vmatprep.subr.mxu0 0.0
    %160 = vmatpush2.msra.mxu0 0.0
    %161 = vmatprep.subr.mxu0 0.0
    %162 = vmatpush2.msra.mxu0 0.0
    %163 = vmatprep.subr.mxu0 0.0
    %164 = vmatpush2.msra.mxu0 0.0
    %165 = vmatprep.subr.mxu0 0.0
    %166 = vmatpush2.msra.mxu0 0.0
    %167 = vmatprep.subr.mxu0 0.0
    %168 = vmatpush2.msra.mxu0 0.0
    %169 = vmatprep.subr.mxu0 0.0
    %170 = vmatpush2.msra.mxu0 0.0
    %171 = vmatprep.subr.mxu0 0.0
    %172 = vmatpush2.msra.mxu0 0.0
    %173 = vmatprep.subr.mxu0 0.0
    %174 = vmatpush2.msra.mxu0 0.0
    %175 = vmatprep.subr.mxu0 0.0
    %176 = vmatpush2.msra.mxu0 0.0
    %177 = vmatprep.subr.mxu0 0.0
    %178 = vmatpush2.msra.mxu0 0.0
    %179 = vmatprep.subr.mxu0 0.0
    %180 = vmatpush2.msra.mxu0 0.0
    %181 = vmatprep.subr.mxu0 0.0
    %182 = vmatpush2.msra.mxu0 0.0
    %183 = vmatprep.mubr.f32.mxu0 0.0
    %184 = vmatmul.mubr.f32.gmra.mxu0 %v104
    %v185 = vpop.f32.mrf.mxu0
    %v186 = vadd.f32 0.0, %v185
    %v187 = vpop.f32.mrf.mxu0
    %188 = vmatprep.mubr.f32.mxu0 0.0
    %189 = vmatmul.mubr.f32.gmra.mxu0 %v107
    %v190 = vpop.f32.mrf.mxu0
    %v191 = vadd.f32 0.0, %v190
    %v192 = vpop.f32.mrf.mxu0
    %193 = vmatprep.mubr.f32.mxu0 0.0
    %194 = vmatmul.mubr.f32.gmra.mxu0 %v110
    %v195 = vpop.f32.mrf.mxu0
    %v196 = vadd.f32 0.0, %v195
    %v197 = vpop.f32.mrf.mxu0
    %198 = vmatprep.mubr.f32.mxu0 0.0
    %199 = vmatmul.mubr.f32.gmra.mxu0 %v113
    %v200 = vpop.f32.mrf.mxu0
    %v201 = vadd.f32 0.0, %v200
    %v202 = vpop.f32.mrf.mxu0
    %203 = vdwg.mxu0
    %v204 = vmax.f32 %v186, 0.0
    %v205 = vmax.f32 %v191, 0.0
    %v206 = vmax.f32 %v196, 0.0
    %v207 = vmax.f32 %v201, 0.0
    %vm208 = vcmask 261120
    %209 = vst.msk [vmem:[#allocation2] sm:$0xff] %vm208, %v204
    %210 = vst.msk [vmem:[#allocation2 + $0x8] sm:$0xff] %vm208, %v205
    %211 = vst.msk [vmem:[#allocation2 + $0x10] sm:$0xff] %vm208, %v206
    %212 = vst.msk [vmem:[#allocation2 + $0x18] sm:$0xff] %vm208, %v207
  $region37: #{dtnet1d_forward.1} parent=0 // pred_fallthru
    _
  %v213 = vld [vmem:[#allocation2] sm:$0xff]
  %v214 = vld [vmem:[#allocation2 + $0x8] sm:$0xff]
  %v215 = vld [vmem:[#allocation2 + $0x10] sm:$0xff]
  %v216 = vld [vmem:[#allocation2 + $0x18] sm:$0xff]
  %v217 = vpack.c.bf16 %v33, %v32
  %v218 = vpack.c.bf16 %v35, %v34
  %v219 = vpack.c.bf16 %v214, %v213
  %v220 = vpack.c.bf16 %v216, %v215
  %vm221 = vsmask.f32 256
  %v223 = vshrl.u32 %v219, 16
  %v225 = vrot.slane %v223, 7
  %v226 = vshll.u32 %v219, 16
  %v228 = vor.u32 %v225, %v226
  %v230 = vshrl.u32 %v220, 16
  %v232 = vrot.slane %v230, 7
  %v233 = vshll.u32 %v220, 16
  %v235 = vor.u32 %v232, %v233
  %v236 = vsel %vm221, %v225, %v235
  %vm239 = vcmask 1040384
  %vm240 = vmand %vm239, %vm221
  %v241 = vsel %vm240, 0, %v228
  %v242 = vsel %vm89, 1, 0
  %v243 = vsel %vm90, 1, 0
  %v244 = vsel %vm91, 1, 0
  %v245 = vsel %vm92, 1, 0
  %vm246 = vcmp.eq.s32.totalorder %v242, 1
  %vm247 = vcmp.eq.s32.totalorder %v243, 1
  %vm248 = vcmp.eq.s32.totalorder %v244, 1
  %vm249 = vcmp.eq.s32.totalorder %v245, 1
  %vm250 = vmpackc.low %vm246, %vm246
  %vm251 = vmpackc.low %vm247, %vm247
  %vm252 = vmpackc.low %vm248, %vm248
  %vm253 = vmpackc.low %vm249, %vm249
  %v254 = vsel %vm250, 65537, 0
  %v255 = vsel %vm251, 65537, 0
  %v256 = vsel %vm252, 65537, 0
  %v257 = vsel %vm253, 65537, 0
  %v258 = vunpack.c.l.b16 %v254
  %v259 = vunpack.c.l.b16 %v255
  %v260 = vunpack.c.l.b16 %v256
  %v261 = vunpack.c.l.b16 %v257
  %v262 = vpack.c.b16 %v259, %v258
  %v263 = vpack.c.b16 %v261, %v260
  %vm264 = vcmp.ne.s16.totalorder %v262, 0
  %vm265 = vcmp.ne.s16.totalorder %v263, 0
  %v266 = vsel %vm264, 0, %v241
  %v267 = vsel %vm265, 0, %v236
  %vm268 = vsmask.f32 7424
  %v269 = vrot.slane %v226, 1
  %v270 = vor.u32 %v223, %v269
  %v271 = vrot.slane %v233, 1
  %v272 = vsel %vm268, %v270, %v271
  %v273 = vor.u32 %v230, %v271
  %vm276 = vcmask 1047552
  %vm277 = vmand %vm276, %vm268
  %v278 = vsel %vm277, %v273, 0
  %v279 = vsel %vm93, 1, 0
  %v280 = vsel %vm94, 1, 0
  %v281 = vsel %vm95, 1, 0
  %v282 = vsel %vm96, 1, 0
  %vm283 = vcmp.eq.s32.totalorder %v279, 1
  %vm284 = vcmp.eq.s32.totalorder %v280, 1
  %vm285 = vcmp.eq.s32.totalorder %v281, 1
  %vm286 = vcmp.eq.s32.totalorder %v282, 1
  %vm287 = vmpackc.low %vm283, %vm283
  %vm288 = vmpackc.low %vm284, %vm284
  %vm289 = vmpackc.low %vm285, %vm285
  %vm290 = vmpackc.low %vm286, %vm286
  %v291 = vsel %vm287, 65537, 0
  %v292 = vsel %vm288, 65537, 0
  %v293 = vsel %vm289, 65537, 0
  %v294 = vsel %vm290, 65537, 0
  %v295 = vunpack.c.l.b16 %v291
  %v296 = vunpack.c.l.b16 %v292
  %v297 = vunpack.c.l.b16 %v293
  %v298 = vunpack.c.l.b16 %v294
  %v299 = vpack.c.b16 %v296, %v295
  %v300 = vpack.c.b16 %v298, %v297
  %vm301 = vcmp.ne.s16.totalorder %v299, 0
  %vm302 = vcmp.ne.s16.totalorder %v300, 0
  %v303 = vsel %vm301, 0, %v272
  %v304 = vsel %vm302, 0, %v278
  %307 = vrot.lane.b32.xlu0 %v219, 32
  %v308 = vpop.permute.xlu0 %307
  %309 = vrot.lane.b32.xlu0 %v220, 32
  %v310 = vpop.permute.xlu0 %309
  %313 = vrot.lane.b32.xlu0 %v303, 64
  %v314 = vpop.permute.xlu0 %313
  %315 = vrot.lane.b32.xlu0 %v304, 64
  %v316 = vpop.permute.xlu0 %315
  %319 = vrot.lane.b32.xlu0 %v217, 96
  %v320 = vpop.permute.xlu0 %319
  %321 = vrot.lane.b32.xlu0 %v218, 96
  %v322 = vpop.permute.xlu0 %321
  %vm323 = vcmask 261120
  %v326 = vsel %vm323, %v266, %v308
  %v329 = vsel %vm323, %v267, %v310
  %vm330 = vcmask 523264
  %v332 = vsel %vm330, %v326, %v314
  %v334 = vsel %vm330, %v329, %v316
  %vm335 = vcmask 785408
  %v337 = vsel %vm335, %v332, %v320
  %v339 = vsel %vm335, %v334, %v322
  %v340 = vld [vmem:[%s2] sm:$0xf]
  %v341 = vld [vmem:[%s2 + $0x4] sm:$0xf]
  %v342 = vld [vmem:[%s2 + $0x8] sm:$0xf]
  %v343 = vld [vmem:[%s2 + $0xc] sm:$0xf]
  %v344 = vld [vmem:[%s2 + $0x10] sm:$0xf]
  %v345 = vld [vmem:[%s2 + $0x14] sm:$0xf]
  %v346 = vld [vmem:[%s2 + $0x18] sm:$0xf]
  %v347 = vld [vmem:[%s2 + $0x1c] sm:$0xf]
  %v348 = vld [vmem:[%s2 + $0x20] sm:$0xf]
  %v349 = vld [vmem:[%s2 + $0x24] sm:$0xf]
  %v350 = vld [vmem:[%s2 + $0x28] sm:$0xf]
  %v351 = vld [vmem:[%s2 + $0x2c] sm:$0xf]
  %v352 = vld [vmem:[%s2 + $0x30] sm:$0x3]
  %v366 = vunpack.c.l.b16 %v340
  %v367 = vunpack.c.l.b16 %v341
  %v368 = vunpack.c.l.b16 %v342
  %v369 = vunpack.c.l.b16 %v343
  %v370 = vunpack.c.l.b16 %v344
  %v371 = vunpack.c.l.b16 %v345
  %v372 = vunpack.c.l.b16 %v346
  %v373 = vunpack.c.l.b16 %v347
  %v374 = vunpack.c.l.b16 %v348
  %v375 = vunpack.c.l.b16 %v349
  %v376 = vunpack.c.l.b16 %v350
  %v377 = vunpack.c.l.b16 %v351
  %v378 = vunpack.c.l.b16 %v352
  %v379 = vpack.c.b16 %v367, %v366
  %v380 = vpack.c.b16 %v369, %v368
  %v381 = vpack.c.b16 %v371, %v370
  %v382 = vpack.c.b16 %v373, %v372
  %v383 = vpack.c.b16 %v375, %v374
  %v384 = vpack.c.b16 %v377, %v376
  %v385 = vpack.c.b16 %v378, %v378
  %vm392 = vcmask 809984
  %v393 = vsel %vm392, %v337, 0
  %v395 = vsel %vm392, %v339, 0
  %vm397 = vcmask 1040384
  %vm398 = vcmask 1041408
  %v399 = vsel %vm397, 4294967295, 65535
  %v400 = vsel %vm398, %v399, 0
  %v402 = vand.u32 %v385, %v400
  %404 = vmatprep.subr.bf16.mxu0 0
  %405 = vmatpush1.bf16.msra.mxu0 0
  %406 = vmatprep.subr.bf16.mxu0 0
  %407 = vmatpush1.bf16.msra.mxu0 %v402
  %408 = vmatprep.subr.bf16.mxu0 0
  %409 = vmatpush1.bf16.msra.mxu0 %v384
  %410 = vmatprep.subr.bf16.mxu0 0
  %411 = vmatpush1.bf16.msra.mxu0 %v383
  %412 = vmatprep.subr.bf16.mxu0 0
  %413 = vmatpush1.bf16.msra.mxu0 %v382
  %414 = vmatprep.subr.bf16.mxu0 0
  %415 = vmatpush1.bf16.msra.mxu0 %v381
  %416 = vmatprep.subr.bf16.mxu0 0
  %417 = vmatpush1.bf16.msra.mxu0 %v380
  %418 = vmatprep.subr.bf16.mxu0 0
  %419 = vmatpush1.bf16.msra.mxu0 %v379
  %420 = vmatprep.subr.bf16.mxu0 0
  %421 = vmatpush2.bf16.msra.mxu0 0
  %422 = vmatprep.subr.bf16.mxu0 0
  %423 = vmatpush2.bf16.msra.mxu0 0
  %424 = vmatprep.subr.bf16.mxu0 0
  %425 = vmatpush2.bf16.msra.mxu0 0
  %426 = vmatprep.subr.bf16.mxu0 0
  %427 = vmatpush2.bf16.msra.mxu0 0
  %428 = vmatprep.subr.bf16.mxu0 0
  %429 = vmatpush2.bf16.msra.mxu0 0
  %430 = vmatprep.subr.bf16.mxu0 0
  %431 = vmatpush2.bf16.msra.mxu0 0
  %432 = vmatprep.subr.bf16.mxu0 0
  %433 = vmatpush2.bf16.msra.mxu0 0
  %434 = vmatprep.subr.bf16.mxu0 0
  %435 = vmatpush2.bf16.msra.mxu0 0
  %436 = vmatprep.mubr.bf16.mxu0 0
  %437 = vmatmul.mubr.bf16.gmra.mxu0 %v393
  %v438 = vpop.f32.mrf.mxu0
  %v439 = vadd.f32 0.0, %v438
  %v440 = vpop.f32.mrf.mxu0
  %v441 = vpop.f32.mrf.mxu0
  %v442 = vadd.f32 0.0, %v441
  %v443 = vpop.f32.mrf.mxu0
  %444 = vmatprep.mubr.bf16.mxu0 0
  %445 = vmatmul.mubr.bf16.gmra.mxu0 %v395
  %v446 = vpop.f32.mrf.mxu0
  %v447 = vadd.f32 0.0, %v446
  %v448 = vpop.f32.mrf.mxu0
  %v449 = vpop.f32.mrf.mxu0
  %v450 = vadd.f32 0.0, %v449
  %v451 = vpop.f32.mrf.mxu0
  %452 = vdwg.mxu0
  %v453 = vmax.f32 %v439, 0.0
  %v454 = vmax.f32 %v442, 0.0
  %v455 = vmax.f32 %v447, 0.0
  %v456 = vmax.f32 %v450, 0.0
  %v457 = vpack.c.bf16 %v454, %v453
  %v458 = vpack.c.bf16 %v456, %v455
  %v460 = vshrl.u32 %v457, 16
  %v462 = vrot.slane %v460, 7
  %v463 = vshll.u32 %v457, 16
  %v465 = vor.u32 %v462, %v463
  %v467 = vshrl.u32 %v458, 16
  %v469 = vrot.slane %v467, 7
  %v470 = vshll.u32 %v458, 16
  %v472 = vor.u32 %v469, %v470
  %v473 = vsel %vm221, %v462, %v472
  %v476 = vsel %vm240, 0, %v465
  %v477 = vsel %vm264, 0, %v476
  %v478 = vsel %vm265, 0, %v473
  %v479 = vrot.slane %v463, 1
  %v480 = vor.u32 %v460, %v479
  %v481 = vrot.slane %v470, 1
  %v482 = vsel %vm268, %v480, %v481
  %v483 = vor.u32 %v467, %v481
  %v486 = vsel %vm277, %v483, 0
  %v487 = vsel %vm301, 0, %v482
  %v488 = vsel %vm302, 0, %v486
  %491 = vrot.lane.b32.xlu0 %v457, 32
  %v492 = vpop.permute.xlu0 %491
  %493 = vrot.lane.b32.xlu0 %v458, 32
  %v494 = vpop.permute.xlu0 %493
  %497 = vrot.lane.b32.xlu0 %v487, 64
  %v498 = vpop.permute.xlu0 %497
  %499 = vrot.lane.b32.xlu0 %v488, 64
  %v500 = vpop.permute.xlu0 %499
  %v503 = vsel %vm323, %v477, %v492
  %v506 = vsel %vm323, %v478, %v494
  %v508 = vsel %vm330, %v503, %v498
  %v510 = vsel %vm330, %v506, %v500
  %v511 = vld [vmem:[%s3] sm:$0xf]
  %v512 = vld [vmem:[%s3 + $0x4] sm:$0xf]
  %v513 = vld [vmem:[%s3 + $0x8] sm:$0xf]
  %v514 = vld [vmem:[%s3 + $0xc] sm:$0xf]
  %v515 = vld [vmem:[%s3 + $0x10] sm:$0xf]
  %v516 = vld [vmem:[%s3 + $0x14] sm:$0xf]
  %v517 = vld [vmem:[%s3 + $0x18] sm:$0xf]
  %v518 = vld [vmem:[%s3 + $0x1c] sm:$0xf]
  %v519 = vld [vmem:[%s3 + $0x20] sm:$0xf]
  %v520 = vld [vmem:[%s3 + $0x24] sm:$0xf]
  %v521 = vld [vmem:[%s3 + $0x28] sm:$0xf]
  %v522 = vld [vmem:[%s3 + $0x2c] sm:$0xf]
  %v535 = vunpack.c.l.b16 %v511
  %v536 = vunpack.c.l.b16 %v512
  %v537 = vunpack.c.l.b16 %v513
  %v538 = vunpack.c.l.b16 %v514
  %v539 = vunpack.c.l.b16 %v515
  %v540 = vunpack.c.l.b16 %v516
  %v541 = vunpack.c.l.b16 %v517
  %v542 = vunpack.c.l.b16 %v518
  %v543 = vunpack.c.l.b16 %v519
  %v544 = vunpack.c.l.b16 %v520
  %v545 = vunpack.c.l.b16 %v521
  %v546 = vunpack.c.l.b16 %v522
  %v547 = vpack.c.b16 %v536, %v535
  %v548 = vpack.c.b16 %v538, %v537
  %v549 = vpack.c.b16 %v540, %v539
  %v550 = vpack.c.b16 %v542, %v541
  %v551 = vpack.c.b16 %v544, %v543
  %v552 = vpack.c.b16 %v546, %v545
  %v559 = vsel %vm335, %v508, 0
  %v561 = vsel %vm335, %v510, 0
  %563 = vmatprep.subr.bf16.mxu0 0
  %564 = vmatpush1.bf16.msra.mxu0 0
  %565 = vmatprep.subr.bf16.mxu0 0
  %566 = vmatpush1.bf16.msra.mxu0 0
  %567 = vmatprep.subr.bf16.mxu0 0
  %568 = vmatpush1.bf16.msra.mxu0 %v552
  %569 = vmatprep.subr.bf16.mxu0 0
  %570 = vmatpush1.bf16.msra.mxu0 %v551
  %571 = vmatprep.subr.bf16.mxu0 0
  %572 = vmatpush1.bf16.msra.mxu0 %v550
  %573 = vmatprep.subr.bf16.mxu0 0
  %574 = vmatpush1.bf16.msra.mxu0 %v549
  %575 = vmatprep.subr.bf16.mxu0 0
  %576 = vmatpush1.bf16.msra.mxu0 %v548
  %577 = vmatprep.subr.bf16.mxu0 0
  %578 = vmatpush1.bf16.msra.mxu0 %v547
  %579 = vmatprep.subr.bf16.mxu0 0
  %580 = vmatpush2.bf16.msra.mxu0 0
  %581 = vmatprep.subr.bf16.mxu0 0
  %582 = vmatpush2.bf16.msra.mxu0 0
  %583 = vmatprep.subr.bf16.mxu0 0
  %584 = vmatpush2.bf16.msra.mxu0 0
  %585 = vmatprep.subr.bf16.mxu0 0
  %586 = vmatpush2.bf16.msra.mxu0 0
  %587 = vmatprep.subr.bf16.mxu0 0
  %588 = vmatpush2.bf16.msra.mxu0 0
  %589 = vmatprep.subr.bf16.mxu0 0
  %590 = vmatpush2.bf16.msra.mxu0 0
  %591 = vmatprep.subr.bf16.mxu0 0
  %592 = vmatpush2.bf16.msra.mxu0 0
  %593 = vmatprep.subr.bf16.mxu0 0
  %594 = vmatpush2.bf16.msra.mxu0 0
  %595 = vmatprep.mubr.bf16.mxu0 0
  %596 = vmatmul.mubr.bf16.gmra.mxu0 %v559
  %v597 = vpop.f32.mrf.mxu0
  %v598 = vadd.f32 0.0, %v597
  %v599 = vpop.f32.mrf.mxu0
  %v600 = vpop.f32.mrf.mxu0
  %v601 = vadd.f32 0.0, %v600
  %v602 = vpop.f32.mrf.mxu0
  %603 = vmatprep.mubr.bf16.mxu0 0
  %604 = vmatmul.mubr.bf16.gmra.mxu0 %v561
  %v605 = vpop.f32.mrf.mxu0
  %v606 = vadd.f32 0.0, %v605
  %v607 = vpop.f32.mrf.mxu0
  %v608 = vpop.f32.mrf.mxu0
  %v609 = vadd.f32 0.0, %v608
  %v610 = vpop.f32.mrf.mxu0
  %611 = vdwg.mxu0
  %v612 = vmax.f32 %v598, 0.0
  %v613 = vmax.f32 %v601, 0.0
  %v614 = vmax.f32 %v606, 0.0
  %v615 = vmax.f32 %v609, 0.0
  %v616 = vpack.c.bf16 %v613, %v612
  %v617 = vpack.c.bf16 %v615, %v614
  %v619 = vshrl.u32 %v616, 16
  %v621 = vrot.slane %v619, 7
  %v622 = vshll.u32 %v616, 16
  %v624 = vor.u32 %v621, %v622
  %v626 = vshrl.u32 %v617, 16
  %v628 = vrot.slane %v626, 7
  %v629 = vshll.u32 %v617, 16
  %v631 = vor.u32 %v628, %v629
  %v632 = vsel %vm221, %v621, %v631
  %v635 = vsel %vm240, 0, %v624
  %v636 = vsel %vm264, 0, %v635
  %v637 = vsel %vm265, 0, %v632
  %v638 = vrot.slane %v622, 1
  %v639 = vor.u32 %v619, %v638
  %v640 = vrot.slane %v629, 1
  %v641 = vsel %vm268, %v639, %v640
  %v642 = vor.u32 %v626, %v640
  %v645 = vsel %vm277, %v642, 0
  %v646 = vsel %vm301, 0, %v641
  %v647 = vsel %vm302, 0, %v645
  %650 = vrot.lane.b32.xlu0 %v616, 32
  %v651 = vpop.permute.xlu0 %650
  %652 = vrot.lane.b32.xlu0 %v617, 32
  %v653 = vpop.permute.xlu0 %652
  %656 = vrot.lane.b32.xlu0 %v646, 64
  %v657 = vpop.permute.xlu0 %656
  %658 = vrot.lane.b32.xlu0 %v647, 64
  %v659 = vpop.permute.xlu0 %658
  %v662 = vsel %vm323, %v636, %v651
  %v665 = vsel %vm323, %v637, %v653
  %v667 = vsel %vm330, %v662, %v657
  %v669 = vsel %vm330, %v665, %v659
  %v670 = vld [vmem:[%s4] sm:$0xf]
  %v671 = vld [vmem:[%s4 + $0x4] sm:$0xf]
  %v672 = vld [vmem:[%s4 + $0x8] sm:$0xf]
  %v673 = vld [vmem:[%s4 + $0xc] sm:$0xf]
  %v674 = vld [vmem:[%s4 + $0x10] sm:$0xf]
  %v675 = vld [vmem:[%s4 + $0x14] sm:$0xf]
  %v676 = vld [vmem:[%s4 + $0x18] sm:$0xf]
  %v677 = vld [vmem:[%s4 + $0x1c] sm:$0xf]
  %v678 = vld [vmem:[%s4 + $0x20] sm:$0xf]
  %v679 = vld [vmem:[%s4 + $0x24] sm:$0xf]
  %v680 = vld [vmem:[%s4 + $0x28] sm:$0xf]
  %v681 = vld [vmem:[%s4 + $0x2c] sm:$0xf]
  %v694 = vunpack.c.l.b16 %v670
  %v695 = vunpack.c.l.b16 %v671
  %v696 = vunpack.c.l.b16 %v672
  %v697 = vunpack.c.l.b16 %v673
  %v698 = vunpack.c.l.b16 %v674
  %v699 = vunpack.c.l.b16 %v675
  %v700 = vunpack.c.l.b16 %v676
  %v701 = vunpack.c.l.b16 %v677
  %v702 = vunpack.c.l.b16 %v678
  %v703 = vunpack.c.l.b16 %v679
  %v704 = vunpack.c.l.b16 %v680
  %v705 = vunpack.c.l.b16 %v681
  %v706 = vpack.c.b16 %v695, %v694
  %v707 = vpack.c.b16 %v697, %v696
  %v708 = vpack.c.b16 %v699, %v698
  %v709 = vpack.c.b16 %v701, %v700
  %v710 = vpack.c.b16 %v703, %v702
  %v711 = vpack.c.b16 %v705, %v704
  %v718 = vsel %vm335, %v667, 0
  %v720 = vsel %vm335, %v669, 0
  %722 = vmatprep.subr.bf16.mxu0 0
  %723 = vmatpush1.bf16.msra.mxu0 0
  %724 = vmatprep.subr.bf16.mxu0 0
  %725 = vmatpush1.bf16.msra.mxu0 0
  %726 = vmatprep.subr.bf16.mxu0 0
  %727 = vmatpush1.bf16.msra.mxu0 %v711
  %728 = vmatprep.subr.bf16.mxu0 0
  %729 = vmatpush1.bf16.msra.mxu0 %v710
  %730 = vmatprep.subr.bf16.mxu0 0
  %731 = vmatpush1.bf16.msra.mxu0 %v709
  %732 = vmatprep.subr.bf16.mxu0 0
  %733 = vmatpush1.bf16.msra.mxu0 %v708
  %734 = vmatprep.subr.bf16.mxu0 0
  %735 = vmatpush1.bf16.msra.mxu0 %v707
  %736 = vmatprep.subr.bf16.mxu0 0
  %737 = vmatpush1.bf16.msra.mxu0 %v706
  %738 = vmatprep.subr.bf16.mxu0 0
  %739 = vmatpush2.bf16.msra.mxu0 0
  %740 = vmatprep.subr.bf16.mxu0 0
  %741 = vmatpush2.bf16.msra.mxu0 0
  %742 = vmatprep.subr.bf16.mxu0 0
  %743 = vmatpush2.bf16.msra.mxu0 0
  %744 = vmatprep.subr.bf16.mxu0 0
  %745 = vmatpush2.bf16.msra.mxu0 0
  %746 = vmatprep.subr.bf16.mxu0 0
  %747 = vmatpush2.bf16.msra.mxu0 0
  %748 = vmatprep.subr.bf16.mxu0 0
  %749 = vmatpush2.bf16.msra.mxu0 0
  %750 = vmatprep.subr.bf16.mxu0 0
  %751 = vmatpush2.bf16.msra.mxu0 0
  %752 = vmatprep.subr.bf16.mxu0 0
  %753 = vmatpush2.bf16.msra.mxu0 0
  %754 = vmatprep.mubr.bf16.mxu0 0
  %755 = vmatmul.mubr.bf16.gmra.mxu0 %v718
  %v756 = vpop.f32.mrf.mxu0
  %v757 = vadd.f32 %v453, %v756
  %v758 = vpop.f32.mrf.mxu0
  %v759 = vpop.f32.mrf.mxu0
  %v760 = vadd.f32 %v454, %v759
  %v761 = vpop.f32.mrf.mxu0
  %762 = vmatprep.mubr.bf16.mxu0 0
  %763 = vmatmul.mubr.bf16.gmra.mxu0 %v720
  %v764 = vpop.f32.mrf.mxu0
  %v765 = vadd.f32 %v455, %v764
  %v766 = vpop.f32.mrf.mxu0
  %v767 = vpop.f32.mrf.mxu0
  %v768 = vadd.f32 %v456, %v767
  %v769 = vpop.f32.mrf.mxu0
  %770 = vdwg.mxu0
  %v771 = vmax.f32 %v757, 0.0
  %v772 = vmax.f32 %v760, 0.0
  %v773 = vmax.f32 %v765, 0.0
  %v774 = vmax.f32 %v768, 0.0
  %v775 = vpack.c.bf16 %v772, %v771
  %v776 = vpack.c.bf16 %v774, %v773
  %v778 = vshrl.u32 %v775, 16
  %v780 = vrot.slane %v778, 7
  %v781 = vshll.u32 %v775, 16
  %v783 = vor.u32 %v780, %v781
  %v785 = vshrl.u32 %v776, 16
  %v787 = vrot.slane %v785, 7
  %v788 = vshll.u32 %v776, 16
  %v790 = vor.u32 %v787, %v788
  %v791 = vsel %vm221, %v780, %v790
  %v794 = vsel %vm240, 0, %v783
  %v795 = vsel %vm264, 0, %v794
  %v796 = vsel %vm265, 0, %v791
  %v797 = vrot.slane %v781, 1
  %v798 = vor.u32 %v778, %v797
  %v799 = vrot.slane %v788, 1
  %v800 = vsel %vm268, %v798, %v799
  %v801 = vor.u32 %v785, %v799
  %v804 = vsel %vm277, %v801, 0
  %v805 = vsel %vm301, 0, %v800
  %v806 = vsel %vm302, 0, %v804
  %809 = vrot.lane.b32.xlu0 %v775, 32
  %v810 = vpop.permute.xlu0 %809
  %811 = vrot.lane.b32.xlu0 %v776, 32
  %v812 = vpop.permute.xlu0 %811
  %815 = vrot.lane.b32.xlu0 %v805, 64
  %v816 = vpop.permute.xlu0 %815
  %817 = vrot.lane.b32.xlu0 %v806, 64
  %v818 = vpop.permute.xlu0 %817
  %v821 = vsel %vm323, %v795, %v810
  %v824 = vsel %vm323, %v796, %v812
  %v826 = vsel %vm330, %v821, %v816
  %v828 = vsel %vm330, %v824, %v818
  %s829 = scalar_lea.vmem %s3, 48
  %v830 = vld [vmem:[%s829] sm:$0xf]
  %v831 = vld [vmem:[%s829 + $0x4] sm:$0xf]
  %v832 = vld [vmem:[%s829 + $0x8] sm:$0xf]
  %v833 = vld [vmem:[%s829 + $0xc] sm:$0xf]
  %v834 = vld [vmem:[%s829 + $0x10] sm:$0xf]
  %v835 = vld [vmem:[%s829 + $0x14] sm:$0xf]
  %v836 = vld [vmem:[%s829 + $0x18] sm:$0xf]
  %v837 = vld [vmem:[%s829 + $0x1c] sm:$0xf]
  %v838 = vld [vmem:[%s829 + $0x20] sm:$0xf]
  %v839 = vld [vmem:[%s829 + $0x24] sm:$0xf]
  %v840 = vld [vmem:[%s829 + $0x28] sm:$0xf]
  %v841 = vld [vmem:[%s829 + $0x2c] sm:$0xf]
  %v854 = vunpack.c.l.b16 %v830
  %v855 = vunpack.c.l.b16 %v831
  %v856 = vunpack.c.l.b16 %v832
  %v857 = vunpack.c.l.b16 %v833
  %v858 = vunpack.c.l.b16 %v834
  %v859 = vunpack.c.l.b16 %v835
  %v860 = vunpack.c.l.b16 %v836
  %v861 = vunpack.c.l.b16 %v837
  %v862 = vunpack.c.l.b16 %v838
  %v863 = vunpack.c.l.b16 %v839
  %v864 = vunpack.c.l.b16 %v840
  %v865 = vunpack.c.l.b16 %v841
  %v866 = vpack.c.b16 %v855, %v854
  %v867 = vpack.c.b16 %v857, %v856
  %v868 = vpack.c.b16 %v859, %v858
  %v869 = vpack.c.b16 %v861, %v860
  %v870 = vpack.c.b16 %v863, %v862
  %v871 = vpack.c.b16 %v865, %v864
  %v878 = vsel %vm335, %v826, 0
  %v880 = vsel %vm335, %v828, 0
  %882 = vmatprep.subr.bf16.mxu0 0
  %883 = vmatpush1.bf16.msra.mxu0 0
  %884 = vmatprep.subr.bf16.mxu0 0
  %885 = vmatpush1.bf16.msra.mxu0 0
  %886 = vmatprep.subr.bf16.mxu0 0
  %887 = vmatpush1.bf16.msra.mxu0 %v871
  %888 = vmatprep.subr.bf16.mxu0 0
  %889 = vmatpush1.bf16.msra.mxu0 %v870
  %890 = vmatprep.subr.bf16.mxu0 0
  %891 = vmatpush1.bf16.msra.mxu0 %v869
  %892 = vmatprep.subr.bf16.mxu0 0
  %893 = vmatpush1.bf16.msra.mxu0 %v868
  %894 = vmatprep.subr.bf16.mxu0 0
  %895 = vmatpush1.bf16.msra.mxu0 %v867
  %896 = vmatprep.subr.bf16.mxu0 0
  %897 = vmatpush1.bf16.msra.mxu0 %v866
  %898 = vmatprep.subr.bf16.mxu0 0
  %899 = vmatpush2.bf16.msra.mxu0 0
  %900 = vmatprep.subr.bf16.mxu0 0
  %901 = vmatpush2.bf16.msra.mxu0 0
  %902 = vmatprep.subr.bf16.mxu0 0
  %903 = vmatpush2.bf16.msra.mxu0 0
  %904 = vmatprep.subr.bf16.mxu0 0
  %905 = vmatpush2.bf16.msra.mxu0 0
  %906 = vmatprep.subr.bf16.mxu0 0
  %907 = vmatpush2.bf16.msra.mxu0 0
  %908 = vmatprep.subr.bf16.mxu0 0
  %909 = vmatpush2.bf16.msra.mxu0 0
  %910 = vmatprep.subr.bf16.mxu0 0
  %911 = vmatpush2.bf16.msra.mxu0 0
  %912 = vmatprep.subr.bf16.mxu0 0
  %913 = vmatpush2.bf16.msra.mxu0 0
  %914 = vmatprep.mubr.bf16.mxu0 0
  %915 = vmatmul.mubr.bf16.gmra.mxu0 %v878
  %v916 = vpop.f32.mrf.mxu0
  %v917 = vadd.f32 0.0, %v916
  %v918 = vpop.f32.mrf.mxu0
  %v919 = vpop.f32.mrf.mxu0
  %v920 = vadd.f32 0.0, %v919
  %v921 = vpop.f32.mrf.mxu0
  %922 = vmatprep.mubr.bf16.mxu0 0
  %923 = vmatmul.mubr.bf16.gmra.mxu0 %v880
  %v924 = vpop.f32.mrf.mxu0
  %v925 = vadd.f32 0.0, %v924
  %v926 = vpop.f32.mrf.mxu0
  %v927 = vpop.f32.mrf.mxu0
  %v928 = vadd.f32 0.0, %v927
  %v929 = vpop.f32.mrf.mxu0
  %930 = vdwg.mxu0
  %v931 = vmax.f32 %v917, 0.0
  %v932 = vmax.f32 %v920, 0.0
  %v933 = vmax.f32 %v925, 0.0
  %v934 = vmax.f32 %v928, 0.0
  %v935 = vpack.c.bf16 %v932, %v931
  %v936 = vpack.c.bf16 %v934, %v933
  %v938 = vshrl.u32 %v935, 16
  %v940 = vrot.slane %v938, 7
  %v941 = vshll.u32 %v935, 16
  %v943 = vor.u32 %v940, %v941
  %v945 = vshrl.u32 %v936, 16
  %v947 = vrot.slane %v945, 7
  %v948 = vshll.u32 %v936, 16
  %v950 = vor.u32 %v947, %v948
  %v951 = vsel %vm221, %v940, %v950
  %v954 = vsel %vm240, 0, %v943
  %v955 = vsel %vm264, 0, %v954
  %v956 = vsel %vm265, 0, %v951
  %v957 = vrot.slane %v941, 1
  %v958 = vor.u32 %v938, %v957
  %v959 = vrot.slane %v948, 1
  %v960 = vsel %vm268, %v958, %v959
  %v961 = vor.u32 %v945, %v959
  %v964 = vsel %vm277, %v961, 0
  %v965 = vsel %vm301, 0, %v960
  %v966 = vsel %vm302, 0, %v964
  %969 = vrot.lane.b32.xlu0 %v935, 32
  %v970 = vpop.permute.xlu0 %969
  %971 = vrot.lane.b32.xlu0 %v936, 32
  %v972 = vpop.permute.xlu0 %971
  %975 = vrot.lane.b32.xlu0 %v965, 64
  %v976 = vpop.permute.xlu0 %975
  %977 = vrot.lane.b32.xlu0 %v966, 64
  %v978 = vpop.permute.xlu0 %977
  %v981 = vsel %vm323, %v955, %v970
  %v984 = vsel %vm323, %v956, %v972
  %v986 = vsel %vm330, %v981, %v976
  %v988 = vsel %vm330, %v984, %v978
  %s989 = scalar_lea.vmem %s4, 48
  %v990 = vld [vmem:[%s989] sm:$0xf]
  %v991 = vld [vmem:[%s989 + $0x4] sm:$0xf]
  %v992 = vld [vmem:[%s989 + $0x8] sm:$0xf]
  %v993 = vld [vmem:[%s989 + $0xc] sm:$0xf]
  %v994 = vld [vmem:[%s989 + $0x10] sm:$0xf]
  %v995 = vld [vmem:[%s989 + $0x14] sm:$0xf]
  %v996 = vld [vmem:[%s989 + $0x18] sm:$0xf]
  %v997 = vld [vmem:[%s989 + $0x1c] sm:$0xf]
  %v998 = vld [vmem:[%s989 + $0x20] sm:$0xf]
  %v999 = vld [vmem:[%s989 + $0x24] sm:$0xf]
  %v1000 = vld [vmem:[%s989 + $0x28] sm:$0xf]
  %v1001 = vld [vmem:[%s989 + $0x2c] sm:$0xf]
  %v1014 = vunpack.c.l.b16 %v990
  %v1015 = vunpack.c.l.b16 %v991
  %v1016 = vunpack.c.l.b16 %v992
  %v1017 = vunpack.c.l.b16 %v993
  %v1018 = vunpack.c.l.b16 %v994
  %v1019 = vunpack.c.l.b16 %v995
  %v1020 = vunpack.c.l.b16 %v996
  %v1021 = vunpack.c.l.b16 %v997
  %v1022 = vunpack.c.l.b16 %v998
  %v1023 = vunpack.c.l.b16 %v999
  %v1024 = vunpack.c.l.b16 %v1000
  %v1025 = vunpack.c.l.b16 %v1001
  %v1026 = vpack.c.b16 %v1015, %v1014
  %v1027 = vpack.c.b16 %v1017, %v1016
  %v1028 = vpack.c.b16 %v1019, %v1018
  %v1029 = vpack.c.b16 %v1021, %v1020
  %v1030 = vpack.c.b16 %v1023, %v1022
  %v1031 = vpack.c.b16 %v1025, %v1024
  %v1038 = vsel %vm335, %v986, 0
  %v1040 = vsel %vm335, %v988, 0
  %1042 = vmatprep.subr.bf16.mxu0 0
  %1043 = vmatpush1.bf16.msra.mxu0 0
  %1044 = vmatprep.subr.bf16.mxu0 0
  %1045 = vmatpush1.bf16.msra.mxu0 0
  %1046 = vmatprep.subr.bf16.mxu0 0
  %1047 = vmatpush1.bf16.msra.mxu0 %v1031
  %1048 = vmatprep.subr.bf16.mxu0 0
  %1049 = vmatpush1.bf16.msra.mxu0 %v1030
  %1050 = vmatprep.subr.bf16.mxu0 0
  %1051 = vmatpush1.bf16.msra.mxu0 %v1029
  %1052 = vmatprep.subr.bf16.mxu0 0
  %1053 = vmatpush1.bf16.msra.mxu0 %v1028
  %1054 = vmatprep.subr.bf16.mxu0 0
  %1055 = vmatpush1.bf16.msra.mxu0 %v1027
  %1056 = vmatprep.subr.bf16.mxu0 0
  %1057 = vmatpush1.bf16.msra.mxu0 %v1026
  %1058 = vmatprep.subr.bf16.mxu0 0
  %1059 = vmatpush2.bf16.msra.mxu0 0
  %1060 = vmatprep.subr.bf16.mxu0 0
  %1061 = vmatpush2.bf16.msra.mxu0 0
  %1062 = vmatprep.subr.bf16.mxu0 0
  %1063 = vmatpush2.bf16.msra.mxu0 0
  %1064 = vmatprep.subr.bf16.mxu0 0
  %1065 = vmatpush2.bf16.msra.mxu0 0
  %1066 = vmatprep.subr.bf16.mxu0 0
  %1067 = vmatpush2.bf16.msra.mxu0 0
  %1068 = vmatprep.subr.bf16.mxu0 0
  %1069 = vmatpush2.bf16.msra.mxu0 0
  %1070 = vmatprep.subr.bf16.mxu0 0
  %1071 = vmatpush2.bf16.msra.mxu0 0
  %1072 = vmatprep.subr.bf16.mxu0 0
  %1073 = vmatpush2.bf16.msra.mxu0 0
  %1074 = vmatprep.mubr.bf16.mxu0 0
  %1075 = vmatmul.mubr.bf16.gmra.mxu0 %v1038
  %v1076 = vpop.f32.mrf.mxu0
  %v1077 = vadd.f32 %v771, %v1076
  %v1078 = vpop.f32.mrf.mxu0
  %v1079 = vpop.f32.mrf.mxu0
  %v1080 = vadd.f32 %v772, %v1079
  %v1081 = vpop.f32.mrf.mxu0
  %1082 = vmatprep.mubr.bf16.mxu0 0
  %1083 = vmatmul.mubr.bf16.gmra.mxu0 %v1040
  %v1084 = vpop.f32.mrf.mxu0
  %v1085 = vadd.f32 %v773, %v1084
  %v1086 = vpop.f32.mrf.mxu0
  %v1087 = vpop.f32.mrf.mxu0
  %v1088 = vadd.f32 %v774, %v1087
  %v1089 = vpop.f32.mrf.mxu0
  %1090 = vdwg.mxu0
  %v1091 = vmax.f32 %v1077, 0.0
  %v1092 = vmax.f32 %v1080, 0.0
  %v1093 = vmax.f32 %v1085, 0.0
  %v1094 = vmax.f32 %v1088, 0.0
  %v1095 = vpack.c.bf16 %v1092, %v1091
  %v1096 = vpack.c.bf16 %v1094, %v1093
  %v1098 = vshrl.u32 %v1095, 16
  %v1100 = vrot.slane %v1098, 7
  %v1101 = vshll.u32 %v1095, 16
  %v1103 = vor.u32 %v1100, %v1101
  %v1105 = vshrl.u32 %v1096, 16
  %v1107 = vrot.slane %v1105, 7
  %v1108 = vshll.u32 %v1096, 16
  %v1110 = vor.u32 %v1107, %v1108
  %v1111 = vsel %vm221, %v1100, %v1110
  %v1114 = vsel %vm240, 0, %v1103
  %v1115 = vsel %vm264, 0, %v1114
  %v1116 = vsel %vm265, 0, %v1111
  %v1117 = vrot.slane %v1101, 1
  %v1118 = vor.u32 %v1098, %v1117
  %v1119 = vrot.slane %v1108, 1
  %v1120 = vsel %vm268, %v1118, %v1119
  %v1121 = vor.u32 %v1105, %v1119
  %v1124 = vsel %vm277, %v1121, 0
  %v1125 = vsel %vm301, 0, %v1120
  %v1126 = vsel %vm302, 0, %v1124
  %1129 = vrot.lane.b32.xlu0 %v1095, 32
  %v1130 = vpop.permute.xlu0 %1129
  %1131 = vrot.lane.b32.xlu0 %v1096, 32
  %v1132 = vpop.permute.xlu0 %1131
  %1135 = vrot.lane.b32.xlu0 %v1125, 64
  %v1136 = vpop.permute.xlu0 %1135
  %1137 = vrot.lane.b32.xlu0 %v1126, 64
  %v1138 = vpop.permute.xlu0 %1137
  %v1141 = vsel %vm323, %v1115, %v1130
  %v1144 = vsel %vm323, %v1116, %v1132
  %v1146 = vsel %vm330, %v1141, %v1136
  %v1148 = vsel %vm330, %v1144, %v1138
  %v1149 = vld [vmem:[%s5] sm:$0xf]
  %v1150 = vld [vmem:[%s5 + $0x4] sm:$0xf]
  %v1151 = vld [vmem:[%s5 + $0x8] sm:$0xf]
  %v1152 = vld [vmem:[%s5 + $0xc] sm:$0xf]
  %v1153 = vld [vmem:[%s5 + $0x10] sm:$0xf]
  %v1154 = vld [vmem:[%s5 + $0x14] sm:$0xf]
  %v1155 = vld [vmem:[%s5 + $0x18] sm:$0xf]
  %v1156 = vld [vmem:[%s5 + $0x1c] sm:$0xf]
  %v1157 = vld [vmem:[%s5 + $0x20] sm:$0xf]
  %v1158 = vld [vmem:[%s5 + $0x24] sm:$0xf]
  %v1159 = vld [vmem:[%s5 + $0x28] sm:$0xf]
  %v1160 = vld [vmem:[%s5 + $0x2c] sm:$0xf]
  %v1173 = vunpack.c.l.b16 %v1149
  %v1174 = vunpack.c.l.b16 %v1150
  %v1175 = vunpack.c.l.b16 %v1151
  %v1176 = vunpack.c.l.b16 %v1152
  %v1177 = vunpack.c.l.b16 %v1153
  %v1178 = vunpack.c.l.b16 %v1154
  %v1179 = vunpack.c.l.b16 %v1155
  %v1180 = vunpack.c.l.b16 %v1156
  %v1181 = vunpack.c.l.b16 %v1157
  %v1182 = vunpack.c.l.b16 %v1158
  %v1183 = vunpack.c.l.b16 %v1159
  %v1184 = vunpack.c.l.b16 %v1160
  %v1185 = vpack.c.b16 %v1174, %v1173
  %v1186 = vpack.c.b16 %v1176, %v1175
  %v1187 = vpack.c.b16 %v1178, %v1177
  %v1188 = vpack.c.b16 %v1180, %v1179
  %v1189 = vpack.c.b16 %v1182, %v1181
  %v1190 = vpack.c.b16 %v1184, %v1183
  %v1197 = vsel %vm335, %v1146, 0
  %v1199 = vsel %vm335, %v1148, 0
  %1201 = vmatprep.subr.bf16.mxu0 0
  %1202 = vmatpush1.bf16.msra.mxu0 0
  %1203 = vmatprep.subr.bf16.mxu0 0
  %1204 = vmatpush1.bf16.msra.mxu0 0
  %1205 = vmatprep.subr.bf16.mxu0 0
  %1206 = vmatpush1.bf16.msra.mxu0 %v1190
  %1207 = vmatprep.subr.bf16.mxu0 0
  %1208 = vmatpush1.bf16.msra.mxu0 %v1189
  %1209 = vmatprep.subr.bf16.mxu0 0
  %1210 = vmatpush1.bf16.msra.mxu0 %v1188
  %1211 = vmatprep.subr.bf16.mxu0 0
  %1212 = vmatpush1.bf16.msra.mxu0 %v1187
  %1213 = vmatprep.subr.bf16.mxu0 0
  %1214 = vmatpush1.bf16.msra.mxu0 %v1186
  %1215 = vmatprep.subr.bf16.mxu0 0
  %1216 = vmatpush1.bf16.msra.mxu0 %v1185
  %1217 = vmatprep.subr.bf16.mxu0 0
  %1218 = vmatpush2.bf16.msra.mxu0 0
  %1219 = vmatprep.subr.bf16.mxu0 0
  %1220 = vmatpush2.bf16.msra.mxu0 0
  %1221 = vmatprep.subr.bf16.mxu0 0
  %1222 = vmatpush2.bf16.msra.mxu0 0
  %1223 = vmatprep.subr.bf16.mxu0 0
  %1224 = vmatpush2.bf16.msra.mxu0 0
  %1225 = vmatprep.subr.bf16.mxu0 0
  %1226 = vmatpush2.bf16.msra.mxu0 0
  %1227 = vmatprep.subr.bf16.mxu0 0
  %1228 = vmatpush2.bf16.msra.mxu0 0
  %1229 = vmatprep.subr.bf16.mxu0 0
  %1230 = vmatpush2.bf16.msra.mxu0 0
  %1231 = vmatprep.subr.bf16.mxu0 0
  %1232 = vmatpush2.bf16.msra.mxu0 0
  %1233 = vmatprep.mubr.bf16.mxu0 0
  %1234 = vmatmul.mubr.bf16.gmra.mxu0 %v1197
  %v1235 = vpop.f32.mrf.mxu0
  %v1236 = vadd.f32 0.0, %v1235
  %v1237 = vpop.f32.mrf.mxu0
  %v1238 = vpop.f32.mrf.mxu0
  %v1239 = vadd.f32 0.0, %v1238
  %v1240 = vpop.f32.mrf.mxu0
  %1241 = vmatprep.mubr.bf16.mxu0 0
  %1242 = vmatmul.mubr.bf16.gmra.mxu0 %v1199
  %v1243 = vpop.f32.mrf.mxu0
  %v1244 = vadd.f32 0.0, %v1243
  %v1245 = vpop.f32.mrf.mxu0
  %v1246 = vpop.f32.mrf.mxu0
  %v1247 = vadd.f32 0.0, %v1246
  %v1248 = vpop.f32.mrf.mxu0
  %1249 = vdwg.mxu0
  %v1250 = vmax.f32 %v1236, 0.0
  %v1251 = vmax.f32 %v1239, 0.0
  %v1252 = vmax.f32 %v1244, 0.0
  %v1253 = vmax.f32 %v1247, 0.0
  %v1254 = vpack.c.bf16 %v1251, %v1250
  %v1255 = vpack.c.bf16 %v1253, %v1252
  %v1257 = vshrl.u32 %v1254, 16
  %v1259 = vrot.slane %v1257, 7
  %v1260 = vshll.u32 %v1254, 16
  %v1262 = vor.u32 %v1259, %v1260
  %v1264 = vshrl.u32 %v1255, 16
  %v1266 = vrot.slane %v1264, 7
  %v1267 = vshll.u32 %v1255, 16
  %v1269 = vor.u32 %v1266, %v1267
  %v1270 = vsel %vm221, %v1259, %v1269
  %v1273 = vsel %vm240, 0, %v1262
  %v1274 = vsel %vm264, 0, %v1273
  %v1275 = vsel %vm265, 0, %v1270
  %v1276 = vrot.slane %v1260, 1
  %v1277 = vor.u32 %v1257, %v1276
  %v1278 = vrot.slane %v1267, 1
  %v1279 = vsel %vm268, %v1277, %v1278
  %v1280 = vor.u32 %v1264, %v1278
  %v1283 = vsel %vm277, %v1280, 0
  %v1284 = vsel %vm301, 0, %v1279
  %v1285 = vsel %vm302, 0, %v1283
  %1288 = vrot.lane.b32.xlu0 %v1254, 32
  %v1289 = vpop.permute.xlu0 %1288
  %1290 = vrot.lane.b32.xlu0 %v1255, 32
  %v1291 = vpop.permute.xlu0 %1290
  %1294 = vrot.lane.b32.xlu0 %v1284, 64
  %v1295 = vpop.permute.xlu0 %1294
  %1296 = vrot.lane.b32.xlu0 %v1285, 64
  %v1297 = vpop.permute.xlu0 %1296
  %v1300 = vsel %vm323, %v1274, %v1289
  %v1303 = vsel %vm323, %v1275, %v1291
  %v1305 = vsel %vm330, %v1300, %v1295
  %v1307 = vsel %vm330, %v1303, %v1297
  %v1308 = vld [vmem:[%s6] sm:$0xf]
  %v1309 = vld [vmem:[%s6 + $0x4] sm:$0xf]
  %v1310 = vld [vmem:[%s6 + $0x8] sm:$0xf]
  %v1311 = vld [vmem:[%s6 + $0xc] sm:$0xf]
  %v1312 = vld [vmem:[%s6 + $0x10] sm:$0xf]
  %v1313 = vld [vmem:[%s6 + $0x14] sm:$0xf]
  %v1314 = vld [vmem:[%s6 + $0x18] sm:$0xf]
  %v1315 = vld [vmem:[%s6 + $0x1c] sm:$0xf]
  %v1316 = vld [vmem:[%s6 + $0x20] sm:$0xf]
  %v1317 = vld [vmem:[%s6 + $0x24] sm:$0xf]
  %v1318 = vld [vmem:[%s6 + $0x28] sm:$0xf]
  %v1319 = vld [vmem:[%s6 + $0x2c] sm:$0xf]
  %v1332 = vunpack.c.l.b16 %v1308
  %v1333 = vunpack.c.l.b16 %v1309
  %v1334 = vunpack.c.l.b16 %v1310
  %v1335 = vunpack.c.l.b16 %v1311
  %v1336 = vunpack.c.l.b16 %v1312
  %v1337 = vunpack.c.l.b16 %v1313
  %v1338 = vunpack.c.l.b16 %v1314
  %v1339 = vunpack.c.l.b16 %v1315
  %v1340 = vunpack.c.l.b16 %v1316
  %v1341 = vunpack.c.l.b16 %v1317
  %v1342 = vunpack.c.l.b16 %v1318
  %v1343 = vunpack.c.l.b16 %v1319
  %v1344 = vpack.c.b16 %v1333, %v1332
  %v1345 = vpack.c.b16 %v1335, %v1334
  %v1346 = vpack.c.b16 %v1337, %v1336
  %v1347 = vpack.c.b16 %v1339, %v1338
  %v1348 = vpack.c.b16 %v1341, %v1340
  %v1349 = vpack.c.b16 %v1343, %v1342
  %v1356 = vsel %vm335, %v1305, 0
  %v1358 = vsel %vm335, %v1307, 0
  %1360 = vmatprep.subr.bf16.mxu0 0
  %1361 = vmatpush1.bf16.msra.mxu0 0
  %1362 = vmatprep.subr.bf16.mxu0 0
  %1363 = vmatpush1.bf16.msra.mxu0 0
  %1364 = vmatprep.subr.bf16.mxu0 0
  %1365 = vmatpush1.bf16.msra.mxu0 %v1349
  %1366 = vmatprep.subr.bf16.mxu0 0
  %1367 = vmatpush1.bf16.msra.mxu0 %v1348
  %1368 = vmatprep.subr.bf16.mxu0 0
  %1369 = vmatpush1.bf16.msra.mxu0 %v1347
  %1370 = vmatprep.subr.bf16.mxu0 0
  %1371 = vmatpush1.bf16.msra.mxu0 %v1346
  %1372 = vmatprep.subr.bf16.mxu0 0
  %1373 = vmatpush1.bf16.msra.mxu0 %v1345
  %1374 = vmatprep.subr.bf16.mxu0 0
  %1375 = vmatpush1.bf16.msra.mxu0 %v1344
  %1376 = vmatprep.subr.bf16.mxu0 0
  %1377 = vmatpush2.bf16.msra.mxu0 0
  %1378 = vmatprep.subr.bf16.mxu0 0
  %1379 = vmatpush2.bf16.msra.mxu0 0
  %1380 = vmatprep.subr.bf16.mxu0 0
  %1381 = vmatpush2.bf16.msra.mxu0 0
  %1382 = vmatprep.subr.bf16.mxu0 0
  %1383 = vmatpush2.bf16.msra.mxu0 0
  %1384 = vmatprep.subr.bf16.mxu0 0
  %1385 = vmatpush2.bf16.msra.mxu0 0
  %1386 = vmatprep.subr.bf16.mxu0 0
  %1387 = vmatpush2.bf16.msra.mxu0 0
  %1388 = vmatprep.subr.bf16.mxu0 0
  %1389 = vmatpush2.bf16.msra.mxu0 0
  %1390 = vmatprep.subr.bf16.mxu0 0
  %1391 = vmatpush2.bf16.msra.mxu0 0
  %1392 = vmatprep.mubr.bf16.mxu0 0
  %1393 = vmatmul.mubr.bf16.gmra.mxu0 %v1356
  %v1394 = vpop.f32.mrf.mxu0
  %v1395 = vadd.f32 0.0, %v1394
  %v1396 = vpop.f32.mrf.mxu0
  %v1397 = vpop.f32.mrf.mxu0
  %v1398 = vadd.f32 0.0, %v1397
  %v1399 = vpop.f32.mrf.mxu0
  %1400 = vmatprep.mubr.bf16.mxu0 0
  %1401 = vmatmul.mubr.bf16.gmra.mxu0 %v1358
  %v1402 = vpop.f32.mrf.mxu0
  %v1403 = vadd.f32 0.0, %v1402
  %v1404 = vpop.f32.mrf.mxu0
  %v1405 = vpop.f32.mrf.mxu0
  %v1406 = vadd.f32 0.0, %v1405
  %v1407 = vpop.f32.mrf.mxu0
  %1408 = vdwg.mxu0
  %v1409 = vmax.f32 %v1395, 0.0
  %v1410 = vmax.f32 %v1398, 0.0
  %v1411 = vmax.f32 %v1403, 0.0
  %v1412 = vmax.f32 %v1406, 0.0
  %v1413 = vpack.c.bf16 %v1410, %v1409
  %v1414 = vpack.c.bf16 %v1412, %v1411
  %v1416 = vshrl.u32 %v1413, 16
  %v1418 = vrot.slane %v1416, 7
  %v1419 = vshll.u32 %v1413, 16
  %v1421 = vor.u32 %v1418, %v1419
  %v1423 = vshrl.u32 %v1414, 16
  %v1425 = vrot.slane %v1423, 7
  %v1426 = vshll.u32 %v1414, 16
  %v1428 = vor.u32 %v1425, %v1426
  %v1429 = vsel %vm221, %v1418, %v1428
  %v1432 = vsel %vm240, 0, %v1421
  %v1433 = vsel %vm264, 0, %v1432
  %v1434 = vsel %vm265, 0, %v1429
  %v1435 = vrot.slane %v1419, 1
  %v1436 = vor.u32 %v1416, %v1435
  %v1437 = vrot.slane %v1426, 1
  %v1438 = vsel %vm268, %v1436, %v1437
  %v1439 = vor.u32 %v1423, %v1437
  %v1442 = vsel %vm277, %v1439, 0
  %v1443 = vsel %vm301, 0, %v1438
  %v1444 = vsel %vm302, 0, %v1442
  %1447 = vrot.lane.b32.xlu0 %v1413, 16
  %v1448 = vpop.permute.xlu0 %1447
  %1449 = vrot.lane.b32.xlu0 %v1414, 16
  %v1450 = vpop.permute.xlu0 %1449
  %1453 = vrot.lane.b32.xlu0 %v1443, 32
  %v1454 = vpop.permute.xlu0 %1453
  %1455 = vrot.lane.b32.xlu0 %v1444, 32
  %v1456 = vpop.permute.xlu0 %1455
  %vm1457 = vcmask 130048
  %v1460 = vsel %vm1457, %v1433, %v1448
  %v1463 = vsel %vm1457, %v1434, %v1450
  %v1465 = vsel %vm323, %v1460, %v1454
  %v1467 = vsel %vm323, %v1463, %v1456
  %v1468 = vld [vmem:[%s7] sm:$0xf]
  %v1469 = vld [vmem:[%s7 + $0x4] sm:$0xf]
  %v1470 = vld [vmem:[%s7 + $0x8] sm:$0xf]
  %v1471 = vld [vmem:[%s7 + $0xc] sm:$0xf]
  %v1472 = vld [vmem:[%s7 + $0x10] sm:$0xf]
  %v1473 = vld [vmem:[%s7 + $0x14] sm:$0xf]
  %v1480 = vunpack.c.l.b16 %v1468
  %v1481 = vunpack.c.l.b16 %v1469
  %v1482 = vunpack.c.l.b16 %v1470
  %v1483 = vunpack.c.l.b16 %v1471
  %v1484 = vunpack.c.l.b16 %v1472
  %v1485 = vunpack.c.l.b16 %v1473
  %v1486 = vpack.c.b16 %v1481, %v1480
  %v1487 = vpack.c.b16 %v1483, %v1482
  %v1488 = vpack.c.b16 %v1485, %v1484
  %vm1492 = vcmask 392192
  %v1493 = vsel %vm1492, %v1465, 0
  %v1495 = vsel %vm1492, %v1467, 0
  %1497 = vmatprep.subr.bf16.mxu0 0
  %1498 = vmatpush1.bf16.msra.mxu0 0
  %1499 = vmatprep.subr.bf16.mxu0 0
  %1500 = vmatpush1.bf16.msra.mxu0 0
  %1501 = vmatprep.subr.bf16.mxu0 0
  %1502 = vmatpush1.bf16.msra.mxu0 0
  %1503 = vmatprep.subr.bf16.mxu0 0
  %1504 = vmatpush1.bf16.msra.mxu0 0
  %1505 = vmatprep.subr.bf16.mxu0 0
  %1506 = vmatpush1.bf16.msra.mxu0 0
  %1507 = vmatprep.subr.bf16.mxu0 0
  %1508 = vmatpush1.bf16.msra.mxu0 %v1488
  %1509 = vmatprep.subr.bf16.mxu0 0
  %1510 = vmatpush1.bf16.msra.mxu0 %v1487
  %1511 = vmatprep.subr.bf16.mxu0 0
  %1512 = vmatpush1.bf16.msra.mxu0 %v1486
  %1513 = vmatprep.subr.bf16.mxu0 0
  %1514 = vmatpush2.bf16.msra.mxu0 0
  %1515 = vmatprep.subr.bf16.mxu0 0
  %1516 = vmatpush2.bf16.msra.mxu0 0
  %1517 = vmatprep.subr.bf16.mxu0 0
  %1518 = vmatpush2.bf16.msra.mxu0 0
  %1519 = vmatprep.subr.bf16.mxu0 0
  %1520 = vmatpush2.bf16.msra.mxu0 0
  %1521 = vmatprep.subr.bf16.mxu0 0
  %1522 = vmatpush2.bf16.msra.mxu0 0
  %1523 = vmatprep.subr.bf16.mxu0 0
  %1524 = vmatpush2.bf16.msra.mxu0 0
  %1525 = vmatprep.subr.bf16.mxu0 0
  %1526 = vmatpush2.bf16.msra.mxu0 0
  %1527 = vmatprep.subr.bf16.mxu0 0
  %1528 = vmatpush2.bf16.msra.mxu0 0
  %1529 = vmatprep.mubr.bf16.mxu0 0
  %1530 = vmatmul.mubr.bf16.gmra.mxu0 %v1493
  %v1531 = vpop.f32.mrf.mxu0
  %v1532 = vadd.f32 0.0, %v1531
  %v1533 = vpop.f32.mrf.mxu0
  %v1534 = vpop.f32.mrf.mxu0
  %v1535 = vadd.f32 0.0, %v1534
  %v1536 = vpop.f32.mrf.mxu0
  %1537 = vmatprep.mubr.bf16.mxu0 0
  %1538 = vmatmul.mubr.bf16.gmra.mxu0 %v1495
  %v1539 = vpop.f32.mrf.mxu0
  %v1540 = vadd.f32 0.0, %v1539
  %v1541 = vpop.f32.mrf.mxu0
  %v1542 = vpop.f32.mrf.mxu0
  %v1543 = vadd.f32 0.0, %v1542
  %v1544 = vpop.f32.mrf.mxu0
  %1545 = vdwg.mxu0
  %vm1546 = vcmask 15360
  %1547 = vst.msk [vmem:[%s8] sm:$0xff] %vm1546, %v1532
  %1548 = vst.msk [vmem:[%s8 + $0x8] sm:$0xff] %vm1546, %v1535
  %1549 = vst.msk [vmem:[%s8 + $0x10] sm:$0xff] %vm1546, %v1540
  %1550 = vst.msk [vmem:[%s8 + $0x18] sm:$0xff] %vm1546, %v1543
  %v1551 = vsel %vm335, %v1146, %v320
  %v1552 = vsel %vm335, %v1148, %v322
  %v1553 = vld [vmem:[%s2] sm:$0xf]
  %v1554 = vld [vmem:[%s2 + $0x4] sm:$0xf]
  %v1555 = vld [vmem:[%s2 + $0x8] sm:$0xf]
  %v1556 = vld [vmem:[%s2 + $0xc] sm:$0xf]
  %v1557 = vld [vmem:[%s2 + $0x10] sm:$0xf]
  %v1558 = vld [vmem:[%s2 + $0x14] sm:$0xf]
  %v1559 = vld [vmem:[%s2 + $0x18] sm:$0xf]
  %v1560 = vld [vmem:[%s2 + $0x1c] sm:$0xf]
  %v1561 = vld [vmem:[%s2 + $0x20] sm:$0xf]
  %v1562 = vld [vmem:[%s2 + $0x24] sm:$0xf]
  %v1563 = vld [vmem:[%s2 + $0x28] sm:$0xf]
  %v1564 = vld [vmem:[%s2 + $0x2c] sm:$0xf]
  %v1565 = vld [vmem:[%s2 + $0x30] sm:$0x3]
  %v1579 = vunpack.c.l.b16 %v1553
  %v1580 = vunpack.c.l.b16 %v1554
  %v1581 = vunpack.c.l.b16 %v1555
  %v1582 = vunpack.c.l.b16 %v1556
  %v1583 = vunpack.c.l.b16 %v1557
  %v1584 = vunpack.c.l.b16 %v1558
  %v1585 = vunpack.c.l.b16 %v1559
  %v1586 = vunpack.c.l.b16 %v1560
  %v1587 = vunpack.c.l.b16 %v1561
  %v1588 = vunpack.c.l.b16 %v1562
  %v1589 = vunpack.c.l.b16 %v1563
  %v1590 = vunpack.c.l.b16 %v1564
  %v1591 = vunpack.c.l.b16 %v1565
  %v1592 = vpack.c.b16 %v1580, %v1579
  %v1593 = vpack.c.b16 %v1582, %v1581
  %v1594 = vpack.c.b16 %v1584, %v1583
  %v1595 = vpack.c.b16 %v1586, %v1585
  %v1596 = vpack.c.b16 %v1588, %v1587
  %v1597 = vpack.c.b16 %v1590, %v1589
  %v1598 = vpack.c.b16 %v1591, %v1591
  %v1605 = vsel %vm392, %v1551, 0
  %v1607 = vsel %vm392, %v1552, 0
  %v1610 = vand.u32 %v1598, %v400
  %1612 = vmatprep.subr.bf16.mxu0 0
  %1613 = vmatpush1.bf16.msra.mxu0 0
  %1614 = vmatprep.subr.bf16.mxu0 0
  %1615 = vmatpush1.bf16.msra.mxu0 %v1610
  %1616 = vmatprep.subr.bf16.mxu0 0
  %1617 = vmatpush1.bf16.msra.mxu0 %v1597
  %1618 = vmatprep.subr.bf16.mxu0 0
  %1619 = vmatpush1.bf16.msra.mxu0 %v1596
  %1620 = vmatprep.subr.bf16.mxu0 0
  %1621 = vmatpush1.bf16.msra.mxu0 %v1595
  %1622 = vmatprep.subr.bf16.mxu0 0
  %1623 = vmatpush1.bf16.msra.mxu0 %v1594
  %1624 = vmatprep.subr.bf16.mxu0 0
  %1625 = vmatpush1.bf16.msra.mxu0 %v1593
  %1626 = vmatprep.subr.bf16.mxu0 0
  %1627 = vmatpush1.bf16.msra.mxu0 %v1592
  %1628 = vmatprep.subr.bf16.mxu0 0
  %1629 = vmatpush2.bf16.msra.mxu0 0
  %1630 = vmatprep.subr.bf16.mxu0 0
  %1631 = vmatpush2.bf16.msra.mxu0 0
  %1632 = vmatprep.subr.bf16.mxu0 0
  %1633 = vmatpush2.bf16.msra.mxu0 0
  %1634 = vmatprep.subr.bf16.mxu0 0
  %1635 = vmatpush2.bf16.msra.mxu0 0
  %1636 = vmatprep.subr.bf16.mxu0 0
  %1637 = vmatpush2.bf16.msra.mxu0 0
  %1638 = vmatprep.subr.bf16.mxu0 0
  %1639 = vmatpush2.bf16.msra.mxu0 0
  %1640 = vmatprep.subr.bf16.mxu0 0
  %1641 = vmatpush2.bf16.msra.mxu0 0
  %1642 = vmatprep.subr.bf16.mxu0 0
  %1643 = vmatpush2.bf16.msra.mxu0 0
  %1644 = vmatprep.mubr.bf16.mxu0 0
  %1645 = vmatmul.mubr.bf16.gmra.mxu0 %v1605
  %v1646 = vpop.f32.mrf.mxu0
  %v1647 = vadd.f32 0.0, %v1646
  %v1648 = vpop.f32.mrf.mxu0
  %v1649 = vpop.f32.mrf.mxu0
  %v1650 = vadd.f32 0.0, %v1649
  %v1651 = vpop.f32.mrf.mxu0
  %1652 = vmatprep.mubr.bf16.mxu0 0
  %1653 = vmatmul.mubr.bf16.gmra.mxu0 %v1607
  %v1654 = vpop.f32.mrf.mxu0
  %v1655 = vadd.f32 0.0, %v1654
  %v1656 = vpop.f32.mrf.mxu0
  %v1657 = vpop.f32.mrf.mxu0
  %v1658 = vadd.f32 0.0, %v1657
  %v1659 = vpop.f32.mrf.mxu0
  %1660 = vdwg.mxu0
  %v1661 = vmax.f32 %v1647, 0.0
  %v1662 = vmax.f32 %v1650, 0.0
  %v1663 = vmax.f32 %v1655, 0.0
  %v1664 = vmax.f32 %v1658, 0.0
  %v1665 = vpack.c.bf16 %v1662, %v1661
  %v1666 = vpack.c.bf16 %v1664, %v1663
  %v1668 = vshrl.u32 %v1665, 16
  %v1670 = vrot.slane %v1668, 7
  %v1671 = vshll.u32 %v1665, 16
  %v1673 = vor.u32 %v1670, %v1671
  %v1675 = vshrl.u32 %v1666, 16
  %v1677 = vrot.slane %v1675, 7
  %v1678 = vshll.u32 %v1666, 16
  %v1680 = vor.u32 %v1677, %v1678
  %v1681 = vsel %vm221, %v1670, %v1680
  %v1684 = vsel %vm240, 0, %v1673
  %v1685 = vsel %vm264, 0, %v1684
  %v1686 = vsel %vm265, 0, %v1681
  %v1687 = vrot.slane %v1671, 1
  %v1688 = vor.u32 %v1668, %v1687
  %v1689 = vrot.slane %v1678, 1
  %v1690 = vsel %vm268, %v1688, %v1689
  %v1691 = vor.u32 %v1675, %v1689
  %v1694 = vsel %vm277, %v1691, 0
  %v1695 = vsel %vm301, 0, %v1690
  %v1696 = vsel %vm302, 0, %v1694
  %1699 = vrot.lane.b32.xlu0 %v1665, 32
  %v1700 = vpop.permute.xlu0 %1699
  %1701 = vrot.lane.b32.xlu0 %v1666, 32
  %v1702 = vpop.permute.xlu0 %1701
  %1705 = vrot.lane.b32.xlu0 %v1695, 64
  %v1706 = vpop.permute.xlu0 %1705
  %1707 = vrot.lane.b32.xlu0 %v1696, 64
  %v1708 = vpop.permute.xlu0 %1707
  %v1711 = vsel %vm323, %v1685, %v1700
  %v1714 = vsel %vm323, %v1686, %v1702
  %v1716 = vsel %vm330, %v1711, %v1706
  %v1718 = vsel %vm330, %v1714, %v1708
  %v1719 = vld [vmem:[%s3] sm:$0xf]
  %v1720 = vld [vmem:[%s3 + $0x4] sm:$0xf]
  %v1721 = vld [vmem:[%s3 + $0x8] sm:$0xf]
  %v1722 = vld [vmem:[%s3 + $0xc] sm:$0xf]
  %v1723 = vld [vmem:[%s3 + $0x10] sm:$0xf]
  %v1724 = vld [vmem:[%s3 + $0x14] sm:$0xf]
  %v1725 = vld [vmem:[%s3 + $0x18] sm:$0xf]
  %v1726 = vld [vmem:[%s3 + $0x1c] sm:$0xf]
  %v1727 = vld [vmem:[%s3 + $0x20] sm:$0xf]
  %v1728 = vld [vmem:[%s3 + $0x24] sm:$0xf]
  %v1729 = vld [vmem:[%s3 + $0x28] sm:$0xf]
  %v1730 = vld [vmem:[%s3 + $0x2c] sm:$0xf]
  %v1743 = vunpack.c.l.b16 %v1719
  %v1744 = vunpack.c.l.b16 %v1720
  %v1745 = vunpack.c.l.b16 %v1721
  %v1746 = vunpack.c.l.b16 %v1722
  %v1747 = vunpack.c.l.b16 %v1723
  %v1748 = vunpack.c.l.b16 %v1724
  %v1749 = vunpack.c.l.b16 %v1725
  %v1750 = vunpack.c.l.b16 %v1726
  %v1751 = vunpack.c.l.b16 %v1727
  %v1752 = vunpack.c.l.b16 %v1728
  %v1753 = vunpack.c.l.b16 %v1729
  %v1754 = vunpack.c.l.b16 %v1730
  %v1755 = vpack.c.b16 %v1744, %v1743
  %v1756 = vpack.c.b16 %v1746, %v1745
  %v1757 = vpack.c.b16 %v1748, %v1747
  %v1758 = vpack.c.b16 %v1750, %v1749
  %v1759 = vpack.c.b16 %v1752, %v1751
  %v1760 = vpack.c.b16 %v1754, %v1753
  %v1767 = vsel %vm335, %v1716, 0
  %v1769 = vsel %vm335, %v1718, 0
  %1771 = vmatprep.subr.bf16.mxu0 0
  %1772 = vmatpush1.bf16.msra.mxu0 0
  %1773 = vmatprep.subr.bf16.mxu0 0
  %1774 = vmatpush1.bf16.msra.mxu0 0
  %1775 = vmatprep.subr.bf16.mxu0 0
  %1776 = vmatpush1.bf16.msra.mxu0 %v1760
  %1777 = vmatprep.subr.bf16.mxu0 0
  %1778 = vmatpush1.bf16.msra.mxu0 %v1759
  %1779 = vmatprep.subr.bf16.mxu0 0
  %1780 = vmatpush1.bf16.msra.mxu0 %v1758
  %1781 = vmatprep.subr.bf16.mxu0 0
  %1782 = vmatpush1.bf16.msra.mxu0 %v1757
  %1783 = vmatprep.subr.bf16.mxu0 0
  %1784 = vmatpush1.bf16.msra.mxu0 %v1756
  %1785 = vmatprep.subr.bf16.mxu0 0
  %1786 = vmatpush1.bf16.msra.mxu0 %v1755
  %1787 = vmatprep.subr.bf16.mxu0 0
  %1788 = vmatpush2.bf16.msra.mxu0 0
  %1789 = vmatprep.subr.bf16.mxu0 0
  %1790 = vmatpush2.bf16.msra.mxu0 0
  %1791 = vmatprep.subr.bf16.mxu0 0
  %1792 = vmatpush2.bf16.msra.mxu0 0
  %1793 = vmatprep.subr.bf16.mxu0 0
  %1794 = vmatpush2.bf16.msra.mxu0 0
  %1795 = vmatprep.subr.bf16.mxu0 0
  %1796 = vmatpush2.bf16.msra.mxu0 0
  %1797 = vmatprep.subr.bf16.mxu0 0
  %1798 = vmatpush2.bf16.msra.mxu0 0
  %1799 = vmatprep.subr.bf16.mxu0 0
  %1800 = vmatpush2.bf16.msra.mxu0 0
  %1801 = vmatprep.subr.bf16.mxu0 0
  %1802 = vmatpush2.bf16.msra.mxu0 0
  %1803 = vmatprep.mubr.bf16.mxu0 0
  %1804 = vmatmul.mubr.bf16.gmra.mxu0 %v1767
  %v1805 = vpop.f32.mrf.mxu0
  %v1806 = vadd.f32 0.0, %v1805
  %v1807 = vpop.f32.mrf.mxu0
  %v1808 = vpop.f32.mrf.mxu0
  %v1809 = vadd.f32 0.0, %v1808
  %v1810 = vpop.f32.mrf.mxu0
  %1811 = vmatprep.mubr.bf16.mxu0 0
  %1812 = vmatmul.mubr.bf16.gmra.mxu0 %v1769
  %v1813 = vpop.f32.mrf.mxu0
  %v1814 = vadd.f32 0.0, %v1813
  %v1815 = vpop.f32.mrf.mxu0
  %v1816 = vpop.f32.mrf.mxu0
  %v1817 = vadd.f32 0.0, %v1816
  %v1818 = vpop.f32.mrf.mxu0
  %1819 = vdwg.mxu0
  %v1820 = vmax.f32 %v1806, 0.0
  %v1821 = vmax.f32 %v1809, 0.0
  %v1822 = vmax.f32 %v1814, 0.0
  %v1823 = vmax.f32 %v1817, 0.0
  %v1824 = vpack.c.bf16 %v1821, %v1820
  %v1825 = vpack.c.bf16 %v1823, %v1822
  %v1827 = vshrl.u32 %v1824, 16
  %v1829 = vrot.slane %v1827, 7
  %v1830 = vshll.u32 %v1824, 16
  %v1832 = vor.u32 %v1829, %v1830
  %v1834 = vshrl.u32 %v1825, 16
  %v1836 = vrot.slane %v1834, 7
  %v1837 = vshll.u32 %v1825, 16
  %v1839 = vor.u32 %v1836, %v1837
  %v1840 = vsel %vm221, %v1829, %v1839
  %v1843 = vsel %vm240, 0, %v1832
  %v1844 = vsel %vm264, 0, %v1843
  %v1845 = vsel %vm265, 0, %v1840
  %v1846 = vrot.slane %v1830, 1
  %v1847 = vor.u32 %v1827, %v1846
  %v1848 = vrot.slane %v1837, 1
  %v1849 = vsel %vm268, %v1847, %v1848
  %v1850 = vor.u32 %v1834, %v1848
  %v1853 = vsel %vm277, %v1850, 0
  %v1854 = vsel %vm301, 0, %v1849
  %v1855 = vsel %vm302, 0, %v1853
  %1858 = vrot.lane.b32.xlu0 %v1824, 32
  %v1859 = vpop.permute.xlu0 %1858
  %1860 = vrot.lane.b32.xlu0 %v1825, 32
  %v1861 = vpop.permute.xlu0 %1860
  %1864 = vrot.lane.b32.xlu0 %v1854, 64
  %v1865 = vpop.permute.xlu0 %1864
  %1866 = vrot.lane.b32.xlu0 %v1855, 64
  %v1867 = vpop.permute.xlu0 %1866
  %v1870 = vsel %vm323, %v1844, %v1859
  %v1873 = vsel %vm323, %v1845, %v1861
  %v1875 = vsel %vm330, %v1870, %v1865
  %v1877 = vsel %vm330, %v1873, %v1867
  %v1878 = vld [vmem:[%s4] sm:$0xf]
  %v1879 = vld [vmem:[%s4 + $0x4] sm:$0xf]
  %v1880 = vld [vmem:[%s4 + $0x8] sm:$0xf]
  %v1881 = vld [vmem:[%s4 + $0xc] sm:$0xf]
  %v1882 = vld [vmem:[%s4 + $0x10] sm:$0xf]
  %v1883 = vld [vmem:[%s4 + $0x14] sm:$0xf]
  %v1884 = vld [vmem:[%s4 + $0x18] sm:$0xf]
  %v1885 = vld [vmem:[%s4 + $0x1c] sm:$0xf]
  %v1886 = vld [vmem:[%s4 + $0x20] sm:$0xf]
  %v1887 = vld [vmem:[%s4 + $0x24] sm:$0xf]
  %v1888 = vld [vmem:[%s4 + $0x28] sm:$0xf]
  %v1889 = vld [vmem:[%s4 + $0x2c] sm:$0xf]
  %v1902 = vunpack.c.l.b16 %v1878
  %v1903 = vunpack.c.l.b16 %v1879
  %v1904 = vunpack.c.l.b16 %v1880
  %v1905 = vunpack.c.l.b16 %v1881
  %v1906 = vunpack.c.l.b16 %v1882
  %v1907 = vunpack.c.l.b16 %v1883
  %v1908 = vunpack.c.l.b16 %v1884
  %v1909 = vunpack.c.l.b16 %v1885
  %v1910 = vunpack.c.l.b16 %v1886
  %v1911 = vunpack.c.l.b16 %v1887
  %v1912 = vunpack.c.l.b16 %v1888
  %v1913 = vunpack.c.l.b16 %v1889
  %v1914 = vpack.c.b16 %v1903, %v1902
  %v1915 = vpack.c.b16 %v1905, %v1904
  %v1916 = vpack.c.b16 %v1907, %v1906
  %v1917 = vpack.c.b16 %v1909, %v1908
  %v1918 = vpack.c.b16 %v1911, %v1910
  %v1919 = vpack.c.b16 %v1913, %v1912
  %v1926 = vsel %vm335, %v1875, 0
  %v1928 = vsel %vm335, %v1877, 0
  %1930 = vmatprep.subr.bf16.mxu0 0
  %1931 = vmatpush1.bf16.msra.mxu0 0
  %1932 = vmatprep.subr.bf16.mxu0 0
  %1933 = vmatpush1.bf16.msra.mxu0 0
  %1934 = vmatprep.subr.bf16.mxu0 0
  %1935 = vmatpush1.bf16.msra.mxu0 %v1919
  %1936 = vmatprep.subr.bf16.mxu0 0
  %1937 = vmatpush1.bf16.msra.mxu0 %v1918
  %1938 = vmatprep.subr.bf16.mxu0 0
  %1939 = vmatpush1.bf16.msra.mxu0 %v1917
  %1940 = vmatprep.subr.bf16.mxu0 0
  %1941 = vmatpush1.bf16.msra.mxu0 %v1916
  %1942 = vmatprep.subr.bf16.mxu0 0
  %1943 = vmatpush1.bf16.msra.mxu0 %v1915
  %1944 = vmatprep.subr.bf16.mxu0 0
  %1945 = vmatpush1.bf16.msra.mxu0 %v1914
  %1946 = vmatprep.subr.bf16.mxu0 0
  %1947 = vmatpush2.bf16.msra.mxu0 0
  %1948 = vmatprep.subr.bf16.mxu0 0
  %1949 = vmatpush2.bf16.msra.mxu0 0
  %1950 = vmatprep.subr.bf16.mxu0 0
  %1951 = vmatpush2.bf16.msra.mxu0 0
  %1952 = vmatprep.subr.bf16.mxu0 0
  %1953 = vmatpush2.bf16.msra.mxu0 0
  %1954 = vmatprep.subr.bf16.mxu0 0
  %1955 = vmatpush2.bf16.msra.mxu0 0
  %1956 = vmatprep.subr.bf16.mxu0 0
  %1957 = vmatpush2.bf16.msra.mxu0 0
  %1958 = vmatprep.subr.bf16.mxu0 0
  %1959 = vmatpush2.bf16.msra.mxu0 0
  %1960 = vmatprep.subr.bf16.mxu0 0
  %1961 = vmatpush2.bf16.msra.mxu0 0
  %1962 = vmatprep.mubr.bf16.mxu0 0
  %1963 = vmatmul.mubr.bf16.gmra.mxu0 %v1926
  %v1964 = vpop.f32.mrf.mxu0
  %v1965 = vadd.f32 %v1661, %v1964
  %v1966 = vpop.f32.mrf.mxu0
  %v1967 = vpop.f32.mrf.mxu0
  %v1968 = vadd.f32 %v1662, %v1967
  %v1969 = vpop.f32.mrf.mxu0
  %1970 = vmatprep.mubr.bf16.mxu0 0
  %1971 = vmatmul.mubr.bf16.gmra.mxu0 %v1928
  %v1972 = vpop.f32.mrf.mxu0
  %v1973 = vadd.f32 %v1663, %v1972
  %v1974 = vpop.f32.mrf.mxu0
  %v1975 = vpop.f32.mrf.mxu0
  %v1976 = vadd.f32 %v1664, %v1975
  %v1977 = vpop.f32.mrf.mxu0
  %1978 = vdwg.mxu0
  %v1979 = vmax.f32 %v1965, 0.0
  %v1980 = vmax.f32 %v1968, 0.0
  %v1981 = vmax.f32 %v1973, 0.0
  %v1982 = vmax.f32 %v1976, 0.0
  %v1983 = vpack.c.bf16 %v1980, %v1979
  %v1984 = vpack.c.bf16 %v1982, %v1981
  %v1986 = vshrl.u32 %v1983, 16
  %v1988 = vrot.slane %v1986, 7
  %v1989 = vshll.u32 %v1983, 16
  %v1991 = vor.u32 %v1988, %v1989
  %v1993 = vshrl.u32 %v1984, 16
  %v1995 = vrot.slane %v1993, 7
  %v1996 = vshll.u32 %v1984, 16
  %v1998 = vor.u32 %v1995, %v1996
  %v1999 = vsel %vm221, %v1988, %v1998
  %v2002 = vsel %vm240, 0, %v1991
  %v2003 = vsel %vm264, 0, %v2002
  %v2004 = vsel %vm265, 0, %v1999
  %v2005 = vrot.slane %v1989, 1
  %v2006 = vor.u32 %v1986, %v2005
  %v2007 = vrot.slane %v1996, 1
  %v2008 = vsel %vm268, %v2006, %v2007
  %v2009 = vor.u32 %v1993, %v2007
  %v2012 = vsel %vm277, %v2009, 0
  %v2013 = vsel %vm301, 0, %v2008
  %v2014 = vsel %vm302, 0, %v2012
  %2017 = vrot.lane.b32.xlu0 %v1983, 32
  %v2018 = vpop.permute.xlu0 %2017
  %2019 = vrot.lane.b32.xlu0 %v1984, 32
  %v2020 = vpop.permute.xlu0 %2019
  %2023 = vrot.lane.b32.xlu0 %v2013, 64
  %v2024 = vpop.permute.xlu0 %2023
  %2025 = vrot.lane.b32.xlu0 %v2014, 64
  %v2026 = vpop.permute.xlu0 %2025
  %v2029 = vsel %vm323, %v2003, %v2018
  %v2032 = vsel %vm323, %v2004, %v2020
  %v2034 = vsel %vm330, %v2029, %v2024
  %v2036 = vsel %vm330, %v2032, %v2026
  %v2037 = vld [vmem:[%s829] sm:$0xf]
  %v2038 = vld [vmem:[%s829 + $0x4] sm:$0xf]
  %v2039 = vld [vmem:[%s829 + $0x8] sm:$0xf]
  %v2040 = vld [vmem:[%s829 + $0xc] sm:$0xf]
  %v2041 = vld [vmem:[%s829 + $0x10] sm:$0xf]
  %v2042 = vld [vmem:[%s829 + $0x14] sm:$0xf]
  %v2043 = vld [vmem:[%s829 + $0x18] sm:$0xf]
  %v2044 = vld [vmem:[%s829 + $0x1c] sm:$0xf]
  %v2045 = vld [vmem:[%s829 + $0x20] sm:$0xf]
  %v2046 = vld [vmem:[%s829 + $0x24] sm:$0xf]
  %v2047 = vld [vmem:[%s829 + $0x28] sm:$0xf]
  %v2048 = vld [vmem:[%s829 + $0x2c] sm:$0xf]
  %v2061 = vunpack.c.l.b16 %v2037
  %v2062 = vunpack.c.l.b16 %v2038
  %v2063 = vunpack.c.l.b16 %v2039
  %v2064 = vunpack.c.l.b16 %v2040
  %v2065 = vunpack.c.l.b16 %v2041
  %v2066 = vunpack.c.l.b16 %v2042
  %v2067 = vunpack.c.l.b16 %v2043
  %v2068 = vunpack.c.l.b16 %v2044
  %v2069 = vunpack.c.l.b16 %v2045
  %v2070 = vunpack.c.l.b16 %v2046
  %v2071 = vunpack.c.l.b16 %v2047
  %v2072 = vunpack.c.l.b16 %v2048
  %v2073 = vpack.c.b16 %v2062, %v2061
  %v2074 = vpack.c.b16 %v2064, %v2063
  %v2075 = vpack.c.b16 %v2066, %v2065
  %v2076 = vpack.c.b16 %v2068, %v2067
  %v2077 = vpack.c.b16 %v2070, %v2069
  %v2078 = vpack.c.b16 %v2072, %v2071
  %v2085 = vsel %vm335, %v2034, 0
  %v2087 = vsel %vm335, %v2036, 0
  %2089 = vmatprep.subr.bf16.mxu0 0
  %2090 = vmatpush1.bf16.msra.mxu0 0
  %2091 = vmatprep.subr.bf16.mxu0 0
  %2092 = vmatpush1.bf16.msra.mxu0 0
  %2093 = vmatprep.subr.bf16.mxu0 0
  %2094 = vmatpush1.bf16.msra.mxu0 %v2078
  %2095 = vmatprep.subr.bf16.mxu0 0
  %2096 = vmatpush1.bf16.msra.mxu0 %v2077
  %2097 = vmatprep.subr.bf16.mxu0 0
  %2098 = vmatpush1.bf16.msra.mxu0 %v2076
  %2099 = vmatprep.subr.bf16.mxu0 0
  %2100 = vmatpush1.bf16.msra.mxu0 %v2075
  %2101 = vmatprep.subr.bf16.mxu0 0
  %2102 = vmatpush1.bf16.msra.mxu0 %v2074
  %2103 = vmatprep.subr.bf16.mxu0 0
  %2104 = vmatpush1.bf16.msra.mxu0 %v2073
  %2105 = vmatprep.subr.bf16.mxu0 0
  %2106 = vmatpush2.bf16.msra.mxu0 0
  %2107 = vmatprep.subr.bf16.mxu0 0
  %2108 = vmatpush2.bf16.msra.mxu0 0
  %2109 = vmatprep.subr.bf16.mxu0 0
  %2110 = vmatpush2.bf16.msra.mxu0 0
  %2111 = vmatprep.subr.bf16.mxu0 0
  %2112 = vmatpush2.bf16.msra.mxu0 0
  %2113 = vmatprep.subr.bf16.mxu0 0
  %2114 = vmatpush2.bf16.msra.mxu0 0
  %2115 = vmatprep.subr.bf16.mxu0 0
  %2116 = vmatpush2.bf16.msra.mxu0 0
  %2117 = vmatprep.subr.bf16.mxu0 0
  %2118 = vmatpush2.bf16.msra.mxu0 0
  %2119 = vmatprep.subr.bf16.mxu0 0
  %2120 = vmatpush2.bf16.msra.mxu0 0
  %2121 = vmatprep.mubr.bf16.mxu0 0
  %2122 = vmatmul.mubr.bf16.gmra.mxu0 %v2085
  %v2123 = vpop.f32.mrf.mxu0
  %v2124 = vadd.f32 0.0, %v2123
  %v2125 = vpop.f32.mrf.mxu0
  %v2126 = vpop.f32.mrf.mxu0
  %v2127 = vadd.f32 0.0, %v2126
  %v2128 = vpop.f32.mrf.mxu0
  %2129 = vmatprep.mubr.bf16.mxu0 0
  %2130 = vmatmul.mubr.bf16.gmra.mxu0 %v2087
  %v2131 = vpop.f32.mrf.mxu0
  %v2132 = vadd.f32 0.0, %v2131
  %v2133 = vpop.f32.mrf.mxu0
  %v2134 = vpop.f32.mrf.mxu0
  %v2135 = vadd.f32 0.0, %v2134
  %v2136 = vpop.f32.mrf.mxu0
  %2137 = vdwg.mxu0
  %v2138 = vmax.f32 %v2124, 0.0
  %v2139 = vmax.f32 %v2127, 0.0
  %v2140 = vmax.f32 %v2132, 0.0
  %v2141 = vmax.f32 %v2135, 0.0
  %v2142 = vpack.c.bf16 %v2139, %v2138
  %v2143 = vpack.c.bf16 %v2141, %v2140
  %v2145 = vshrl.u32 %v2142, 16
  %v2147 = vrot.slane %v2145, 7
  %v2148 = vshll.u32 %v2142, 16
  %v2150 = vor.u32 %v2147, %v2148
  %v2152 = vshrl.u32 %v2143, 16
  %v2154 = vrot.slane %v2152, 7
  %v2155 = vshll.u32 %v2143, 16
  %v2157 = vor.u32 %v2154, %v2155
  %v2158 = vsel %vm221, %v2147, %v2157
  %v2161 = vsel %vm240, 0, %v2150
  %v2162 = vsel %vm264, 0, %v2161
  %v2163 = vsel %vm265, 0, %v2158
  %v2164 = vrot.slane %v2148, 1
  %v2165 = vor.u32 %v2145, %v2164
  %v2166 = vrot.slane %v2155, 1
  %v2167 = vsel %vm268, %v2165, %v2166
  %v2168 = vor.u32 %v2152, %v2166
  %v2171 = vsel %vm277, %v2168, 0
  %v2172 = vsel %vm301, 0, %v2167
  %v2173 = vsel %vm302, 0, %v2171
  %2176 = vrot.lane.b32.xlu0 %v2142, 32
  %v2177 = vpop.permute.xlu0 %2176
  %2178 = vrot.lane.b32.xlu0 %v2143, 32
  %v2179 = vpop.permute.xlu0 %2178
  %2182 = vrot.lane.b32.xlu0 %v2172, 64
  %v2183 = vpop.permute.xlu0 %2182
  %2184 = vrot.lane.b32.xlu0 %v2173, 64
  %v2185 = vpop.permute.xlu0 %2184
  %v2188 = vsel %vm323, %v2162, %v2177
  %v2191 = vsel %vm323, %v2163, %v2179
  %v2193 = vsel %vm330, %v2188, %v2183
  %v2195 = vsel %vm330, %v2191, %v2185
  %v2196 = vld [vmem:[%s989] sm:$0xf]
  %v2197 = vld [vmem:[%s989 + $0x4] sm:$0xf]
  %v2198 = vld [vmem:[%s989 + $0x8] sm:$0xf]
  %v2199 = vld [vmem:[%s989 + $0xc] sm:$0xf]
  %v2200 = vld [vmem:[%s989 + $0x10] sm:$0xf]
  %v2201 = vld [vmem:[%s989 + $0x14] sm:$0xf]
  %v2202 = vld [vmem:[%s989 + $0x18] sm:$0xf]
  %v2203 = vld [vmem:[%s989 + $0x1c] sm:$0xf]
  %v2204 = vld [vmem:[%s989 + $0x20] sm:$0xf]
  %v2205 = vld [vmem:[%s989 + $0x24] sm:$0xf]
  %v2206 = vld [vmem:[%s989 + $0x28] sm:$0xf]
  %v2207 = vld [vmem:[%s989 + $0x2c] sm:$0xf]
  %v2220 = vunpack.c.l.b16 %v2196
  %v2221 = vunpack.c.l.b16 %v2197
  %v2222 = vunpack.c.l.b16 %v2198
  %v2223 = vunpack.c.l.b16 %v2199
  %v2224 = vunpack.c.l.b16 %v2200
  %v2225 = vunpack.c.l.b16 %v2201
  %v2226 = vunpack.c.l.b16 %v2202
  %v2227 = vunpack.c.l.b16 %v2203
  %v2228 = vunpack.c.l.b16 %v2204
  %v2229 = vunpack.c.l.b16 %v2205
  %v2230 = vunpack.c.l.b16 %v2206
  %v2231 = vunpack.c.l.b16 %v2207
  %v2232 = vpack.c.b16 %v2221, %v2220
  %v2233 = vpack.c.b16 %v2223, %v2222
  %v2234 = vpack.c.b16 %v2225, %v2224
  %v2235 = vpack.c.b16 %v2227, %v2226
  %v2236 = vpack.c.b16 %v2229, %v2228
  %v2237 = vpack.c.b16 %v2231, %v2230
  %v2244 = vsel %vm335, %v2193, 0
  %v2246 = vsel %vm335, %v2195, 0
  %2248 = vmatprep.subr.bf16.mxu0 0
  %2249 = vmatpush1.bf16.msra.mxu0 0
  %2250 = vmatprep.subr.bf16.mxu0 0
  %2251 = vmatpush1.bf16.msra.mxu0 0
  %2252 = vmatprep.subr.bf16.mxu0 0
  %2253 = vmatpush1.bf16.msra.mxu0 %v2237
  %2254 = vmatprep.subr.bf16.mxu0 0
  %2255 = vmatpush1.bf16.msra.mxu0 %v2236
  %2256 = vmatprep.subr.bf16.mxu0 0
  %2257 = vmatpush1.bf16.msra.mxu0 %v2235
  %2258 = vmatprep.subr.bf16.mxu0 0
  %2259 = vmatpush1.bf16.msra.mxu0 %v2234
  %2260 = vmatprep.subr.bf16.mxu0 0
  %2261 = vmatpush1.bf16.msra.mxu0 %v2233
  %2262 = vmatprep.subr.bf16.mxu0 0
  %2263 = vmatpush1.bf16.msra.mxu0 %v2232
  %2264 = vmatprep.subr.bf16.mxu0 0
  %2265 = vmatpush2.bf16.msra.mxu0 0
  %2266 = vmatprep.subr.bf16.mxu0 0
  %2267 = vmatpush2.bf16.msra.mxu0 0
  %2268 = vmatprep.subr.bf16.mxu0 0
  %2269 = vmatpush2.bf16.msra.mxu0 0
  %2270 = vmatprep.subr.bf16.mxu0 0
  %2271 = vmatpush2.bf16.msra.mxu0 0
  %2272 = vmatprep.subr.bf16.mxu0 0
  %2273 = vmatpush2.bf16.msra.mxu0 0
  %2274 = vmatprep.subr.bf16.mxu0 0
  %2275 = vmatpush2.bf16.msra.mxu0 0
  %2276 = vmatprep.subr.bf16.mxu0 0
  %2277 = vmatpush2.bf16.msra.mxu0 0
  %2278 = vmatprep.subr.bf16.mxu0 0
  %2279 = vmatpush2.bf16.msra.mxu0 0
  %2280 = vmatprep.mubr.bf16.mxu0 0
  %2281 = vmatmul.mubr.bf16.gmra.mxu0 %v2244
  %v2282 = vpop.f32.mrf.mxu0
  %v2283 = vadd.f32 %v1979, %v2282
  %v2284 = vpop.f32.mrf.mxu0
  %v2285 = vpop.f32.mrf.mxu0
  %v2286 = vadd.f32 %v1980, %v2285
  %v2287 = vpop.f32.mrf.mxu0
  %2288 = vmatprep.mubr.bf16.mxu0 0
  %2289 = vmatmul.mubr.bf16.gmra.mxu0 %v2246
  %v2290 = vpop.f32.mrf.mxu0
  %v2291 = vadd.f32 %v1981, %v2290
  %v2292 = vpop.f32.mrf.mxu0
  %v2293 = vpop.f32.mrf.mxu0
  %v2294 = vadd.f32 %v1982, %v2293
  %v2295 = vpop.f32.mrf.mxu0
  %2296 = vdwg.mxu0
  %v2297 = vmax.f32 %v2283, 0.0
  %v2298 = vmax.f32 %v2286, 0.0
  %v2299 = vmax.f32 %v2291, 0.0
  %v2300 = vmax.f32 %v2294, 0.0
  %v2301 = vpack.c.bf16 %v2298, %v2297
  %v2302 = vpack.c.bf16 %v2300, %v2299
  %v2304 = vshrl.u32 %v2301, 16
  %v2306 = vrot.slane %v2304, 7
  %v2307 = vshll.u32 %v2301, 16
  %v2309 = vor.u32 %v2306, %v2307
  %v2311 = vshrl.u32 %v2302, 16
  %v2313 = vrot.slane %v2311, 7
  %v2314 = vshll.u32 %v2302, 16
  %v2316 = vor.u32 %v2313, %v2314
  %v2317 = vsel %vm221, %v2306, %v2316
  %v2320 = vsel %vm240, 0, %v2309
  %v2321 = vsel %vm264, 0, %v2320
  %v2322 = vsel %vm265, 0, %v2317
  %v2323 = vrot.slane %v2307, 1
  %v2324 = vor.u32 %v2304, %v2323
  %v2325 = vrot.slane %v2314, 1
  %v2326 = vsel %vm268, %v2324, %v2325
  %v2327 = vor.u32 %v2311, %v2325
  %v2330 = vsel %vm277, %v2327, 0
  %v2331 = vsel %vm301, 0, %v2326
  %v2332 = vsel %vm302, 0, %v2330
  %2335 = vrot.lane.b32.xlu0 %v2301, 32
  %v2336 = vpop.permute.xlu0 %2335
  %2337 = vrot.lane.b32.xlu0 %v2302, 32
  %v2338 = vpop.permute.xlu0 %2337
  %2341 = vrot.lane.b32.xlu0 %v2331, 64
  %v2342 = vpop.permute.xlu0 %2341
  %2343 = vrot.lane.b32.xlu0 %v2332, 64
  %v2344 = vpop.permute.xlu0 %2343
  %v2347 = vsel %vm323, %v2321, %v2336
  %v2350 = vsel %vm323, %v2322, %v2338
  %v2352 = vsel %vm330, %v2347, %v2342
  %v2354 = vsel %vm330, %v2350, %v2344
  %v2355 = vld [vmem:[%s5] sm:$0xf]
  %v2356 = vld [vmem:[%s5 + $0x4] sm:$0xf]
  %v2357 = vld [vmem:[%s5 + $0x8] sm:$0xf]
  %v2358 = vld [vmem:[%s5 + $0xc] sm:$0xf]
  %v2359 = vld [vmem:[%s5 + $0x10] sm:$0xf]
  %v2360 = vld [vmem:[%s5 + $0x14] sm:$0xf]
  %v2361 = vld [vmem:[%s5 + $0x18] sm:$0xf]
  %v2362 = vld [vmem:[%s5 + $0x1c] sm:$0xf]
  %v2363 = vld [vmem:[%s5 + $0x20] sm:$0xf]
  %v2364 = vld [vmem:[%s5 + $0x24] sm:$0xf]
  %v2365 = vld [vmem:[%s5 + $0x28] sm:$0xf]
  %v2366 = vld [vmem:[%s5 + $0x2c] sm:$0xf]
  %v2379 = vunpack.c.l.b16 %v2355
  %v2380 = vunpack.c.l.b16 %v2356
  %v2381 = vunpack.c.l.b16 %v2357
  %v2382 = vunpack.c.l.b16 %v2358
  %v2383 = vunpack.c.l.b16 %v2359
  %v2384 = vunpack.c.l.b16 %v2360
  %v2385 = vunpack.c.l.b16 %v2361
  %v2386 = vunpack.c.l.b16 %v2362
  %v2387 = vunpack.c.l.b16 %v2363
  %v2388 = vunpack.c.l.b16 %v2364
  %v2389 = vunpack.c.l.b16 %v2365
  %v2390 = vunpack.c.l.b16 %v2366
  %v2391 = vpack.c.b16 %v2380, %v2379
  %v2392 = vpack.c.b16 %v2382, %v2381
  %v2393 = vpack.c.b16 %v2384, %v2383
  %v2394 = vpack.c.b16 %v2386, %v2385
  %v2395 = vpack.c.b16 %v2388, %v2387
  %v2396 = vpack.c.b16 %v2390, %v2389
  %v2403 = vsel %vm335, %v2352, 0
  %v2405 = vsel %vm335, %v2354, 0
  %2407 = vmatprep.subr.bf16.mxu0 0
  %2408 = vmatpush1.bf16.msra.mxu0 0
  %2409 = vmatprep.subr.bf16.mxu0 0
  %2410 = vmatpush1.bf16.msra.mxu0 0
  %2411 = vmatprep.subr.bf16.mxu0 0
  %2412 = vmatpush1.bf16.msra.mxu0 %v2396
  %2413 = vmatprep.subr.bf16.mxu0 0
  %2414 = vmatpush1.bf16.msra.mxu0 %v2395
  %2415 = vmatprep.subr.bf16.mxu0 0
  %2416 = vmatpush1.bf16.msra.mxu0 %v2394
  %2417 = vmatprep.subr.bf16.mxu0 0
  %2418 = vmatpush1.bf16.msra.mxu0 %v2393
  %2419 = vmatprep.subr.bf16.mxu0 0
  %2420 = vmatpush1.bf16.msra.mxu0 %v2392
  %2421 = vmatprep.subr.bf16.mxu0 0
  %2422 = vmatpush1.bf16.msra.mxu0 %v2391
  %2423 = vmatprep.subr.bf16.mxu0 0
  %2424 = vmatpush2.bf16.msra.mxu0 0
  %2425 = vmatprep.subr.bf16.mxu0 0
  %2426 = vmatpush2.bf16.msra.mxu0 0
  %2427 = vmatprep.subr.bf16.mxu0 0
  %2428 = vmatpush2.bf16.msra.mxu0 0
  %2429 = vmatprep.subr.bf16.mxu0 0
  %2430 = vmatpush2.bf16.msra.mxu0 0
  %2431 = vmatprep.subr.bf16.mxu0 0
  %2432 = vmatpush2.bf16.msra.mxu0 0
  %2433 = vmatprep.subr.bf16.mxu0 0
  %2434 = vmatpush2.bf16.msra.mxu0 0
  %2435 = vmatprep.subr.bf16.mxu0 0
  %2436 = vmatpush2.bf16.msra.mxu0 0
  %2437 = vmatprep.subr.bf16.mxu0 0
  %2438 = vmatpush2.bf16.msra.mxu0 0
  %2439 = vmatprep.mubr.bf16.mxu0 0
  %2440 = vmatmul.mubr.bf16.gmra.mxu0 %v2403
  %v2441 = vpop.f32.mrf.mxu0
  %v2442 = vadd.f32 0.0, %v2441
  %v2443 = vpop.f32.mrf.mxu0
  %v2444 = vpop.f32.mrf.mxu0
  %v2445 = vadd.f32 0.0, %v2444
  %v2446 = vpop.f32.mrf.mxu0
  %2447 = vmatprep.mubr.bf16.mxu0 0
  %2448 = vmatmul.mubr.bf16.gmra.mxu0 %v2405
  %v2449 = vpop.f32.mrf.mxu0
  %v2450 = vadd.f32 0.0, %v2449
  %v2451 = vpop.f32.mrf.mxu0
  %v2452 = vpop.f32.mrf.mxu0
  %v2453 = vadd.f32 0.0, %v2452
  %v2454 = vpop.f32.mrf.mxu0
  %2455 = vdwg.mxu0
  %v2456 = vmax.f32 %v2442, 0.0
  %v2457 = vmax.f32 %v2445, 0.0
  %v2458 = vmax.f32 %v2450, 0.0
  %v2459 = vmax.f32 %v2453, 0.0
  %v2460 = vpack.c.bf16 %v2457, %v2456
  %v2461 = vpack.c.bf16 %v2459, %v2458
  %v2463 = vshrl.u32 %v2460, 16
  %v2465 = vrot.slane %v2463, 7
  %v2466 = vshll.u32 %v2460, 16
  %v2468 = vor.u32 %v2465, %v2466
  %v2470 = vshrl.u32 %v2461, 16
  %v2472 = vrot.slane %v2470, 7
  %v2473 = vshll.u32 %v2461, 16
  %v2475 = vor.u32 %v2472, %v2473
  %v2476 = vsel %vm221, %v2465, %v2475
  %v2479 = vsel %vm240, 0, %v2468
  %v2480 = vsel %vm264, 0, %v2479
  %v2481 = vsel %vm265, 0, %v2476
  %v2482 = vrot.slane %v2466, 1
  %v2483 = vor.u32 %v2463, %v2482
  %v2484 = vrot.slane %v2473, 1
  %v2485 = vsel %vm268, %v2483, %v2484
  %v2486 = vor.u32 %v2470, %v2484
  %v2489 = vsel %vm277, %v2486, 0
  %v2490 = vsel %vm301, 0, %v2485
  %v2491 = vsel %vm302, 0, %v2489
  %2494 = vrot.lane.b32.xlu0 %v2460, 32
  %v2495 = vpop.permute.xlu0 %2494
  %2496 = vrot.lane.b32.xlu0 %v2461, 32
  %v2497 = vpop.permute.xlu0 %2496
  %2500 = vrot.lane.b32.xlu0 %v2490, 64
  %v2501 = vpop.permute.xlu0 %2500
  %2502 = vrot.lane.b32.xlu0 %v2491, 64
  %v2503 = vpop.permute.xlu0 %2502
  %v2506 = vsel %vm323, %v2480, %v2495
  %v2509 = vsel %vm323, %v2481, %v2497
  %v2511 = vsel %vm330, %v2506, %v2501
  %v2513 = vsel %vm330, %v2509, %v2503
  %v2514 = vld [vmem:[%s6] sm:$0xf]
  %v2515 = vld [vmem:[%s6 + $0x4] sm:$0xf]
  %v2516 = vld [vmem:[%s6 + $0x8] sm:$0xf]
  %v2517 = vld [vmem:[%s6 + $0xc] sm:$0xf]
  %v2518 = vld [vmem:[%s6 + $0x10] sm:$0xf]
  %v2519 = vld [vmem:[%s6 + $0x14] sm:$0xf]
  %v2520 = vld [vmem:[%s6 + $0x18] sm:$0xf]
  %v2521 = vld [vmem:[%s6 + $0x1c] sm:$0xf]
  %v2522 = vld [vmem:[%s6 + $0x20] sm:$0xf]
  %v2523 = vld [vmem:[%s6 + $0x24] sm:$0xf]
  %v2524 = vld [vmem:[%s6 + $0x28] sm:$0xf]
  %v2525 = vld [vmem:[%s6 + $0x2c] sm:$0xf]
  %v2538 = vunpack.c.l.b16 %v2514
  %v2539 = vunpack.c.l.b16 %v2515
  %v2540 = vunpack.c.l.b16 %v2516
  %v2541 = vunpack.c.l.b16 %v2517
  %v2542 = vunpack.c.l.b16 %v2518
  %v2543 = vunpack.c.l.b16 %v2519
  %v2544 = vunpack.c.l.b16 %v2520
  %v2545 = vunpack.c.l.b16 %v2521
  %v2546 = vunpack.c.l.b16 %v2522
  %v2547 = vunpack.c.l.b16 %v2523
  %v2548 = vunpack.c.l.b16 %v2524
  %v2549 = vunpack.c.l.b16 %v2525
  %v2550 = vpack.c.b16 %v2539, %v2538
  %v2551 = vpack.c.b16 %v2541, %v2540
  %v2552 = vpack.c.b16 %v2543, %v2542
  %v2553 = vpack.c.b16 %v2545, %v2544
  %v2554 = vpack.c.b16 %v2547, %v2546
  %v2555 = vpack.c.b16 %v2549, %v2548
  %v2562 = vsel %vm335, %v2511, 0
  %v2564 = vsel %vm335, %v2513, 0
  %2566 = vmatprep.subr.bf16.mxu0 0
  %2567 = vmatpush1.bf16.msra.mxu0 0
  %2568 = vmatprep.subr.bf16.mxu0 0
  %2569 = vmatpush1.bf16.msra.mxu0 0
  %2570 = vmatprep.subr.bf16.mxu0 0
  %2571 = vmatpush1.bf16.msra.mxu0 %v2555
  %2572 = vmatprep.subr.bf16.mxu0 0
  %2573 = vmatpush1.bf16.msra.mxu0 %v2554
  %2574 = vmatprep.subr.bf16.mxu0 0
  %2575 = vmatpush1.bf16.msra.mxu0 %v2553
  %2576 = vmatprep.subr.bf16.mxu0 0
  %2577 = vmatpush1.bf16.msra.mxu0 %v2552
  %2578 = vmatprep.subr.bf16.mxu0 0
  %2579 = vmatpush1.bf16.msra.mxu0 %v2551
  %2580 = vmatprep.subr.bf16.mxu0 0
  %2581 = vmatpush1.bf16.msra.mxu0 %v2550
  %2582 = vmatprep.subr.bf16.mxu0 0
  %2583 = vmatpush2.bf16.msra.mxu0 0
  %2584 = vmatprep.subr.bf16.mxu0 0
  %2585 = vmatpush2.bf16.msra.mxu0 0
  %2586 = vmatprep.subr.bf16.mxu0 0
  %2587 = vmatpush2.bf16.msra.mxu0 0
  %2588 = vmatprep.subr.bf16.mxu0 0
  %2589 = vmatpush2.bf16.msra.mxu0 0
  %2590 = vmatprep.subr.bf16.mxu0 0
  %2591 = vmatpush2.bf16.msra.mxu0 0
  %2592 = vmatprep.subr.bf16.mxu0 0
  %2593 = vmatpush2.bf16.msra.mxu0 0
  %2594 = vmatprep.subr.bf16.mxu0 0
  %2595 = vmatpush2.bf16.msra.mxu0 0
  %2596 = vmatprep.subr.bf16.mxu0 0
  %2597 = vmatpush2.bf16.msra.mxu0 0
  %2598 = vmatprep.mubr.bf16.mxu0 0
  %2599 = vmatmul.mubr.bf16.gmra.mxu0 %v2562
  %v2600 = vpop.f32.mrf.mxu0
  %v2601 = vadd.f32 0.0, %v2600
  %v2602 = vpop.f32.mrf.mxu0
  %v2603 = vpop.f32.mrf.mxu0
  %v2604 = vadd.f32 0.0, %v2603
  %v2605 = vpop.f32.mrf.mxu0
  %2606 = vmatprep.mubr.bf16.mxu0 0
  %2607 = vmatmul.mubr.bf16.gmra.mxu0 %v2564
  %v2608 = vpop.f32.mrf.mxu0
  %v2609 = vadd.f32 0.0, %v2608
  %v2610 = vpop.f32.mrf.mxu0
  %v2611 = vpop.f32.mrf.mxu0
  %v2612 = vadd.f32 0.0, %v2611
  %v2613 = vpop.f32.mrf.mxu0
  %2614 = vdwg.mxu0
  %v2615 = vmax.f32 %v2601, 0.0
  %v2616 = vmax.f32 %v2604, 0.0
  %v2617 = vmax.f32 %v2609, 0.0
  %v2618 = vmax.f32 %v2612, 0.0
  %v2619 = vpack.c.bf16 %v2616, %v2615
  %v2620 = vpack.c.bf16 %v2618, %v2617
  %v2622 = vshrl.u32 %v2619, 16
  %v2624 = vrot.slane %v2622, 7
  %v2625 = vshll.u32 %v2619, 16
  %v2627 = vor.u32 %v2624, %v2625
  %v2629 = vshrl.u32 %v2620, 16
  %v2631 = vrot.slane %v2629, 7
  %v2632 = vshll.u32 %v2620, 16
  %v2634 = vor.u32 %v2631, %v2632
  %v2635 = vsel %vm221, %v2624, %v2634
  %v2638 = vsel %vm240, 0, %v2627
  %v2639 = vsel %vm264, 0, %v2638
  %v2640 = vsel %vm265, 0, %v2635
  %v2641 = vrot.slane %v2625, 1
  %v2642 = vor.u32 %v2622, %v2641
  %v2643 = vrot.slane %v2632, 1
  %v2644 = vsel %vm268, %v2642, %v2643
  %v2645 = vor.u32 %v2629, %v2643
  %v2648 = vsel %vm277, %v2645, 0
  %v2649 = vsel %vm301, 0, %v2644
  %v2650 = vsel %vm302, 0, %v2648
  %2653 = vrot.lane.b32.xlu0 %v2619, 16
  %v2654 = vpop.permute.xlu0 %2653
  %2655 = vrot.lane.b32.xlu0 %v2620, 16
  %v2656 = vpop.permute.xlu0 %2655
  %2659 = vrot.lane.b32.xlu0 %v2649, 32
  %v2660 = vpop.permute.xlu0 %2659
  %2661 = vrot.lane.b32.xlu0 %v2650, 32
  %v2662 = vpop.permute.xlu0 %2661
  %v2665 = vsel %vm1457, %v2639, %v2654
  %v2668 = vsel %vm1457, %v2640, %v2656
  %v2670 = vsel %vm323, %v2665, %v2660
  %v2672 = vsel %vm323, %v2668, %v2662
  %v2673 = vld [vmem:[%s7] sm:$0xf]
  %v2674 = vld [vmem:[%s7 + $0x4] sm:$0xf]
  %v2675 = vld [vmem:[%s7 + $0x8] sm:$0xf]
  %v2676 = vld [vmem:[%s7 + $0xc] sm:$0xf]
  %v2677 = vld [vmem:[%s7 + $0x10] sm:$0xf]
  %v2678 = vld [vmem:[%s7 + $0x14] sm:$0xf]
  %v2685 = vunpack.c.l.b16 %v2673
  %v2686 = vunpack.c.l.b16 %v2674
  %v2687 = vunpack.c.l.b16 %v2675
  %v2688 = vunpack.c.l.b16 %v2676
  %v2689 = vunpack.c.l.b16 %v2677
  %v2690 = vunpack.c.l.b16 %v2678
  %v2691 = vpack.c.b16 %v2686, %v2685
  %v2692 = vpack.c.b16 %v2688, %v2687
  %v2693 = vpack.c.b16 %v2690, %v2689
  %v2697 = vsel %vm1492, %v2670, 0
  %v2699 = vsel %vm1492, %v2672, 0
  %2701 = vmatprep.subr.bf16.mxu0 0
  %2702 = vmatpush1.bf16.msra.mxu0 0
  %2703 = vmatprep.subr.bf16.mxu0 0
  %2704 = vmatpush1.bf16.msra.mxu0 0
  %2705 = vmatprep.subr.bf16.mxu0 0
  %2706 = vmatpush1.bf16.msra.mxu0 0
  %2707 = vmatprep.subr.bf16.mxu0 0
  %2708 = vmatpush1.bf16.msra.mxu0 0
  %2709 = vmatprep.subr.bf16.mxu0 0
  %2710 = vmatpush1.bf16.msra.mxu0 0
  %2711 = vmatprep.subr.bf16.mxu0 0
  %2712 = vmatpush1.bf16.msra.mxu0 %v2693
  %2713 = vmatprep.subr.bf16.mxu0 0
  %2714 = vmatpush1.bf16.msra.mxu0 %v2692
  %2715 = vmatprep.subr.bf16.mxu0 0
  %2716 = vmatpush1.bf16.msra.mxu0 %v2691
  %2717 = vmatprep.subr.bf16.mxu0 0
  %2718 = vmatpush2.bf16.msra.mxu0 0
  %2719 = vmatprep.subr.bf16.mxu0 0
  %2720 = vmatpush2.bf16.msra.mxu0 0
  %2721 = vmatprep.subr.bf16.mxu0 0
  %2722 = vmatpush2.bf16.msra.mxu0 0
  %2723 = vmatprep.subr.bf16.mxu0 0
  %2724 = vmatpush2.bf16.msra.mxu0 0
  %2725 = vmatprep.subr.bf16.mxu0 0
  %2726 = vmatpush2.bf16.msra.mxu0 0
  %2727 = vmatprep.subr.bf16.mxu0 0
  %2728 = vmatpush2.bf16.msra.mxu0 0
  %2729 = vmatprep.subr.bf16.mxu0 0
  %2730 = vmatpush2.bf16.msra.mxu0 0
  %2731 = vmatprep.subr.bf16.mxu0 0
  %2732 = vmatpush2.bf16.msra.mxu0 0
  %2733 = vmatprep.mubr.bf16.mxu0 0
  %2734 = vmatmul.mubr.bf16.gmra.mxu0 %v2697
  %v2735 = vpop.f32.mrf.mxu0
  %v2736 = vadd.f32 0.0, %v2735
  %v2737 = vpop.f32.mrf.mxu0
  %v2738 = vpop.f32.mrf.mxu0
  %v2739 = vadd.f32 0.0, %v2738
  %v2740 = vpop.f32.mrf.mxu0
  %2741 = vmatprep.mubr.bf16.mxu0 0
  %2742 = vmatmul.mubr.bf16.gmra.mxu0 %v2699
  %v2743 = vpop.f32.mrf.mxu0
  %v2744 = vadd.f32 0.0, %v2743
  %v2745 = vpop.f32.mrf.mxu0
  %v2746 = vpop.f32.mrf.mxu0
  %v2747 = vadd.f32 0.0, %v2746
  %v2748 = vpop.f32.mrf.mxu0
  %2749 = vdwg.mxu0
  %s2750 = scalar_lea.vmem %s8, 32
  %2751 = vst.msk [vmem:[%s2750] sm:$0xff] %vm1546, %v2736
  %2752 = vst.msk [vmem:[%s2750 + $0x8] sm:$0xff] %vm1546, %v2739
  %2753 = vst.msk [vmem:[%s2750 + $0x10] sm:$0xff] %vm1546, %v2744
  %2754 = vst.msk [vmem:[%s2750 + $0x18] sm:$0xff] %vm1546, %v2747
  %v2755 = vsel %vm335, %v2352, %v320
  %v2756 = vsel %vm335, %v2354, %v322
  %v2757 = vld [vmem:[%s2] sm:$0xf]
  %v2758 = vld [vmem:[%s2 + $0x4] sm:$0xf]
  %v2759 = vld [vmem:[%s2 + $0x8] sm:$0xf]
  %v2760 = vld [vmem:[%s2 + $0xc] sm:$0xf]
  %v2761 = vld [vmem:[%s2 + $0x10] sm:$0xf]
  %v2762 = vld [vmem:[%s2 + $0x14] sm:$0xf]
  %v2763 = vld [vmem:[%s2 + $0x18] sm:$0xf]
  %v2764 = vld [vmem:[%s2 + $0x1c] sm:$0xf]
  %v2765 = vld [vmem:[%s2 + $0x20] sm:$0xf]
  %v2766 = vld [vmem:[%s2 + $0x24] sm:$0xf]
  %v2767 = vld [vmem:[%s2 + $0x28] sm:$0xf]
  %v2768 = vld [vmem:[%s2 + $0x2c] sm:$0xf]
  %v2769 = vld [vmem:[%s2 + $0x30] sm:$0x3]
  %v2783 = vunpack.c.l.b16 %v2757
  %v2784 = vunpack.c.l.b16 %v2758
  %v2785 = vunpack.c.l.b16 %v2759
  %v2786 = vunpack.c.l.b16 %v2760
  %v2787 = vunpack.c.l.b16 %v2761
  %v2788 = vunpack.c.l.b16 %v2762
  %v2789 = vunpack.c.l.b16 %v2763
  %v2790 = vunpack.c.l.b16 %v2764
  %v2791 = vunpack.c.l.b16 %v2765
  %v2792 = vunpack.c.l.b16 %v2766
  %v2793 = vunpack.c.l.b16 %v2767
  %v2794 = vunpack.c.l.b16 %v2768
  %v2795 = vunpack.c.l.b16 %v2769
  %v2796 = vpack.c.b16 %v2784, %v2783
  %v2797 = vpack.c.b16 %v2786, %v2785
  %v2798 = vpack.c.b16 %v2788, %v2787
  %v2799 = vpack.c.b16 %v2790, %v2789
  %v2800 = vpack.c.b16 %v2792, %v2791
  %v2801 = vpack.c.b16 %v2794, %v2793
  %v2802 = vpack.c.b16 %v2795, %v2795
  %v2809 = vsel %vm392, %v2755, 0
  %v2811 = vsel %vm392, %v2756, 0
  %v2814 = vand.u32 %v2802, %v400
  %2816 = vmatprep.subr.bf16.mxu0 0
  %2817 = vmatpush1.bf16.msra.mxu0 0
  %2818 = vmatprep.subr.bf16.mxu0 0
  %2819 = vmatpush1.bf16.msra.mxu0 %v2814
  %2820 = vmatprep.subr.bf16.mxu0 0
  %2821 = vmatpush1.bf16.msra.mxu0 %v2801
  %2822 = vmatprep.subr.bf16.mxu0 0
  %2823 = vmatpush1.bf16.msra.mxu0 %v2800
  %2824 = vmatprep.subr.bf16.mxu0 0
  %2825 = vmatpush1.bf16.msra.mxu0 %v2799
  %2826 = vmatprep.subr.bf16.mxu0 0
  %2827 = vmatpush1.bf16.msra.mxu0 %v2798
  %2828 = vmatprep.subr.bf16.mxu0 0
  %2829 = vmatpush1.bf16.msra.mxu0 %v2797
  %2830 = vmatprep.subr.bf16.mxu0 0
  %2831 = vmatpush1.bf16.msra.mxu0 %v2796
  %2832 = vmatprep.subr.bf16.mxu0 0
  %2833 = vmatpush2.bf16.msra.mxu0 0
  %2834 = vmatprep.subr.bf16.mxu0 0
  %2835 = vmatpush2.bf16.msra.mxu0 0
  %2836 = vmatprep.subr.bf16.mxu0 0
  %2837 = vmatpush2.bf16.msra.mxu0 0
  %2838 = vmatprep.subr.bf16.mxu0 0
  %2839 = vmatpush2.bf16.msra.mxu0 0
  %2840 = vmatprep.subr.bf16.mxu0 0
  %2841 = vmatpush2.bf16.msra.mxu0 0
  %2842 = vmatprep.subr.bf16.mxu0 0
  %2843 = vmatpush2.bf16.msra.mxu0 0
  %2844 = vmatprep.subr.bf16.mxu0 0
  %2845 = vmatpush2.bf16.msra.mxu0 0
  %2846 = vmatprep.subr.bf16.mxu0 0
  %2847 = vmatpush2.bf16.msra.mxu0 0
  %2848 = vmatprep.mubr.bf16.mxu0 0
  %2849 = vmatmul.mubr.bf16.gmra.mxu0 %v2809
  %v2850 = vpop.f32.mrf.mxu0
  %v2851 = vadd.f32 0.0, %v2850
  %v2852 = vpop.f32.mrf.mxu0
  %v2853 = vpop.f32.mrf.mxu0
  %v2854 = vadd.f32 0.0, %v2853
  %v2855 = vpop.f32.mrf.mxu0
  %2856 = vmatprep.mubr.bf16.mxu0 0
  %2857 = vmatmul.mubr.bf16.gmra.mxu0 %v2811
  %v2858 = vpop.f32.mrf.mxu0
  %v2859 = vadd.f32 0.0, %v2858
  %v2860 = vpop.f32.mrf.mxu0
  %v2861 = vpop.f32.mrf.mxu0
  %v2862 = vadd.f32 0.0, %v2861
  %v2863 = vpop.f32.mrf.mxu0
  %2864 = vdwg.mxu0
  %v2865 = vmax.f32 %v2851, 0.0
  %v2866 = vmax.f32 %v2854, 0.0
  %v2867 = vmax.f32 %v2859, 0.0
  %v2868 = vmax.f32 %v2862, 0.0
  %v2869 = vpack.c.bf16 %v2866, %v2865
  %v2870 = vpack.c.bf16 %v2868, %v2867
  %v2872 = vshrl.u32 %v2869, 16
  %v2874 = vrot.slane %v2872, 7
  %v2875 = vshll.u32 %v2869, 16
  %v2877 = vor.u32 %v2874, %v2875
  %v2879 = vshrl.u32 %v2870, 16
  %v2881 = vrot.slane %v2879, 7
  %v2882 = vshll.u32 %v2870, 16
  %v2884 = vor.u32 %v2881, %v2882
  %v2885 = vsel %vm221, %v2874, %v2884
  %v2888 = vsel %vm240, 0, %v2877
  %v2889 = vsel %vm264, 0, %v2888
  %v2890 = vsel %vm265, 0, %v2885
  %v2891 = vrot.slane %v2875, 1
  %v2892 = vor.u32 %v2872, %v2891
  %v2893 = vrot.slane %v2882, 1
  %v2894 = vsel %vm268, %v2892, %v2893
  %v2895 = vor.u32 %v2879, %v2893
  %v2898 = vsel %vm277, %v2895, 0
  %v2899 = vsel %vm301, 0, %v2894
  %v2900 = vsel %vm302, 0, %v2898
  %2903 = vrot.lane.b32.xlu0 %v2869, 32
  %v2904 = vpop.permute.xlu0 %2903
  %2905 = vrot.lane.b32.xlu0 %v2870, 32
  %v2906 = vpop.permute.xlu0 %2905
  %2909 = vrot.lane.b32.xlu0 %v2899, 64
  %v2910 = vpop.permute.xlu0 %2909
  %2911 = vrot.lane.b32.xlu0 %v2900, 64
  %v2912 = vpop.permute.xlu0 %2911
  %v2915 = vsel %vm323, %v2889, %v2904
  %v2918 = vsel %vm323, %v2890, %v2906
  %v2920 = vsel %vm330, %v2915, %v2910
  %v2922 = vsel %vm330, %v2918, %v2912
  %v2923 = vld [vmem:[%s3] sm:$0xf]
  %v2924 = vld [vmem:[%s3 + $0x4] sm:$0xf]
  %v2925 = vld [vmem:[%s3 + $0x8] sm:$0xf]
  %v2926 = vld [vmem:[%s3 + $0xc] sm:$0xf]
  %v2927 = vld [vmem:[%s3 + $0x10] sm:$0xf]
  %v2928 = vld [vmem:[%s3 + $0x14] sm:$0xf]
  %v2929 = vld [vmem:[%s3 + $0x18] sm:$0xf]
  %v2930 = vld [vmem:[%s3 + $0x1c] sm:$0xf]
  %v2931 = vld [vmem:[%s3 + $0x20] sm:$0xf]
  %v2932 = vld [vmem:[%s3 + $0x24] sm:$0xf]
  %v2933 = vld [vmem:[%s3 + $0x28] sm:$0xf]
  %v2934 = vld [vmem:[%s3 + $0x2c] sm:$0xf]
  %v2947 = vunpack.c.l.b16 %v2923
  %v2948 = vunpack.c.l.b16 %v2924
  %v2949 = vunpack.c.l.b16 %v2925
  %v2950 = vunpack.c.l.b16 %v2926
  %v2951 = vunpack.c.l.b16 %v2927
  %v2952 = vunpack.c.l.b16 %v2928
  %v2953 = vunpack.c.l.b16 %v2929
  %v2954 = vunpack.c.l.b16 %v2930
  %v2955 = vunpack.c.l.b16 %v2931
  %v2956 = vunpack.c.l.b16 %v2932
  %v2957 = vunpack.c.l.b16 %v2933
  %v2958 = vunpack.c.l.b16 %v2934
  %v2959 = vpack.c.b16 %v2948, %v2947
  %v2960 = vpack.c.b16 %v2950, %v2949
  %v2961 = vpack.c.b16 %v2952, %v2951
  %v2962 = vpack.c.b16 %v2954, %v2953
  %v2963 = vpack.c.b16 %v2956, %v2955
  %v2964 = vpack.c.b16 %v2958, %v2957
  %v2971 = vsel %vm335, %v2920, 0
  %v2973 = vsel %vm335, %v2922, 0
  %2975 = vmatprep.subr.bf16.mxu0 0
  %2976 = vmatpush1.bf16.msra.mxu0 0
  %2977 = vmatprep.subr.bf16.mxu0 0
  %2978 = vmatpush1.bf16.msra.mxu0 0
  %2979 = vmatprep.subr.bf16.mxu0 0
  %2980 = vmatpush1.bf16.msra.mxu0 %v2964
  %2981 = vmatprep.subr.bf16.mxu0 0
  %2982 = vmatpush1.bf16.msra.mxu0 %v2963
  %2983 = vmatprep.subr.bf16.mxu0 0
  %2984 = vmatpush1.bf16.msra.mxu0 %v2962
  %2985 = vmatprep.subr.bf16.mxu0 0
  %2986 = vmatpush1.bf16.msra.mxu0 %v2961
  %2987 = vmatprep.subr.bf16.mxu0 0
  %2988 = vmatpush1.bf16.msra.mxu0 %v2960
  %2989 = vmatprep.subr.bf16.mxu0 0
  %2990 = vmatpush1.bf16.msra.mxu0 %v2959
  %2991 = vmatprep.subr.bf16.mxu0 0
  %2992 = vmatpush2.bf16.msra.mxu0 0
  %2993 = vmatprep.subr.bf16.mxu0 0
  %2994 = vmatpush2.bf16.msra.mxu0 0
  %2995 = vmatprep.subr.bf16.mxu0 0
  %2996 = vmatpush2.bf16.msra.mxu0 0
  %2997 = vmatprep.subr.bf16.mxu0 0
  %2998 = vmatpush2.bf16.msra.mxu0 0
  %2999 = vmatprep.subr.bf16.mxu0 0
  %3000 = vmatpush2.bf16.msra.mxu0 0
  %3001 = vmatprep.subr.bf16.mxu0 0
  %3002 = vmatpush2.bf16.msra.mxu0 0
  %3003 = vmatprep.subr.bf16.mxu0 0
  %3004 = vmatpush2.bf16.msra.mxu0 0
  %3005 = vmatprep.subr.bf16.mxu0 0
  %3006 = vmatpush2.bf16.msra.mxu0 0
  %3007 = vmatprep.mubr.bf16.mxu0 0
  %3008 = vmatmul.mubr.bf16.gmra.mxu0 %v2971
  %v3009 = vpop.f32.mrf.mxu0
  %v3010 = vadd.f32 0.0, %v3009
  %v3011 = vpop.f32.mrf.mxu0
  %v3012 = vpop.f32.mrf.mxu0
  %v3013 = vadd.f32 0.0, %v3012
  %v3014 = vpop.f32.mrf.mxu0
  %3015 = vmatprep.mubr.bf16.mxu0 0
  %3016 = vmatmul.mubr.bf16.gmra.mxu0 %v2973
  %v3017 = vpop.f32.mrf.mxu0
  %v3018 = vadd.f32 0.0, %v3017
  %v3019 = vpop.f32.mrf.mxu0
  %v3020 = vpop.f32.mrf.mxu0
  %v3021 = vadd.f32 0.0, %v3020
  %v3022 = vpop.f32.mrf.mxu0
  %3023 = vdwg.mxu0
  %v3024 = vmax.f32 %v3010, 0.0
  %v3025 = vmax.f32 %v3013, 0.0
  %v3026 = vmax.f32 %v3018, 0.0
  %v3027 = vmax.f32 %v3021, 0.0
  %v3028 = vpack.c.bf16 %v3025, %v3024
  %v3029 = vpack.c.bf16 %v3027, %v3026
  %v3031 = vshrl.u32 %v3028, 16
  %v3033 = vrot.slane %v3031, 7
  %v3034 = vshll.u32 %v3028, 16
  %v3036 = vor.u32 %v3033, %v3034
  %v3038 = vshrl.u32 %v3029, 16
  %v3040 = vrot.slane %v3038, 7
  %v3041 = vshll.u32 %v3029, 16
  %v3043 = vor.u32 %v3040, %v3041
  %v3044 = vsel %vm221, %v3033, %v3043
  %v3047 = vsel %vm240, 0, %v3036
  %v3048 = vsel %vm264, 0, %v3047
  %v3049 = vsel %vm265, 0, %v3044
  %v3050 = vrot.slane %v3034, 1
  %v3051 = vor.u32 %v3031, %v3050
  %v3052 = vrot.slane %v3041, 1
  %v3053 = vsel %vm268, %v3051, %v3052
  %v3054 = vor.u32 %v3038, %v3052
  %v3057 = vsel %vm277, %v3054, 0
  %v3058 = vsel %vm301, 0, %v3053
  %v3059 = vsel %vm302, 0, %v3057
  %3062 = vrot.lane.b32.xlu0 %v3028, 32
  %v3063 = vpop.permute.xlu0 %3062
  %3064 = vrot.lane.b32.xlu0 %v3029, 32
  %v3065 = vpop.permute.xlu0 %3064
  %3068 = vrot.lane.b32.xlu0 %v3058, 64
  %v3069 = vpop.permute.xlu0 %3068
  %3070 = vrot.lane.b32.xlu0 %v3059, 64
  %v3071 = vpop.permute.xlu0 %3070
  %v3074 = vsel %vm323, %v3048, %v3063
  %v3077 = vsel %vm323, %v3049, %v3065
  %v3079 = vsel %vm330, %v3074, %v3069
  %v3081 = vsel %vm330, %v3077, %v3071
  %v3082 = vld [vmem:[%s4] sm:$0xf]
  %v3083 = vld [vmem:[%s4 + $0x4] sm:$0xf]
  %v3084 = vld [vmem:[%s4 + $0x8] sm:$0xf]
  %v3085 = vld [vmem:[%s4 + $0xc] sm:$0xf]
  %v3086 = vld [vmem:[%s4 + $0x10] sm:$0xf]
  %v3087 = vld [vmem:[%s4 + $0x14] sm:$0xf]
  %v3088 = vld [vmem:[%s4 + $0x18] sm:$0xf]
  %v3089 = vld [vmem:[%s4 + $0x1c] sm:$0xf]
  %v3090 = vld [vmem:[%s4 + $0x20] sm:$0xf]
  %v3091 = vld [vmem:[%s4 + $0x24] sm:$0xf]
  %v3092 = vld [vmem:[%s4 + $0x28] sm:$0xf]
  %v3093 = vld [vmem:[%s4 + $0x2c] sm:$0xf]
  %v3106 = vunpack.c.l.b16 %v3082
  %v3107 = vunpack.c.l.b16 %v3083
  %v3108 = vunpack.c.l.b16 %v3084
  %v3109 = vunpack.c.l.b16 %v3085
  %v3110 = vunpack.c.l.b16 %v3086
  %v3111 = vunpack.c.l.b16 %v3087
  %v3112 = vunpack.c.l.b16 %v3088
  %v3113 = vunpack.c.l.b16 %v3089
  %v3114 = vunpack.c.l.b16 %v3090
  %v3115 = vunpack.c.l.b16 %v3091
  %v3116 = vunpack.c.l.b16 %v3092
  %v3117 = vunpack.c.l.b16 %v3093
  %v3118 = vpack.c.b16 %v3107, %v3106
  %v3119 = vpack.c.b16 %v3109, %v3108
  %v3120 = vpack.c.b16 %v3111, %v3110
  %v3121 = vpack.c.b16 %v3113, %v3112
  %v3122 = vpack.c.b16 %v3115, %v3114
  %v3123 = vpack.c.b16 %v3117, %v3116
  %v3130 = vsel %vm335, %v3079, 0
  %v3132 = vsel %vm335, %v3081, 0
  %3134 = vmatprep.subr.bf16.mxu0 0
  %3135 = vmatpush1.bf16.msra.mxu0 0
  %3136 = vmatprep.subr.bf16.mxu0 0
  %3137 = vmatpush1.bf16.msra.mxu0 0
  %3138 = vmatprep.subr.bf16.mxu0 0
  %3139 = vmatpush1.bf16.msra.mxu0 %v3123
  %3140 = vmatprep.subr.bf16.mxu0 0
  %3141 = vmatpush1.bf16.msra.mxu0 %v3122
  %3142 = vmatprep.subr.bf16.mxu0 0
  %3143 = vmatpush1.bf16.msra.mxu0 %v3121
  %3144 = vmatprep.subr.bf16.mxu0 0
  %3145 = vmatpush1.bf16.msra.mxu0 %v3120
  %3146 = vmatprep.subr.bf16.mxu0 0
  %3147 = vmatpush1.bf16.msra.mxu0 %v3119
  %3148 = vmatprep.subr.bf16.mxu0 0
  %3149 = vmatpush1.bf16.msra.mxu0 %v3118
  %3150 = vmatprep.subr.bf16.mxu0 0
  %3151 = vmatpush2.bf16.msra.mxu0 0
  %3152 = vmatprep.subr.bf16.mxu0 0
  %3153 = vmatpush2.bf16.msra.mxu0 0
  %3154 = vmatprep.subr.bf16.mxu0 0
  %3155 = vmatpush2.bf16.msra.mxu0 0
  %3156 = vmatprep.subr.bf16.mxu0 0
  %3157 = vmatpush2.bf16.msra.mxu0 0
  %3158 = vmatprep.subr.bf16.mxu0 0
  %3159 = vmatpush2.bf16.msra.mxu0 0
  %3160 = vmatprep.subr.bf16.mxu0 0
  %3161 = vmatpush2.bf16.msra.mxu0 0
  %3162 = vmatprep.subr.bf16.mxu0 0
  %3163 = vmatpush2.bf16.msra.mxu0 0
  %3164 = vmatprep.subr.bf16.mxu0 0
  %3165 = vmatpush2.bf16.msra.mxu0 0
  %3166 = vmatprep.mubr.bf16.mxu0 0
  %3167 = vmatmul.mubr.bf16.gmra.mxu0 %v3130
  %v3168 = vpop.f32.mrf.mxu0
  %v3169 = vadd.f32 %v2865, %v3168
  %v3170 = vpop.f32.mrf.mxu0
  %v3171 = vpop.f32.mrf.mxu0
  %v3172 = vadd.f32 %v2866, %v3171
  %v3173 = vpop.f32.mrf.mxu0
  %3174 = vmatprep.mubr.bf16.mxu0 0
  %3175 = vmatmul.mubr.bf16.gmra.mxu0 %v3132
  %v3176 = vpop.f32.mrf.mxu0
  %v3177 = vadd.f32 %v2867, %v3176
  %v3178 = vpop.f32.mrf.mxu0
  %v3179 = vpop.f32.mrf.mxu0
  %v3180 = vadd.f32 %v2868, %v3179
  %v3181 = vpop.f32.mrf.mxu0
  %3182 = vdwg.mxu0
  %v3183 = vmax.f32 %v3169, 0.0
  %v3184 = vmax.f32 %v3172, 0.0
  %v3185 = vmax.f32 %v3177, 0.0
  %v3186 = vmax.f32 %v3180, 0.0
  %v3187 = vpack.c.bf16 %v3184, %v3183
  %v3188 = vpack.c.bf16 %v3186, %v3185
  %v3190 = vshrl.u32 %v3187, 16
  %v3192 = vrot.slane %v3190, 7
  %v3193 = vshll.u32 %v3187, 16
  %v3195 = vor.u32 %v3192, %v3193
  %v3197 = vshrl.u32 %v3188, 16
  %v3199 = vrot.slane %v3197, 7
  %v3200 = vshll.u32 %v3188, 16
  %v3202 = vor.u32 %v3199, %v3200
  %v3203 = vsel %vm221, %v3192, %v3202
  %v3206 = vsel %vm240, 0, %v3195
  %v3207 = vsel %vm264, 0, %v3206
  %v3208 = vsel %vm265, 0, %v3203
  %v3209 = vrot.slane %v3193, 1
  %v3210 = vor.u32 %v3190, %v3209
  %v3211 = vrot.slane %v3200, 1
  %v3212 = vsel %vm268, %v3210, %v3211
  %v3213 = vor.u32 %v3197, %v3211
  %v3216 = vsel %vm277, %v3213, 0
  %v3217 = vsel %vm301, 0, %v3212
  %v3218 = vsel %vm302, 0, %v3216
  %3221 = vrot.lane.b32.xlu0 %v3187, 32
  %v3222 = vpop.permute.xlu0 %3221
  %3223 = vrot.lane.b32.xlu0 %v3188, 32
  %v3224 = vpop.permute.xlu0 %3223
  %3227 = vrot.lane.b32.xlu0 %v3217, 64
  %v3228 = vpop.permute.xlu0 %3227
  %3229 = vrot.lane.b32.xlu0 %v3218, 64
  %v3230 = vpop.permute.xlu0 %3229
  %v3233 = vsel %vm323, %v3207, %v3222
  %v3236 = vsel %vm323, %v3208, %v3224
  %v3238 = vsel %vm330, %v3233, %v3228
  %v3240 = vsel %vm330, %v3236, %v3230
  %v3241 = vld [vmem:[%s829] sm:$0xf]
  %v3242 = vld [vmem:[%s829 + $0x4] sm:$0xf]
  %v3243 = vld [vmem:[%s829 + $0x8] sm:$0xf]
  %v3244 = vld [vmem:[%s829 + $0xc] sm:$0xf]
  %v3245 = vld [vmem:[%s829 + $0x10] sm:$0xf]
  %v3246 = vld [vmem:[%s829 + $0x14] sm:$0xf]
  %v3247 = vld [vmem:[%s829 + $0x18] sm:$0xf]
  %v3248 = vld [vmem:[%s829 + $0x1c] sm:$0xf]
  %v3249 = vld [vmem:[%s829 + $0x20] sm:$0xf]
  %v3250 = vld [vmem:[%s829 + $0x24] sm:$0xf]
  %v3251 = vld [vmem:[%s829 + $0x28] sm:$0xf]
  %v3252 = vld [vmem:[%s829 + $0x2c] sm:$0xf]
  %v3265 = vunpack.c.l.b16 %v3241
  %v3266 = vunpack.c.l.b16 %v3242
  %v3267 = vunpack.c.l.b16 %v3243
  %v3268 = vunpack.c.l.b16 %v3244
  %v3269 = vunpack.c.l.b16 %v3245
  %v3270 = vunpack.c.l.b16 %v3246
  %v3271 = vunpack.c.l.b16 %v3247
  %v3272 = vunpack.c.l.b16 %v3248
  %v3273 = vunpack.c.l.b16 %v3249
  %v3274 = vunpack.c.l.b16 %v3250
  %v3275 = vunpack.c.l.b16 %v3251
  %v3276 = vunpack.c.l.b16 %v3252
  %v3277 = vpack.c.b16 %v3266, %v3265
  %v3278 = vpack.c.b16 %v3268, %v3267
  %v3279 = vpack.c.b16 %v3270, %v3269
  %v3280 = vpack.c.b16 %v3272, %v3271
  %v3281 = vpack.c.b16 %v3274, %v3273
  %v3282 = vpack.c.b16 %v3276, %v3275
  %v3289 = vsel %vm335, %v3238, 0
  %v3291 = vsel %vm335, %v3240, 0
  %3293 = vmatprep.subr.bf16.mxu0 0
  %3294 = vmatpush1.bf16.msra.mxu0 0
  %3295 = vmatprep.subr.bf16.mxu0 0
  %3296 = vmatpush1.bf16.msra.mxu0 0
  %3297 = vmatprep.subr.bf16.mxu0 0
  %3298 = vmatpush1.bf16.msra.mxu0 %v3282
  %3299 = vmatprep.subr.bf16.mxu0 0
  %3300 = vmatpush1.bf16.msra.mxu0 %v3281
  %3301 = vmatprep.subr.bf16.mxu0 0
  %3302 = vmatpush1.bf16.msra.mxu0 %v3280
  %3303 = vmatprep.subr.bf16.mxu0 0
  %3304 = vmatpush1.bf16.msra.mxu0 %v3279
  %3305 = vmatprep.subr.bf16.mxu0 0
  %3306 = vmatpush1.bf16.msra.mxu0 %v3278
  %3307 = vmatprep.subr.bf16.mxu0 0
  %3308 = vmatpush1.bf16.msra.mxu0 %v3277
  %3309 = vmatprep.subr.bf16.mxu0 0
  %3310 = vmatpush2.bf16.msra.mxu0 0
  %3311 = vmatprep.subr.bf16.mxu0 0
  %3312 = vmatpush2.bf16.msra.mxu0 0
  %3313 = vmatprep.subr.bf16.mxu0 0
  %3314 = vmatpush2.bf16.msra.mxu0 0
  %3315 = vmatprep.subr.bf16.mxu0 0
  %3316 = vmatpush2.bf16.msra.mxu0 0
  %3317 = vmatprep.subr.bf16.mxu0 0
  %3318 = vmatpush2.bf16.msra.mxu0 0
  %3319 = vmatprep.subr.bf16.mxu0 0
  %3320 = vmatpush2.bf16.msra.mxu0 0
  %3321 = vmatprep.subr.bf16.mxu0 0
  %3322 = vmatpush2.bf16.msra.mxu0 0
  %3323 = vmatprep.subr.bf16.mxu0 0
  %3324 = vmatpush2.bf16.msra.mxu0 0
  %3325 = vmatprep.mubr.bf16.mxu0 0
  %3326 = vmatmul.mubr.bf16.gmra.mxu0 %v3289
  %v3327 = vpop.f32.mrf.mxu0
  %v3328 = vadd.f32 0.0, %v3327
  %v3329 = vpop.f32.mrf.mxu0
  %v3330 = vpop.f32.mrf.mxu0
  %v3331 = vadd.f32 0.0, %v3330
  %v3332 = vpop.f32.mrf.mxu0
  %3333 = vmatprep.mubr.bf16.mxu0 0
  %3334 = vmatmul.mubr.bf16.gmra.mxu0 %v3291
  %v3335 = vpop.f32.mrf.mxu0
  %v3336 = vadd.f32 0.0, %v3335
  %v3337 = vpop.f32.mrf.mxu0
  %v3338 = vpop.f32.mrf.mxu0
  %v3339 = vadd.f32 0.0, %v3338
  %v3340 = vpop.f32.mrf.mxu0
  %3341 = vdwg.mxu0
  %v3342 = vmax.f32 %v3328, 0.0
  %v3343 = vmax.f32 %v3331, 0.0
  %v3344 = vmax.f32 %v3336, 0.0
  %v3345 = vmax.f32 %v3339, 0.0
  %v3346 = vpack.c.bf16 %v3343, %v3342
  %v3347 = vpack.c.bf16 %v3345, %v3344
  %v3349 = vshrl.u32 %v3346, 16
  %v3351 = vrot.slane %v3349, 7
  %v3352 = vshll.u32 %v3346, 16
  %v3354 = vor.u32 %v3351, %v3352
  %v3356 = vshrl.u32 %v3347, 16
  %v3358 = vrot.slane %v3356, 7
  %v3359 = vshll.u32 %v3347, 16
  %v3361 = vor.u32 %v3358, %v3359
  %v3362 = vsel %vm221, %v3351, %v3361
  %v3365 = vsel %vm240, 0, %v3354
  %v3366 = vsel %vm264, 0, %v3365
  %v3367 = vsel %vm265, 0, %v3362
  %v3368 = vrot.slane %v3352, 1
  %v3369 = vor.u32 %v3349, %v3368
  %v3370 = vrot.slane %v3359, 1
  %v3371 = vsel %vm268, %v3369, %v3370
  %v3372 = vor.u32 %v3356, %v3370
  %v3375 = vsel %vm277, %v3372, 0
  %v3376 = vsel %vm301, 0, %v3371
  %v3377 = vsel %vm302, 0, %v3375
  %3380 = vrot.lane.b32.xlu0 %v3346, 32
  %v3381 = vpop.permute.xlu0 %3380
  %3382 = vrot.lane.b32.xlu0 %v3347, 32
  %v3383 = vpop.permute.xlu0 %3382
  %3386 = vrot.lane.b32.xlu0 %v3376, 64
  %v3387 = vpop.permute.xlu0 %3386
  %3388 = vrot.lane.b32.xlu0 %v3377, 64
  %v3389 = vpop.permute.xlu0 %3388
  %v3392 = vsel %vm323, %v3366, %v3381
  %v3395 = vsel %vm323, %v3367, %v3383
  %v3397 = vsel %vm330, %v3392, %v3387
  %v3399 = vsel %vm330, %v3395, %v3389
  %v3400 = vld [vmem:[%s989] sm:$0xf]
  %v3401 = vld [vmem:[%s989 + $0x4] sm:$0xf]
  %v3402 = vld [vmem:[%s989 + $0x8] sm:$0xf]
  %v3403 = vld [vmem:[%s989 + $0xc] sm:$0xf]
  %v3404 = vld [vmem:[%s989 + $0x10] sm:$0xf]
  %v3405 = vld [vmem:[%s989 + $0x14] sm:$0xf]
  %v3406 = vld [vmem:[%s989 + $0x18] sm:$0xf]
  %v3407 = vld [vmem:[%s989 + $0x1c] sm:$0xf]
  %v3408 = vld [vmem:[%s989 + $0x20] sm:$0xf]
  %v3409 = vld [vmem:[%s989 + $0x24] sm:$0xf]
  %v3410 = vld [vmem:[%s989 + $0x28] sm:$0xf]
  %v3411 = vld [vmem:[%s989 + $0x2c] sm:$0xf]
  %v3424 = vunpack.c.l.b16 %v3400
  %v3425 = vunpack.c.l.b16 %v3401
  %v3426 = vunpack.c.l.b16 %v3402
  %v3427 = vunpack.c.l.b16 %v3403
  %v3428 = vunpack.c.l.b16 %v3404
  %v3429 = vunpack.c.l.b16 %v3405
  %v3430 = vunpack.c.l.b16 %v3406
  %v3431 = vunpack.c.l.b16 %v3407
  %v3432 = vunpack.c.l.b16 %v3408
  %v3433 = vunpack.c.l.b16 %v3409
  %v3434 = vunpack.c.l.b16 %v3410
  %v3435 = vunpack.c.l.b16 %v3411
  %v3436 = vpack.c.b16 %v3425, %v3424
  %v3437 = vpack.c.b16 %v3427, %v3426
  %v3438 = vpack.c.b16 %v3429, %v3428
  %v3439 = vpack.c.b16 %v3431, %v3430
  %v3440 = vpack.c.b16 %v3433, %v3432
  %v3441 = vpack.c.b16 %v3435, %v3434
  %v3448 = vsel %vm335, %v3397, 0
  %v3450 = vsel %vm335, %v3399, 0
  %3452 = vmatprep.subr.bf16.mxu0 0
  %3453 = vmatpush1.bf16.msra.mxu0 0
  %3454 = vmatprep.subr.bf16.mxu0 0
  %3455 = vmatpush1.bf16.msra.mxu0 0
  %3456 = vmatprep.subr.bf16.mxu0 0
  %3457 = vmatpush1.bf16.msra.mxu0 %v3441
  %3458 = vmatprep.subr.bf16.mxu0 0
  %3459 = vmatpush1.bf16.msra.mxu0 %v3440
  %3460 = vmatprep.subr.bf16.mxu0 0
  %3461 = vmatpush1.bf16.msra.mxu0 %v3439
  %3462 = vmatprep.subr.bf16.mxu0 0
  %3463 = vmatpush1.bf16.msra.mxu0 %v3438
  %3464 = vmatprep.subr.bf16.mxu0 0
  %3465 = vmatpush1.bf16.msra.mxu0 %v3437
  %3466 = vmatprep.subr.bf16.mxu0 0
  %3467 = vmatpush1.bf16.msra.mxu0 %v3436
  %3468 = vmatprep.subr.bf16.mxu0 0
  %3469 = vmatpush2.bf16.msra.mxu0 0
  %3470 = vmatprep.subr.bf16.mxu0 0
  %3471 = vmatpush2.bf16.msra.mxu0 0
  %3472 = vmatprep.subr.bf16.mxu0 0
  %3473 = vmatpush2.bf16.msra.mxu0 0
  %3474 = vmatprep.subr.bf16.mxu0 0
  %3475 = vmatpush2.bf16.msra.mxu0 0
  %3476 = vmatprep.subr.bf16.mxu0 0
  %3477 = vmatpush2.bf16.msra.mxu0 0
  %3478 = vmatprep.subr.bf16.mxu0 0
  %3479 = vmatpush2.bf16.msra.mxu0 0
  %3480 = vmatprep.subr.bf16.mxu0 0
  %3481 = vmatpush2.bf16.msra.mxu0 0
  %3482 = vmatprep.subr.bf16.mxu0 0
  %3483 = vmatpush2.bf16.msra.mxu0 0
  %3484 = vmatprep.mubr.bf16.mxu0 0
  %3485 = vmatmul.mubr.bf16.gmra.mxu0 %v3448
  %v3486 = vpop.f32.mrf.mxu0
  %v3487 = vadd.f32 %v3183, %v3486
  %v3488 = vpop.f32.mrf.mxu0
  %v3489 = vpop.f32.mrf.mxu0
  %v3490 = vadd.f32 %v3184, %v3489
  %v3491 = vpop.f32.mrf.mxu0
  %3492 = vmatprep.mubr.bf16.mxu0 0
  %3493 = vmatmul.mubr.bf16.gmra.mxu0 %v3450
  %v3494 = vpop.f32.mrf.mxu0
  %v3495 = vadd.f32 %v3185, %v3494
  %v3496 = vpop.f32.mrf.mxu0
  %v3497 = vpop.f32.mrf.mxu0
  %v3498 = vadd.f32 %v3186, %v3497
  %v3499 = vpop.f32.mrf.mxu0
  %3500 = vdwg.mxu0
  %v3501 = vmax.f32 %v3487, 0.0
  %v3502 = vmax.f32 %v3490, 0.0
  %v3503 = vmax.f32 %v3495, 0.0
  %v3504 = vmax.f32 %v3498, 0.0
  %v3505 = vpack.c.bf16 %v3502, %v3501
  %v3506 = vpack.c.bf16 %v3504, %v3503
  %v3508 = vshrl.u32 %v3505, 16
  %v3510 = vrot.slane %v3508, 7
  %v3511 = vshll.u32 %v3505, 16
  %v3513 = vor.u32 %v3510, %v3511
  %v3515 = vshrl.u32 %v3506, 16
  %v3517 = vrot.slane %v3515, 7
  %v3518 = vshll.u32 %v3506, 16
  %v3520 = vor.u32 %v3517, %v3518
  %v3521 = vsel %vm221, %v3510, %v3520
  %v3524 = vsel %vm240, 0, %v3513
  %v3525 = vsel %vm264, 0, %v3524
  %v3526 = vsel %vm265, 0, %v3521
  %v3527 = vrot.slane %v3511, 1
  %v3528 = vor.u32 %v3508, %v3527
  %v3529 = vrot.slane %v3518, 1
  %v3530 = vsel %vm268, %v3528, %v3529
  %v3531 = vor.u32 %v3515, %v3529
  %v3534 = vsel %vm277, %v3531, 0
  %v3535 = vsel %vm301, 0, %v3530
  %v3536 = vsel %vm302, 0, %v3534
  %3539 = vrot.lane.b32.xlu0 %v3505, 32
  %v3540 = vpop.permute.xlu0 %3539
  %3541 = vrot.lane.b32.xlu0 %v3506, 32
  %v3542 = vpop.permute.xlu0 %3541
  %3545 = vrot.lane.b32.xlu0 %v3535, 64
  %v3546 = vpop.permute.xlu0 %3545
  %3547 = vrot.lane.b32.xlu0 %v3536, 64
  %v3548 = vpop.permute.xlu0 %3547
  %v3551 = vsel %vm323, %v3525, %v3540
  %v3554 = vsel %vm323, %v3526, %v3542
  %v3556 = vsel %vm330, %v3551, %v3546
  %v3558 = vsel %vm330, %v3554, %v3548
  %v3559 = vld [vmem:[%s5] sm:$0xf]
  %v3560 = vld [vmem:[%s5 + $0x4] sm:$0xf]
  %v3561 = vld [vmem:[%s5 + $0x8] sm:$0xf]
  %v3562 = vld [vmem:[%s5 + $0xc] sm:$0xf]
  %v3563 = vld [vmem:[%s5 + $0x10] sm:$0xf]
  %v3564 = vld [vmem:[%s5 + $0x14] sm:$0xf]
  %v3565 = vld [vmem:[%s5 + $0x18] sm:$0xf]
  %v3566 = vld [vmem:[%s5 + $0x1c] sm:$0xf]
  %v3567 = vld [vmem:[%s5 + $0x20] sm:$0xf]
  %v3568 = vld [vmem:[%s5 + $0x24] sm:$0xf]
  %v3569 = vld [vmem:[%s5 + $0x28] sm:$0xf]
  %v3570 = vld [vmem:[%s5 + $0x2c] sm:$0xf]
  %v3583 = vunpack.c.l.b16 %v3559
  %v3584 = vunpack.c.l.b16 %v3560
  %v3585 = vunpack.c.l.b16 %v3561
  %v3586 = vunpack.c.l.b16 %v3562
  %v3587 = vunpack.c.l.b16 %v3563
  %v3588 = vunpack.c.l.b16 %v3564
  %v3589 = vunpack.c.l.b16 %v3565
  %v3590 = vunpack.c.l.b16 %v3566
  %v3591 = vunpack.c.l.b16 %v3567
  %v3592 = vunpack.c.l.b16 %v3568
  %v3593 = vunpack.c.l.b16 %v3569
  %v3594 = vunpack.c.l.b16 %v3570
  %v3595 = vpack.c.b16 %v3584, %v3583
  %v3596 = vpack.c.b16 %v3586, %v3585
  %v3597 = vpack.c.b16 %v3588, %v3587
  %v3598 = vpack.c.b16 %v3590, %v3589
  %v3599 = vpack.c.b16 %v3592, %v3591
  %v3600 = vpack.c.b16 %v3594, %v3593
  %v3607 = vsel %vm335, %v3556, 0
  %v3609 = vsel %vm335, %v3558, 0
  %3611 = vmatprep.subr.bf16.mxu0 0
  %3612 = vmatpush1.bf16.msra.mxu0 0
  %3613 = vmatprep.subr.bf16.mxu0 0
  %3614 = vmatpush1.bf16.msra.mxu0 0
  %3615 = vmatprep.subr.bf16.mxu0 0
  %3616 = vmatpush1.bf16.msra.mxu0 %v3600
  %3617 = vmatprep.subr.bf16.mxu0 0
  %3618 = vmatpush1.bf16.msra.mxu0 %v3599
  %3619 = vmatprep.subr.bf16.mxu0 0
  %3620 = vmatpush1.bf16.msra.mxu0 %v3598
  %3621 = vmatprep.subr.bf16.mxu0 0
  %3622 = vmatpush1.bf16.msra.mxu0 %v3597
  %3623 = vmatprep.subr.bf16.mxu0 0
  %3624 = vmatpush1.bf16.msra.mxu0 %v3596
  %3625 = vmatprep.subr.bf16.mxu0 0
  %3626 = vmatpush1.bf16.msra.mxu0 %v3595
  %3627 = vmatprep.subr.bf16.mxu0 0
  %3628 = vmatpush2.bf16.msra.mxu0 0
  %3629 = vmatprep.subr.bf16.mxu0 0
  %3630 = vmatpush2.bf16.msra.mxu0 0
  %3631 = vmatprep.subr.bf16.mxu0 0
  %3632 = vmatpush2.bf16.msra.mxu0 0
  %3633 = vmatprep.subr.bf16.mxu0 0
  %3634 = vmatpush2.bf16.msra.mxu0 0
  %3635 = vmatprep.subr.bf16.mxu0 0
  %3636 = vmatpush2.bf16.msra.mxu0 0
  %3637 = vmatprep.subr.bf16.mxu0 0
  %3638 = vmatpush2.bf16.msra.mxu0 0
  %3639 = vmatprep.subr.bf16.mxu0 0
  %3640 = vmatpush2.bf16.msra.mxu0 0
  %3641 = vmatprep.subr.bf16.mxu0 0
  %3642 = vmatpush2.bf16.msra.mxu0 0
  %3643 = vmatprep.mubr.bf16.mxu0 0
  %3644 = vmatmul.mubr.bf16.gmra.mxu0 %v3607
  %v3645 = vpop.f32.mrf.mxu0
  %v3646 = vadd.f32 0.0, %v3645
  %v3647 = vpop.f32.mrf.mxu0
  %v3648 = vpop.f32.mrf.mxu0
  %v3649 = vadd.f32 0.0, %v3648
  %v3650 = vpop.f32.mrf.mxu0
  %3651 = vmatprep.mubr.bf16.mxu0 0
  %3652 = vmatmul.mubr.bf16.gmra.mxu0 %v3609
  %v3653 = vpop.f32.mrf.mxu0
  %v3654 = vadd.f32 0.0, %v3653
  %v3655 = vpop.f32.mrf.mxu0
  %v3656 = vpop.f32.mrf.mxu0
  %v3657 = vadd.f32 0.0, %v3656
  %v3658 = vpop.f32.mrf.mxu0
  %3659 = vdwg.mxu0
  %v3660 = vmax.f32 %v3646, 0.0
  %v3661 = vmax.f32 %v3649, 0.0
  %v3662 = vmax.f32 %v3654, 0.0
  %v3663 = vmax.f32 %v3657, 0.0
  %v3664 = vpack.c.bf16 %v3661, %v3660
  %v3665 = vpack.c.bf16 %v3663, %v3662
  %v3667 = vshrl.u32 %v3664, 16
  %v3669 = vrot.slane %v3667, 7
  %v3670 = vshll.u32 %v3664, 16
  %v3672 = vor.u32 %v3669, %v3670
  %v3674 = vshrl.u32 %v3665, 16
  %v3676 = vrot.slane %v3674, 7
  %v3677 = vshll.u32 %v3665, 16
  %v3679 = vor.u32 %v3676, %v3677
  %v3680 = vsel %vm221, %v3669, %v3679
  %v3683 = vsel %vm240, 0, %v3672
  %v3684 = vsel %vm264, 0, %v3683
  %v3685 = vsel %vm265, 0, %v3680
  %v3686 = vrot.slane %v3670, 1
  %v3687 = vor.u32 %v3667, %v3686
  %v3688 = vrot.slane %v3677, 1
  %v3689 = vsel %vm268, %v3687, %v3688
  %v3690 = vor.u32 %v3674, %v3688
  %v3693 = vsel %vm277, %v3690, 0
  %v3694 = vsel %vm301, 0, %v3689
  %v3695 = vsel %vm302, 0, %v3693
  %3698 = vrot.lane.b32.xlu0 %v3664, 32
  %v3699 = vpop.permute.xlu0 %3698
  %3700 = vrot.lane.b32.xlu0 %v3665, 32
  %v3701 = vpop.permute.xlu0 %3700
  %3704 = vrot.lane.b32.xlu0 %v3694, 64
  %v3705 = vpop.permute.xlu0 %3704
  %3706 = vrot.lane.b32.xlu0 %v3695, 64
  %v3707 = vpop.permute.xlu0 %3706
  %v3710 = vsel %vm323, %v3684, %v3699
  %v3713 = vsel %vm323, %v3685, %v3701
  %v3715 = vsel %vm330, %v3710, %v3705
  %v3717 = vsel %vm330, %v3713, %v3707
  %v3718 = vld [vmem:[%s6] sm:$0xf]
  %v3719 = vld [vmem:[%s6 + $0x4] sm:$0xf]
  %v3720 = vld [vmem:[%s6 + $0x8] sm:$0xf]
  %v3721 = vld [vmem:[%s6 + $0xc] sm:$0xf]
  %v3722 = vld [vmem:[%s6 + $0x10] sm:$0xf]
  %v3723 = vld [vmem:[%s6 + $0x14] sm:$0xf]
  %v3724 = vld [vmem:[%s6 + $0x18] sm:$0xf]
  %v3725 = vld [vmem:[%s6 + $0x1c] sm:$0xf]
  %v3726 = vld [vmem:[%s6 + $0x20] sm:$0xf]
  %v3727 = vld [vmem:[%s6 + $0x24] sm:$0xf]
  %v3728 = vld [vmem:[%s6 + $0x28] sm:$0xf]
  %v3729 = vld [vmem:[%s6 + $0x2c] sm:$0xf]
  %v3742 = vunpack.c.l.b16 %v3718
  %v3743 = vunpack.c.l.b16 %v3719
  %v3744 = vunpack.c.l.b16 %v3720
  %v3745 = vunpack.c.l.b16 %v3721
  %v3746 = vunpack.c.l.b16 %v3722
  %v3747 = vunpack.c.l.b16 %v3723
  %v3748 = vunpack.c.l.b16 %v3724
  %v3749 = vunpack.c.l.b16 %v3725
  %v3750 = vunpack.c.l.b16 %v3726
  %v3751 = vunpack.c.l.b16 %v3727
  %v3752 = vunpack.c.l.b16 %v3728
  %v3753 = vunpack.c.l.b16 %v3729
  %v3754 = vpack.c.b16 %v3743, %v3742
  %v3755 = vpack.c.b16 %v3745, %v3744
  %v3756 = vpack.c.b16 %v3747, %v3746
  %v3757 = vpack.c.b16 %v3749, %v3748
  %v3758 = vpack.c.b16 %v3751, %v3750
  %v3759 = vpack.c.b16 %v3753, %v3752
  %v3766 = vsel %vm335, %v3715, 0
  %v3768 = vsel %vm335, %v3717, 0
  %3770 = vmatprep.subr.bf16.mxu0 0
  %3771 = vmatpush1.bf16.msra.mxu0 0
  %3772 = vmatprep.subr.bf16.mxu0 0
  %3773 = vmatpush1.bf16.msra.mxu0 0
  %3774 = vmatprep.subr.bf16.mxu0 0
  %3775 = vmatpush1.bf16.msra.mxu0 %v3759
  %3776 = vmatprep.subr.bf16.mxu0 0
  %3777 = vmatpush1.bf16.msra.mxu0 %v3758
  %3778 = vmatprep.subr.bf16.mxu0 0
  %3779 = vmatpush1.bf16.msra.mxu0 %v3757
  %3780 = vmatprep.subr.bf16.mxu0 0
  %3781 = vmatpush1.bf16.msra.mxu0 %v3756
  %3782 = vmatprep.subr.bf16.mxu0 0
  %3783 = vmatpush1.bf16.msra.mxu0 %v3755
  %3784 = vmatprep.subr.bf16.mxu0 0
  %3785 = vmatpush1.bf16.msra.mxu0 %v3754
  %3786 = vmatprep.subr.bf16.mxu0 0
  %3787 = vmatpush2.bf16.msra.mxu0 0
  %3788 = vmatprep.subr.bf16.mxu0 0
  %3789 = vmatpush2.bf16.msra.mxu0 0
  %3790 = vmatprep.subr.bf16.mxu0 0
  %3791 = vmatpush2.bf16.msra.mxu0 0
  %3792 = vmatprep.subr.bf16.mxu0 0
  %3793 = vmatpush2.bf16.msra.mxu0 0
  %3794 = vmatprep.subr.bf16.mxu0 0
  %3795 = vmatpush2.bf16.msra.mxu0 0
  %3796 = vmatprep.subr.bf16.mxu0 0
  %3797 = vmatpush2.bf16.msra.mxu0 0
  %3798 = vmatprep.subr.bf16.mxu0 0
  %3799 = vmatpush2.bf16.msra.mxu0 0
  %3800 = vmatprep.subr.bf16.mxu0 0
  %3801 = vmatpush2.bf16.msra.mxu0 0
  %3802 = vmatprep.mubr.bf16.mxu0 0
  %3803 = vmatmul.mubr.bf16.gmra.mxu0 %v3766
  %v3804 = vpop.f32.mrf.mxu0
  %v3805 = vadd.f32 0.0, %v3804
  %v3806 = vpop.f32.mrf.mxu0
  %v3807 = vpop.f32.mrf.mxu0
  %v3808 = vadd.f32 0.0, %v3807
  %v3809 = vpop.f32.mrf.mxu0
  %3810 = vmatprep.mubr.bf16.mxu0 0
  %3811 = vmatmul.mubr.bf16.gmra.mxu0 %v3768
  %v3812 = vpop.f32.mrf.mxu0
  %v3813 = vadd.f32 0.0, %v3812
  %v3814 = vpop.f32.mrf.mxu0
  %v3815 = vpop.f32.mrf.mxu0
  %v3816 = vadd.f32 0.0, %v3815
  %v3817 = vpop.f32.mrf.mxu0
  %3818 = vdwg.mxu0
  %v3819 = vmax.f32 %v3805, 0.0
  %v3820 = vmax.f32 %v3808, 0.0
  %v3821 = vmax.f32 %v3813, 0.0
  %v3822 = vmax.f32 %v3816, 0.0
  %v3823 = vpack.c.bf16 %v3820, %v3819
  %v3824 = vpack.c.bf16 %v3822, %v3821
  %v3826 = vshrl.u32 %v3823, 16
  %v3828 = vrot.slane %v3826, 7
  %v3829 = vshll.u32 %v3823, 16
  %v3831 = vor.u32 %v3828, %v3829
  %v3833 = vshrl.u32 %v3824, 16
  %v3835 = vrot.slane %v3833, 7
  %v3836 = vshll.u32 %v3824, 16
  %v3838 = vor.u32 %v3835, %v3836
  %v3839 = vsel %vm221, %v3828, %v3838
  %v3842 = vsel %vm240, 0, %v3831
  %v3843 = vsel %vm264, 0, %v3842
  %v3844 = vsel %vm265, 0, %v3839
  %v3845 = vrot.slane %v3829, 1
  %v3846 = vor.u32 %v3826, %v3845
  %v3847 = vrot.slane %v3836, 1
  %v3848 = vsel %vm268, %v3846, %v3847
  %v3849 = vor.u32 %v3833, %v3847
  %v3852 = vsel %vm277, %v3849, 0
  %v3853 = vsel %vm301, 0, %v3848
  %v3854 = vsel %vm302, 0, %v3852
  %3857 = vrot.lane.b32.xlu0 %v3823, 16
  %v3858 = vpop.permute.xlu0 %3857
  %3859 = vrot.lane.b32.xlu0 %v3824, 16
  %v3860 = vpop.permute.xlu0 %3859
  %3863 = vrot.lane.b32.xlu0 %v3853, 32
  %v3864 = vpop.permute.xlu0 %3863
  %3865 = vrot.lane.b32.xlu0 %v3854, 32
  %v3866 = vpop.permute.xlu0 %3865
  %v3869 = vsel %vm1457, %v3843, %v3858
  %v3872 = vsel %vm1457, %v3844, %v3860
  %v3874 = vsel %vm323, %v3869, %v3864
  %v3876 = vsel %vm323, %v3872, %v3866
  %v3877 = vld [vmem:[%s7] sm:$0xf]
  %v3878 = vld [vmem:[%s7 + $0x4] sm:$0xf]
  %v3879 = vld [vmem:[%s7 + $0x8] sm:$0xf]
  %v3880 = vld [vmem:[%s7 + $0xc] sm:$0xf]
  %v3881 = vld [vmem:[%s7 + $0x10] sm:$0xf]
  %v3882 = vld [vmem:[%s7 + $0x14] sm:$0xf]
  %v3889 = vunpack.c.l.b16 %v3877
  %v3890 = vunpack.c.l.b16 %v3878
  %v3891 = vunpack.c.l.b16 %v3879
  %v3892 = vunpack.c.l.b16 %v3880
  %v3893 = vunpack.c.l.b16 %v3881
  %v3894 = vunpack.c.l.b16 %v3882
  %v3895 = vpack.c.b16 %v3890, %v3889
  %v3896 = vpack.c.b16 %v3892, %v3891
  %v3897 = vpack.c.b16 %v3894, %v3893
  %v3901 = vsel %vm1492, %v3874, 0
  %v3903 = vsel %vm1492, %v3876, 0
  %3905 = vmatprep.subr.bf16.mxu0 0
  %3906 = vmatpush1.bf16.msra.mxu0 0
  %3907 = vmatprep.subr.bf16.mxu0 0
  %3908 = vmatpush1.bf16.msra.mxu0 0
  %3909 = vmatprep.subr.bf16.mxu0 0
  %3910 = vmatpush1.bf16.msra.mxu0 0
  %3911 = vmatprep.subr.bf16.mxu0 0
  %3912 = vmatpush1.bf16.msra.mxu0 0
  %3913 = vmatprep.subr.bf16.mxu0 0
  %3914 = vmatpush1.bf16.msra.mxu0 0
  %3915 = vmatprep.subr.bf16.mxu0 0
  %3916 = vmatpush1.bf16.msra.mxu0 %v3897
  %3917 = vmatprep.subr.bf16.mxu0 0
  %3918 = vmatpush1.bf16.msra.mxu0 %v3896
  %3919 = vmatprep.subr.bf16.mxu0 0
  %3920 = vmatpush1.bf16.msra.mxu0 %v3895
  %3921 = vmatprep.subr.bf16.mxu0 0
  %3922 = vmatpush2.bf16.msra.mxu0 0
  %3923 = vmatprep.subr.bf16.mxu0 0
  %3924 = vmatpush2.bf16.msra.mxu0 0
  %3925 = vmatprep.subr.bf16.mxu0 0
  %3926 = vmatpush2.bf16.msra.mxu0 0
  %3927 = vmatprep.subr.bf16.mxu0 0
  %3928 = vmatpush2.bf16.msra.mxu0 0
  %3929 = vmatprep.subr.bf16.mxu0 0
  %3930 = vmatpush2.bf16.msra.mxu0 0
  %3931 = vmatprep.subr.bf16.mxu0 0
  %3932 = vmatpush2.bf16.msra.mxu0 0
  %3933 = vmatprep.subr.bf16.mxu0 0
  %3934 = vmatpush2.bf16.msra.mxu0 0
  %3935 = vmatprep.subr.bf16.mxu0 0
  %3936 = vmatpush2.bf16.msra.mxu0 0
  %3937 = vmatprep.mubr.bf16.mxu0 0
  %3938 = vmatmul.mubr.bf16.gmra.mxu0 %v3901
  %v3939 = vpop.f32.mrf.mxu0
  %v3940 = vadd.f32 0.0, %v3939
  %v3941 = vpop.f32.mrf.mxu0
  %v3942 = vpop.f32.mrf.mxu0
  %v3943 = vadd.f32 0.0, %v3942
  %v3944 = vpop.f32.mrf.mxu0
  %3945 = vmatprep.mubr.bf16.mxu0 0
  %3946 = vmatmul.mubr.bf16.gmra.mxu0 %v3903
  %v3947 = vpop.f32.mrf.mxu0
  %v3948 = vadd.f32 0.0, %v3947
  %v3949 = vpop.f32.mrf.mxu0
  %v3950 = vpop.f32.mrf.mxu0
  %v3951 = vadd.f32 0.0, %v3950
  %v3952 = vpop.f32.mrf.mxu0
  %3953 = vdwg.mxu0
  %s3954 = scalar_lea.vmem %s8, 64
  %3955 = vst.msk [vmem:[%s3954] sm:$0xff] %vm1546, %v3940
  %3956 = vst.msk [vmem:[%s3954 + $0x8] sm:$0xff] %vm1546, %v3943
  %3957 = vst.msk [vmem:[%s3954 + $0x10] sm:$0xff] %vm1546, %v3948
  %3958 = vst.msk [vmem:[%s3954 + $0x18] sm:$0xff] %vm1546, %v3951
  %3959 = vst.msk [vmem:[#allocation2] sm:$0xff] %vm323, %v3501
  %3960 = vst.msk [vmem:[#allocation2 + $0x8] sm:$0xff] %vm323, %v3502
  %3961 = vst.msk [vmem:[#allocation2 + $0x10] sm:$0xff] %vm323, %v3503
  %3962 = vst.msk [vmem:[#allocation2 + $0x18] sm:$0xff] %vm323, %v3504
  // Predicated region
  $region38: #{dtnet1d_forward.1} parent=0 // pred_check
    _
  $region39: #{dtnet1d_forward.1} parent=0 // pred_check_branch
    %3964 = sbr.rel (0) target = $region41
  $region40: #{dtnet1d_forward.1} parent=0 // pred_region
    _
  $region41: #{dtnet1d_forward.1} parent=0 // pred_fallthru
    _
  // Predicated region
  $region42: #{dtnet1d_forward.1} parent=0 // pred_check
    _
  $region43: #{dtnet1d_forward.1} parent=0 // pred_check_branch
    %3966 = sbr.rel (0) target = $region45
  $region44: #{dtnet1d_forward.1} parent=0 // pred_region
    _
  $region45: #{dtnet1d_forward.1} parent=0 // pred_fallthru
    _

</llo_original>
